<compile_context>
chip_gen: v6e
topology: v6e:2x2x1
jax: 0.10.0
libtpu: 0.0.40
codegen_flags: <defaults>
</compile_context>

<pallas_src>
import jax
import jax.numpy as jnp
from jax import lax
from jax.experimental import pallas as pl
from jax.experimental.pallas import tpu as pltpu


IN_FEATURES = 1536
OUT_FEATURES = 384


def _gelu_linear_kernel(x_ref, w_ref, b_ref, o_ref):
    # x_ref: (TM, 1536)   w_ref: (384, 1536) [torch layout, resident]
    # b_ref: (1, 384)     o_ref: (TM, 384)
    x = x_ref[...].astype(jnp.float32)
    # Exact (erf-based) GELU, matching GELU(approximate='none').
    g = 0.5 * x * (1.0 + lax.erf(x * jnp.float32(0.7071067811865476)))
    # Dropout(p=0.0) is the identity in both train and eval -> no-op.
    w = w_ref[...].astype(jnp.float32)
    # Contract the K=1536 dim of both operands: (TM,K) x (O,K) -> (TM,O).
    acc = lax.dot_general(
        g, w, (((1,), (1,)), ((), ())),
        preferred_element_type=jnp.float32)
    acc = acc + b_ref[...].astype(jnp.float32)
    o_ref[...] = acc.astype(o_ref.dtype)


def _num_m_tiles():
    """2 M tiles on dual-TensorCore parts (v7x), 1 full-extent step otherwise."""
    try:
        kind = jax.devices()[0].device_kind.lower()
    except Exception:
        kind = ""
    if "v7" in kind or "7x" in kind:
        return 2
    return 1


def gelu_dropout_linear(x, weight, bias):
    """x: (N, H, W, 1536), weight: (384, 1536) [torch layout], bias: (384,)."""
    n, h, w_, c = x.shape
    assert c == IN_FEATURES
    tokens = n * h * w_
    x2d = x.reshape(tokens, c)
    b2d = bias.reshape(1, OUT_FEATURES)

    if _num_m_tiles() == 2 and tokens > 128:
        # Dual-TC: two 128-row tiles ("parallel"), last one masked/partial.
        tm = 128
    else:
        # Single-TC: one full-extent block (block dim == full array dim is OK).
        tm = tokens

    grid = (pl.cdiv(tokens, tm),)

    out2d = pl.pallas_call(
        _gelu_linear_kernel,
        out_shape=jax.ShapeDtypeStruct((tokens, OUT_FEATURES), x.dtype),
        grid_spec=pltpu.PrefetchScalarGridSpec(
            num_scalar_prefetch=0,
            grid=grid,
            in_specs=[
                # x tile: changes with the M index.
                pl.BlockSpec((tm, IN_FEATURES), lambda i: (i, 0)),
                # full weight, torch layout, loaded once and resident.
                pl.BlockSpec((OUT_FEATURES, IN_FEATURES), lambda i: (0, 0)),
                pl.BlockSpec((1, OUT_FEATURES), lambda i: (0, 0)),
            ],
            out_specs=pl.BlockSpec((tm, OUT_FEATURES), lambda i: (i, 0)),
        ),
        compiler_params=pltpu.CompilerParams(
            dimension_semantics=("parallel",)),
    )(x2d, weight, b2d)

    return out2d.reshape(n, h, w_, OUT_FEATURES)


def _reference(x, weight, bias):
    g = 0.5 * x * (1.0 + lax.erf(x / jnp.sqrt(jnp.float32(2.0))))
    return jnp.einsum("nhwc,oc->nhwo", g, weight) + bias


if __name__ == "__main__":
    key = jax.random.PRNGKey(0)
    kx, kw, kb = jax.random.split(key, 3)

    # Input shape implied by the module's forward.
    x = jax.random.normal(kx, (1, 14, 14, IN_FEATURES), dtype=jnp.float32)

    # Deterministic Linear params (torch-style uniform(-1/sqrt(fan_in), ...)).
    bound = 1.0 / jnp.sqrt(jnp.float32(IN_FEATURES))
    weight = jax.random.uniform(kw, (OUT_FEATURES, IN_FEATURES),
                                minval=-bound, maxval=bound,
                                dtype=jnp.float32)
    bias = jax.random.uniform(kb, (OUT_FEATURES,),
                              minval=-bound, maxval=bound,
                              dtype=jnp.float32)

    out = gelu_dropout_linear(x, weight, bias)
    out = jax.block_until_ready(out)

    ref = _reference(x, weight, bias)
    assert out.shape == (1, 14, 14, OUT_FEATURES)
    assert jnp.allclose(out, ref, atol=1e-4, rtol=1e-4)

    print("KERNEL_OK")
</pallas_src>

<mosaic_0001>
module attributes {stable_mosaic.version = 11 : i64} {
  func.func @_gelu_linear_kernel(%arg0: i32, %arg1: memref<196x1536xf32, #tpu.memory_space<vmem>>, %arg2: memref<384x1536xf32, #tpu.memory_space<vmem>>, %arg3: memref<1x384xf32, #tpu.memory_space<vmem>>, %arg4: memref<196x384xf32, #tpu.memory_space<vmem>>) attributes {dimension_semantics = [#tpu.dimension_semantics<parallel>], iteration_bounds = array<i64: 1>, scalar_prefetch = 0 : i64, scratch_operands = 0 : i64, tpu.core_type = #tpu.core_type<tc>, window_params = [{transform_indices = @transform_0, window_bounds = array<i64: 196, 1536>}, {pipeline_mode = #tpu.pipeline_mode<synchronous>, transform_indices = @transform_1, window_bounds = array<i64: 384, 1536>}, {pipeline_mode = #tpu.pipeline_mode<synchronous>, transform_indices = @transform_2, window_bounds = array<i64: 1, 384>}, {transform_indices = @transform_3, window_bounds = array<i64: 196, 384>}]} {
    %c0 = arith.constant 0 : index
    %c0_0 = arith.constant 0 : index
    %0 = vector.load %arg1[%c0, %c0_0] : memref<196x1536xf32, #tpu.memory_space<vmem>>, vector<196x1536xf32>
    %cst = arith.constant 5.000000e-01 : f32
    %1 = vector.broadcast %cst : f32 to vector<196x1536xf32>
    %2 = arith.mulf %1, %0 : vector<196x1536xf32>
    %cst_1 = arith.constant 0.707106769 : f32
    %3 = vector.broadcast %cst_1 : f32 to vector<196x1536xf32>
    %4 = arith.mulf %0, %3 : vector<196x1536xf32>
    %5 = math.erf %4 : vector<196x1536xf32>
    %cst_2 = arith.constant 1.000000e+00 : f32
    %6 = vector.broadcast %cst_2 : f32 to vector<196x1536xf32>
    %7 = arith.addf %6, %5 : vector<196x1536xf32>
    %8 = arith.mulf %2, %7 : vector<196x1536xf32>
    %c0_3 = arith.constant 0 : index
    %c0_4 = arith.constant 0 : index
    %9 = vector.load %arg2[%c0_3, %c0_4] : memref<384x1536xf32, #tpu.memory_space<vmem>>, vector<384x1536xf32>
    %cst_5 = arith.constant dense<0.000000e+00> : vector<196x384xf32>
    %10 = tpu.matmul %8, %9, %cst_5 {dimension_numbers = #tpu.dot_dimension_numbers<[1], [1], [0], [0], [0, 0, 1, 0], [], []>} : vector<196x1536xf32>, vector<384x1536xf32>, vector<196x384xf32> -> vector<196x384xf32>
    %c0_6 = arith.constant 0 : index
    %c0_7 = arith.constant 0 : index
    %11 = vector.load %arg3[%c0_6, %c0_7] : memref<1x384xf32, #tpu.memory_space<vmem>>, vector<1x384xf32>
    %12 = vector.broadcast %11 : vector<1x384xf32> to vector<196x384xf32>
    %13 = arith.addf %10, %12 : vector<196x384xf32>
    %c0_8 = arith.constant 0 : index
    %c0_9 = arith.constant 0 : index
    %14 = vector.load %arg4[%c0_8, %c0_9] : memref<196x384xf32, #tpu.memory_space<vmem>>, vector<196x384xf32>
    tpu.vector_store %arg4[%c0_8, %c0_9], %13 {strides = array<i32>} : memref<196x384xf32, #tpu.memory_space<vmem>>, vector<196x384xf32>,
    return
  }
  func.func @transform_0(%arg0: i32) -> (i32, i32) {
    %c0_i32 = arith.constant 0 : i32
    %c0_i32_0 = arith.constant 0 : i32
    return %arg0, %c0_i32 : i32, i32
  }
  func.func @transform_1(%arg0: i32) -> (i32, i32) {
    %c0_i32 = arith.constant 0 : i32
    %c0_i32_0 = arith.constant 0 : i32
    %c0_i32_1 = arith.constant 0 : i32
    return %c0_i32, %c0_i32_0 : i32, i32
  }
  func.func @transform_2(%arg0: i32) -> (i32, i32) {
    %c0_i32 = arith.constant 0 : i32
    %c0_i32_0 = arith.constant 0 : i32
    %c0_i32_1 = arith.constant 0 : i32
    return %c0_i32, %c0_i32_0 : i32, i32
  }
  func.func @transform_3(%arg0: i32) -> (i32, i32) {
    %c0_i32 = arith.constant 0 : i32
    %c0_i32_0 = arith.constant 0 : i32
    return %arg0, %c0_i32 : i32, i32
  }
}

</mosaic_0001>

<llo_original>
// kernel: tpu_custom_call.1
$region0: #{tpu_custom_call.1}
  #allocation0 [shape = 'u32[]', space=smem, size = 0x4, offset = 0x4, fixed_abs, tag = 'smem constant byte address 0x4 - core index']
  #allocation1 [shape = 'u32[144,128]{1,0:T(1,128)}', space=vmem, size = 0x12000, scoped, tag = 'internal scratch']
  %s0 = inlined_call_operand.hbm [shape: f32[196,1536], index: 0, kind: input, shape index: {}]
  %s1 = inlined_call_operand.hbm [shape: f32[384,1536], index: 1, kind: input, shape index: {}]
  %s2 = inlined_call_operand.hbm [shape: f32[1,384], index: 2, kind: input, shape index: {}]
  %s3 = inlined_call_operand.hbm [shape: f32[196,384], index: 3, kind: output, shape index: {}]
  %s4 = sld [smem:[#allocation0]]
  $region34: #{tpu_custom_call.1} parent=0
    _
  %s6 = ssub.s32 1, %s4
  %s7 = scalar_select 0, %s6, %s4
  $region1: #{tpu_custom_call.1} parent=0
    #allocation2 [shape = 'u8[1228800]{0}', space=vmem, size = 0x12c000, scoped, tag = 'input window, operand 0, single buffered']
    #allocation3 [shape = 's32[1]{0}', space=sflag, size = 0x4, scoped, tag = 'scoped memory for tpu_custom_call.1']
    #allocation4 [shape = 's32[1]{0}', space=sflag, size = 0x4, scoped, tag = 'scoped memory for tpu_custom_call.1']
    #allocation5 [shape = 'u8[2359296]{0}', space=vmem, size = 0x240000, scoped, tag = 'input window, operand 1, single buffered']
    #allocation6 [shape = 's32[1]{0}', space=sflag, size = 0x4, scoped, tag = 'scoped memory for tpu_custom_call.1']
    #allocation7 [shape = 'u8[1536]{0}', space=vmem, size = 0x800, scoped, tag = 'input window, operand 2, single buffered']
    #allocation8 [shape = 'u8[307200]{0}', space=vmem, size = 0x4b000, scoped, tag = 'output window, operand 0, single buffered']
    %8 = vsyncpa [#allocation3], 0
    %9 = vsyncpa [#allocation6], 0
    %10 = vsyncpa [#allocation4], 0
    // Predicated region
    $region2: #{tpu_custom_call.1} parent=1 // pred_check
      _
    $region3: #{tpu_custom_call.1} parent=1 // pred_check_branch
      %12 = sbr.rel (0) target = $region5
    $region4: #{tpu_custom_call.1} parent=1 // pred_region
      %s14 = ssub.s32 38400, 38400
      %15 = vsyncadd [#allocation3], %s14
      %s16 = sshll.u32 [#allocation2], 4
      %s17 = int_to_ptr.vmem [resolvable:$true] %s16
      %22 = dma.hbm_to_vmem [thread:$0]  %s0, 38400, %s17, [#allocation3], 1536, 1536, 96
    $region5: #{tpu_custom_call.1} parent=1 // pred_fallthru
      _
    // Predicated region
    $region6: #{tpu_custom_call.1} parent=1 // pred_check
      _
    $region7: #{tpu_custom_call.1} parent=1 // pred_check_branch
      %24 = sbr.rel (0) target = $region9
    $region8: #{tpu_custom_call.1} parent=1 // pred_region
      %s26 = ssub.s32 73728, 73728
      %27 = vsyncadd [#allocation6], %s26
      %s28 = sshll.u32 [#allocation5], 4
      %s29 = int_to_ptr.vmem [resolvable:$true] %s28
      %34 = dma.hbm_to_vmem [thread:$0]  %s1, 73728, %s29, [#allocation6], 1536, 1536, 96
    $region9: #{tpu_custom_call.1} parent=1 // pred_fallthru
      _
    // Predicated region
    $region10: #{tpu_custom_call.1} parent=1 // pred_check
      _
    $region11: #{tpu_custom_call.1} parent=1 // pred_check_branch
      %36 = sbr.rel (0) target = $region13
    $region12: #{tpu_custom_call.1} parent=1 // pred_region
      %s38 = ssub.s32 48, 48
      %39 = vsyncadd [#allocation6], %s38
      %s41 = sshll.u32 [#allocation7], 4
      %s42 = int_to_ptr.vmem [resolvable:$true] %s41
      %44 = dma.hbm_to_vmem [thread:$0]  %s2, 48, %s42, [#allocation6]
    $region13: #{tpu_custom_call.1} parent=1 // pred_fallthru
      _
    // Predicated region
    $region14: #{tpu_custom_call.1} parent=1 // pred_check
      _
    $region15: #{tpu_custom_call.1} parent=1 // pred_check_branch
      %46 = sbr.rel (0) target = $region17
    $region16: #{tpu_custom_call.1} parent=1 // pred_region
      %47 = dma.done [#allocation3], 38400
    $region17: #{tpu_custom_call.1} parent=1 // pred_fallthru
      _
    // Predicated region
    $region18: #{tpu_custom_call.1} parent=1 // pred_check
      _
    $region19: #{tpu_custom_call.1} parent=1 // pred_check_branch
      %49 = sbr.rel (0) target = $region21
    $region20: #{tpu_custom_call.1} parent=1 // pred_region
      %50 = dma.done [#allocation6], 73728
    $region21: #{tpu_custom_call.1} parent=1 // pred_fallthru
      _
    // Predicated region
    $region22: #{tpu_custom_call.1} parent=1 // pred_check
      _
    $region23: #{tpu_custom_call.1} parent=1 // pred_check_branch
      %52 = sbr.rel (0) target = $region25
    $region24: #{tpu_custom_call.1} parent=1 // pred_region
      %53 = dma.done [#allocation6], 48
    $region25: #{tpu_custom_call.1} parent=1 // pred_fallthru
      _
    %v54 = vld [vmem:[#allocation2] sm:$0xff]
    %v55 = vld [vmem:[#allocation2 + $0x8] sm:$0xff]
    %v56 = vld [vmem:[#allocation2 + $0x10] sm:$0xff]
    %v57 = vld [vmem:[#allocation2 + $0x18] sm:$0xff]
    %v58 = vld [vmem:[#allocation2 + $0x20] sm:$0xff]
    %v59 = vld [vmem:[#allocation2 + $0x28] sm:$0xff]
    %v60 = vld [vmem:[#allocation2 + $0x30] sm:$0xff]
    %v61 = vld [vmem:[#allocation2 + $0x38] sm:$0xff]
    %v62 = vld [vmem:[#allocation2 + $0x40] sm:$0xff]
    %v63 = vld [vmem:[#allocation2 + $0x48] sm:$0xff]
    %v64 = vld [vmem:[#allocation2 + $0x50] sm:$0xff]
    %v65 = vld [vmem:[#allocation2 + $0x58] sm:$0xff]
    %v66 = vld [vmem:[#allocation2 + $0x60] sm:$0xff]
    %v67 = vld [vmem:[#allocation2 + $0x68] sm:$0xff]
    %v68 = vld [vmem:[#allocation2 + $0x70] sm:$0xff]
    %v69 = vld [vmem:[#allocation2 + $0x78] sm:$0xff]
    %v70 = vld [vmem:[#allocation2 + $0x80] sm:$0xff]
    %v71 = vld [vmem:[#allocation2 + $0x88] sm:$0xff]
    %v72 = vld [vmem:[#allocation2 + $0x90] sm:$0xff]
    %v73 = vld [vmem:[#allocation2 + $0x98] sm:$0xff]
    %v74 = vld [vmem:[#allocation2 + $0xa0] sm:$0xff]
    %v75 = vld [vmem:[#allocation2 + $0xa8] sm:$0xff]
    %v76 = vld [vmem:[#allocation2 + $0xb0] sm:$0xff]
    %v77 = vld [vmem:[#allocation2 + $0xb8] sm:$0xff]
    %v78 = vld [vmem:[#allocation2 + $0xc0] sm:$0xff]
    %v79 = vld [vmem:[#allocation2 + $0xc8] sm:$0xff]
    %v80 = vld [vmem:[#allocation2 + $0xd0] sm:$0xff]
    %v81 = vld [vmem:[#allocation2 + $0xd8] sm:$0xff]
    %v82 = vld [vmem:[#allocation2 + $0xe0] sm:$0xff]
    %v83 = vld [vmem:[#allocation2 + $0xe8] sm:$0xff]
    %v84 = vld [vmem:[#allocation2 + $0xf0] sm:$0xff]
    %v85 = vld [vmem:[#allocation2 + $0xf8] sm:$0xff]
    %v86 = vld [vmem:[#allocation2 + $0x100] sm:$0xff]
    %v87 = vld [vmem:[#allocation2 + $0x108] sm:$0xff]
    %v88 = vld [vmem:[#allocation2 + $0x110] sm:$0xff]
    %v89 = vld [vmem:[#allocation2 + $0x118] sm:$0xff]
    %v90 = vld [vmem:[#allocation2 + $0x120] sm:$0xff]
    %v91 = vld [vmem:[#allocation2 + $0x128] sm:$0xff]
    %v92 = vld [vmem:[#allocation2 + $0x130] sm:$0xff]
    %v93 = vld [vmem:[#allocation2 + $0x138] sm:$0xff]
    %v94 = vld [vmem:[#allocation2 + $0x140] sm:$0xff]
    %v95 = vld [vmem:[#allocation2 + $0x148] sm:$0xff]
    %v96 = vld [vmem:[#allocation2 + $0x150] sm:$0xff]
    %v97 = vld [vmem:[#allocation2 + $0x158] sm:$0xff]
    %v98 = vld [vmem:[#allocation2 + $0x160] sm:$0xff]
    %v99 = vld [vmem:[#allocation2 + $0x168] sm:$0xff]
    %v100 = vld [vmem:[#allocation2 + $0x170] sm:$0xff]
    %v101 = vld [vmem:[#allocation2 + $0x178] sm:$0xff]
    %v102 = vld [vmem:[#allocation2 + $0x180] sm:$0xff]
    %v103 = vld [vmem:[#allocation2 + $0x188] sm:$0xff]
    %v104 = vld [vmem:[#allocation2 + $0x190] sm:$0xff]
    %v105 = vld [vmem:[#allocation2 + $0x198] sm:$0xff]
    %v106 = vld [vmem:[#allocation2 + $0x1a0] sm:$0xff]
    %v107 = vld [vmem:[#allocation2 + $0x1a8] sm:$0xff]
    %v108 = vld [vmem:[#allocation2 + $0x1b0] sm:$0xff]
    %v109 = vld [vmem:[#allocation2 + $0x1b8] sm:$0xff]
    %v110 = vld [vmem:[#allocation2 + $0x1c0] sm:$0xff]
    %v111 = vld [vmem:[#allocation2 + $0x1c8] sm:$0xff]
    %v112 = vld [vmem:[#allocation2 + $0x1d0] sm:$0xff]
    %v113 = vld [vmem:[#allocation2 + $0x1d8] sm:$0xff]
    %v114 = vld [vmem:[#allocation2 + $0x1e0] sm:$0xff]
    %v115 = vld [vmem:[#allocation2 + $0x1e8] sm:$0xff]
    %v116 = vld [vmem:[#allocation2 + $0x1f0] sm:$0xff]
    %v117 = vld [vmem:[#allocation2 + $0x1f8] sm:$0xff]
    %v118 = vld [vmem:[#allocation2 + $0x200] sm:$0xff]
    %v119 = vld [vmem:[#allocation2 + $0x208] sm:$0xff]
    %v120 = vld [vmem:[#allocation2 + $0x210] sm:$0xff]
    %v121 = vld [vmem:[#allocation2 + $0x218] sm:$0xff]
    %v122 = vld [vmem:[#allocation2 + $0x220] sm:$0xff]
    %v123 = vld [vmem:[#allocation2 + $0x228] sm:$0xff]
    %v124 = vld [vmem:[#allocation2 + $0x230] sm:$0xff]
    %v125 = vld [vmem:[#allocation2 + $0x238] sm:$0xff]
    %v126 = vld [vmem:[#allocation2 + $0x240] sm:$0xff]
    %v127 = vld [vmem:[#allocation2 + $0x248] sm:$0xff]
    %v128 = vld [vmem:[#allocation2 + $0x250] sm:$0xff]
    %v129 = vld [vmem:[#allocation2 + $0x258] sm:$0xff]
    %v130 = vld [vmem:[#allocation2 + $0x260] sm:$0xff]
    %v131 = vld [vmem:[#allocation2 + $0x268] sm:$0xff]
    %v132 = vld [vmem:[#allocation2 + $0x270] sm:$0xff]
    %v133 = vld [vmem:[#allocation2 + $0x278] sm:$0xff]
    %v134 = vld [vmem:[#allocation2 + $0x280] sm:$0xff]
    %v135 = vld [vmem:[#allocation2 + $0x288] sm:$0xff]
    %v136 = vld [vmem:[#allocation2 + $0x290] sm:$0xff]
    %v137 = vld [vmem:[#allocation2 + $0x298] sm:$0xff]
    %v138 = vld [vmem:[#allocation2 + $0x2a0] sm:$0xff]
    %v139 = vld [vmem:[#allocation2 + $0x2a8] sm:$0xff]
    %v140 = vld [vmem:[#allocation2 + $0x2b0] sm:$0xff]
    %v141 = vld [vmem:[#allocation2 + $0x2b8] sm:$0xff]
    %v142 = vld [vmem:[#allocation2 + $0x2c0] sm:$0xff]
    %v143 = vld [vmem:[#allocation2 + $0x2c8] sm:$0xff]
    %v144 = vld [vmem:[#allocation2 + $0x2d0] sm:$0xff]
    %v145 = vld [vmem:[#allocation2 + $0x2d8] sm:$0xff]
    %v146 = vld [vmem:[#allocation2 + $0x2e0] sm:$0xff]
    %v147 = vld [vmem:[#allocation2 + $0x2e8] sm:$0xff]
    %v148 = vld [vmem:[#allocation2 + $0x2f0] sm:$0xff]
    %v149 = vld [vmem:[#allocation2 + $0x2f8] sm:$0xff]
    %v150 = vld [vmem:[#allocation2 + $0x300] sm:$0xff]
    %v151 = vld [vmem:[#allocation2 + $0x308] sm:$0xff]
    %v152 = vld [vmem:[#allocation2 + $0x310] sm:$0xff]
    %v153 = vld [vmem:[#allocation2 + $0x318] sm:$0xff]
    %v154 = vld [vmem:[#allocation2 + $0x320] sm:$0xff]
    %v155 = vld [vmem:[#allocation2 + $0x328] sm:$0xff]
    %v156 = vld [vmem:[#allocation2 + $0x330] sm:$0xff]
    %v157 = vld [vmem:[#allocation2 + $0x338] sm:$0xff]
    %v158 = vld [vmem:[#allocation2 + $0x340] sm:$0xff]
    %v159 = vld [vmem:[#allocation2 + $0x348] sm:$0xff]
    %v160 = vld [vmem:[#allocation2 + $0x350] sm:$0xff]
    %v161 = vld [vmem:[#allocation2 + $0x358] sm:$0xff]
    %v162 = vld [vmem:[#allocation2 + $0x360] sm:$0xff]
    %v163 = vld [vmem:[#allocation2 + $0x368] sm:$0xff]
    %v164 = vld [vmem:[#allocation2 + $0x370] sm:$0xff]
    %v165 = vld [vmem:[#allocation2 + $0x378] sm:$0xff]
    %v166 = vld [vmem:[#allocation2 + $0x380] sm:$0xff]
    %v167 = vld [vmem:[#allocation2 + $0x388] sm:$0xff]
    %v168 = vld [vmem:[#allocation2 + $0x390] sm:$0xff]
    %v169 = vld [vmem:[#allocation2 + $0x398] sm:$0xff]
    %v170 = vld [vmem:[#allocation2 + $0x3a0] sm:$0xff]
    %v171 = vld [vmem:[#allocation2 + $0x3a8] sm:$0xff]
    %v172 = vld [vmem:[#allocation2 + $0x3b0] sm:$0xff]
    %v173 = vld [vmem:[#allocation2 + $0x3b8] sm:$0xff]
    %v174 = vld [vmem:[#allocation2 + $0x3c0] sm:$0xff]
    %v175 = vld [vmem:[#allocation2 + $0x3c8] sm:$0xff]
    %v176 = vld [vmem:[#allocation2 + $0x3d0] sm:$0xff]
    %v177 = vld [vmem:[#allocation2 + $0x3d8] sm:$0xff]
    %v178 = vld [vmem:[#allocation2 + $0x3e0] sm:$0xff]
    %v179 = vld [vmem:[#allocation2 + $0x3e8] sm:$0xff]
    %v180 = vld [vmem:[#allocation2 + $0x3f0] sm:$0xff]
    %v181 = vld [vmem:[#allocation2 + $0x3f8] sm:$0xff]
    %v182 = vld [vmem:[#allocation2 + $0x400] sm:$0xff]
    %v183 = vld [vmem:[#allocation2 + $0x408] sm:$0xff]
    %v184 = vld [vmem:[#allocation2 + $0x410] sm:$0xff]
    %v185 = vld [vmem:[#allocation2 + $0x418] sm:$0xff]
    %v186 = vld [vmem:[#allocation2 + $0x420] sm:$0xff]
    %v187 = vld [vmem:[#allocation2 + $0x428] sm:$0xff]
    %v188 = vld [vmem:[#allocation2 + $0x430] sm:$0xff]
    %v189 = vld [vmem:[#allocation2 + $0x438] sm:$0xff]
    %v190 = vld [vmem:[#allocation2 + $0x440] sm:$0xff]
    %v191 = vld [vmem:[#allocation2 + $0x448] sm:$0xff]
    %v192 = vld [vmem:[#allocation2 + $0x450] sm:$0xff]
    %v193 = vld [vmem:[#allocation2 + $0x458] sm:$0xff]
    %v194 = vld [vmem:[#allocation2 + $0x460] sm:$0xff]
    %v195 = vld [vmem:[#allocation2 + $0x468] sm:$0xff]
    %v196 = vld [vmem:[#allocation2 + $0x470] sm:$0xff]
    %v197 = vld [vmem:[#allocation2 + $0x478] sm:$0xff]
    %v198 = vld [vmem:[#allocation2 + $0x480] sm:$0xff]
    %v199 = vld [vmem:[#allocation2 + $0x488] sm:$0xff]
    %v200 = vld [vmem:[#allocation2 + $0x490] sm:$0xff]
    %v201 = vld [vmem:[#allocation2 + $0x498] sm:$0xff]
    %v202 = vld [vmem:[#allocation2 + $0x4a0] sm:$0xff]
    %v203 = vld [vmem:[#allocation2 + $0x4a8] sm:$0xff]
    %v204 = vld [vmem:[#allocation2 + $0x4b0] sm:$0xff]
    %v205 = vld [vmem:[#allocation2 + $0x4b8] sm:$0xff]
    %v206 = vld [vmem:[#allocation2 + $0x4c0] sm:$0xff]
    %v207 = vld [vmem:[#allocation2 + $0x4c8] sm:$0xff]
    %v208 = vld [vmem:[#allocation2 + $0x4d0] sm:$0xff]
    %v209 = vld [vmem:[#allocation2 + $0x4d8] sm:$0xff]
    %v210 = vld [vmem:[#allocation2 + $0x4e0] sm:$0xff]
    %v211 = vld [vmem:[#allocation2 + $0x4e8] sm:$0xff]
    %v212 = vld [vmem:[#allocation2 + $0x4f0] sm:$0xff]
    %v213 = vld [vmem:[#allocation2 + $0x4f8] sm:$0xff]
    %v214 = vld [vmem:[#allocation2 + $0x500] sm:$0xff]
    %v215 = vld [vmem:[#allocation2 + $0x508] sm:$0xff]
    %v216 = vld [vmem:[#allocation2 + $0x510] sm:$0xff]
    %v217 = vld [vmem:[#allocation2 + $0x518] sm:$0xff]
    %v218 = vld [vmem:[#allocation2 + $0x520] sm:$0xff]
    %v219 = vld [vmem:[#allocation2 + $0x528] sm:$0xff]
    %v220 = vld [vmem:[#allocation2 + $0x530] sm:$0xff]
    %v221 = vld [vmem:[#allocation2 + $0x538] sm:$0xff]
    %v222 = vld [vmem:[#allocation2 + $0x540] sm:$0xff]
    %v223 = vld [vmem:[#allocation2 + $0x548] sm:$0xff]
    %v224 = vld [vmem:[#allocation2 + $0x550] sm:$0xff]
    %v225 = vld [vmem:[#allocation2 + $0x558] sm:$0xff]
    %v226 = vld [vmem:[#allocation2 + $0x560] sm:$0xff]
    %v227 = vld [vmem:[#allocation2 + $0x568] sm:$0xff]
    %v228 = vld [vmem:[#allocation2 + $0x570] sm:$0xff]
    %v229 = vld [vmem:[#allocation2 + $0x578] sm:$0xff]
    %v230 = vld [vmem:[#allocation2 + $0x580] sm:$0xff]
    %v231 = vld [vmem:[#allocation2 + $0x588] sm:$0xff]
    %v232 = vld [vmem:[#allocation2 + $0x590] sm:$0xff]
    %v233 = vld [vmem:[#allocation2 + $0x598] sm:$0xff]
    %v234 = vld [vmem:[#allocation2 + $0x5a0] sm:$0xff]
    %v235 = vld [vmem:[#allocation2 + $0x5a8] sm:$0xff]
    %v236 = vld [vmem:[#allocation2 + $0x5b0] sm:$0xff]
    %v237 = vld [vmem:[#allocation2 + $0x5b8] sm:$0xff]
    %v238 = vld [vmem:[#allocation2 + $0x5c0] sm:$0xff]
    %v239 = vld [vmem:[#allocation2 + $0x5c8] sm:$0xff]
    %v240 = vld [vmem:[#allocation2 + $0x5d0] sm:$0xff]
    %v241 = vld [vmem:[#allocation2 + $0x5d8] sm:$0xff]
    %v242 = vld [vmem:[#allocation2 + $0x5e0] sm:$0xff]
    %v243 = vld [vmem:[#allocation2 + $0x5e8] sm:$0xff]
    %v244 = vld [vmem:[#allocation2 + $0x5f0] sm:$0xff]
    %v245 = vld [vmem:[#allocation2 + $0x5f8] sm:$0xff]
    %v246 = vld [vmem:[#allocation2 + $0x600] sm:$0xff]
    %v247 = vld [vmem:[#allocation2 + $0x608] sm:$0xff]
    %v248 = vld [vmem:[#allocation2 + $0x610] sm:$0xff]
    %v249 = vld [vmem:[#allocation2 + $0x618] sm:$0xff]
    %v250 = vld [vmem:[#allocation2 + $0x620] sm:$0xff]
    %v251 = vld [vmem:[#allocation2 + $0x628] sm:$0xff]
    %v252 = vld [vmem:[#allocation2 + $0x630] sm:$0xff]
    %v253 = vld [vmem:[#allocation2 + $0x638] sm:$0xff]
    %v254 = vld [vmem:[#allocation2 + $0x640] sm:$0xff]
    %v255 = vld [vmem:[#allocation2 + $0x648] sm:$0xff]
    %v256 = vld [vmem:[#allocation2 + $0x650] sm:$0xff]
    %v257 = vld [vmem:[#allocation2 + $0x658] sm:$0xff]
    %v258 = vld [vmem:[#allocation2 + $0x660] sm:$0xff]
    %v259 = vld [vmem:[#allocation2 + $0x668] sm:$0xff]
    %v260 = vld [vmem:[#allocation2 + $0x670] sm:$0xff]
    %v261 = vld [vmem:[#allocation2 + $0x678] sm:$0xff]
    %v262 = vld [vmem:[#allocation2 + $0x680] sm:$0xff]
    %v263 = vld [vmem:[#allocation2 + $0x688] sm:$0xff]
    %v264 = vld [vmem:[#allocation2 + $0x690] sm:$0xff]
    %v265 = vld [vmem:[#allocation2 + $0x698] sm:$0xff]
    %v266 = vld [vmem:[#allocation2 + $0x6a0] sm:$0xff]
    %v267 = vld [vmem:[#allocation2 + $0x6a8] sm:$0xff]
    %v268 = vld [vmem:[#allocation2 + $0x6b0] sm:$0xff]
    %v269 = vld [vmem:[#allocation2 + $0x6b8] sm:$0xff]
    %v270 = vld [vmem:[#allocation2 + $0x6c0] sm:$0xff]
    %v271 = vld [vmem:[#allocation2 + $0x6c8] sm:$0xff]
    %v272 = vld [vmem:[#allocation2 + $0x6d0] sm:$0xff]
    %v273 = vld [vmem:[#allocation2 + $0x6d8] sm:$0xff]
    %v274 = vld [vmem:[#allocation2 + $0x6e0] sm:$0xff]
    %v275 = vld [vmem:[#allocation2 + $0x6e8] sm:$0xff]
    %v276 = vld [vmem:[#allocation2 + $0x6f0] sm:$0xff]
    %v277 = vld [vmem:[#allocation2 + $0x6f8] sm:$0xff]
    %v278 = vld [vmem:[#allocation2 + $0x700] sm:$0xff]
    %v279 = vld [vmem:[#allocation2 + $0x708] sm:$0xff]
    %v280 = vld [vmem:[#allocation2 + $0x710] sm:$0xff]
    %v281 = vld [vmem:[#allocation2 + $0x718] sm:$0xff]
    %v282 = vld [vmem:[#allocation2 + $0x720] sm:$0xff]
    %v283 = vld [vmem:[#allocation2 + $0x728] sm:$0xff]
    %v284 = vld [vmem:[#allocation2 + $0x730] sm:$0xff]
    %v285 = vld [vmem:[#allocation2 + $0x738] sm:$0xff]
    %v286 = vld [vmem:[#allocation2 + $0x740] sm:$0xff]
    %v287 = vld [vmem:[#allocation2 + $0x748] sm:$0xff]
    %v288 = vld [vmem:[#allocation2 + $0x750] sm:$0xff]
    %v289 = vld [vmem:[#allocation2 + $0x758] sm:$0xff]
    %v290 = vld [vmem:[#allocation2 + $0x760] sm:$0xff]
    %v291 = vld [vmem:[#allocation2 + $0x768] sm:$0xff]
    %v292 = vld [vmem:[#allocation2 + $0x770] sm:$0xff]
    %v293 = vld [vmem:[#allocation2 + $0x778] sm:$0xff]
    %v294 = vld [vmem:[#allocation2 + $0x780] sm:$0xff]
    %v295 = vld [vmem:[#allocation2 + $0x788] sm:$0xff]
    %v296 = vld [vmem:[#allocation2 + $0x790] sm:$0xff]
    %v297 = vld [vmem:[#allocation2 + $0x798] sm:$0xff]
    %v298 = vld [vmem:[#allocation2 + $0x7a0] sm:$0xff]
    %v299 = vld [vmem:[#allocation2 + $0x7a8] sm:$0xff]
    %v300 = vld [vmem:[#allocation2 + $0x7b0] sm:$0xff]
    %v301 = vld [vmem:[#allocation2 + $0x7b8] sm:$0xff]
    %v302 = vld [vmem:[#allocation2 + $0x7c0] sm:$0xff]
    %v303 = vld [vmem:[#allocation2 + $0x7c8] sm:$0xff]
    %v304 = vld [vmem:[#allocation2 + $0x7d0] sm:$0xff]
    %v305 = vld [vmem:[#allocation2 + $0x7d8] sm:$0xff]
    %v306 = vld [vmem:[#allocation2 + $0x7e0] sm:$0xff]
    %v307 = vld [vmem:[#allocation2 + $0x7e8] sm:$0xff]
    %v308 = vld [vmem:[#allocation2 + $0x7f0] sm:$0xff]
    %v309 = vld [vmem:[#allocation2 + $0x7f8] sm:$0xff]
    %v310 = vld [vmem:[#allocation2 + $0x800] sm:$0xff]
    %v311 = vld [vmem:[#allocation2 + $0x808] sm:$0xff]
    %v312 = vld [vmem:[#allocation2 + $0x810] sm:$0xff]
    %v313 = vld [vmem:[#allocation2 + $0x818] sm:$0xff]
    %v314 = vld [vmem:[#allocation2 + $0x820] sm:$0xff]
    %v315 = vld [vmem:[#allocation2 + $0x828] sm:$0xff]
    %v316 = vld [vmem:[#allocation2 + $0x830] sm:$0xff]
    %v317 = vld [vmem:[#allocation2 + $0x838] sm:$0xff]
    %v318 = vld [vmem:[#allocation2 + $0x840] sm:$0xff]
    %v319 = vld [vmem:[#allocation2 + $0x848] sm:$0xff]
    %v320 = vld [vmem:[#allocation2 + $0x850] sm:$0xff]
    %v321 = vld [vmem:[#allocation2 + $0x858] sm:$0xff]
    %v322 = vld [vmem:[#allocation2 + $0x860] sm:$0xff]
    %v323 = vld [vmem:[#allocation2 + $0x868] sm:$0xff]
    %v324 = vld [vmem:[#allocation2 + $0x870] sm:$0xff]
    %v325 = vld [vmem:[#allocation2 + $0x878] sm:$0xff]
    %v326 = vld [vmem:[#allocation2 + $0x880] sm:$0xff]
    %v327 = vld [vmem:[#allocation2 + $0x888] sm:$0xff]
    %v328 = vld [vmem:[#allocation2 + $0x890] sm:$0xff]
    %v329 = vld [vmem:[#allocation2 + $0x898] sm:$0xff]
    %v330 = vld [vmem:[#allocation2 + $0x8a0] sm:$0xff]
    %v331 = vld [vmem:[#allocation2 + $0x8a8] sm:$0xff]
    %v332 = vld [vmem:[#allocation2 + $0x8b0] sm:$0xff]
    %v333 = vld [vmem:[#allocation2 + $0x8b8] sm:$0xff]
    %v334 = vld [vmem:[#allocation2 + $0x8c0] sm:$0xff]
    %v335 = vld [vmem:[#allocation2 + $0x8c8] sm:$0xff]
    %v336 = vld [vmem:[#allocation2 + $0x8d0] sm:$0xff]
    %v337 = vld [vmem:[#allocation2 + $0x8d8] sm:$0xff]
    %v338 = vld [vmem:[#allocation2 + $0x8e0] sm:$0xff]
    %v339 = vld [vmem:[#allocation2 + $0x8e8] sm:$0xff]
    %v340 = vld [vmem:[#allocation2 + $0x8f0] sm:$0xff]
    %v341 = vld [vmem:[#allocation2 + $0x8f8] sm:$0xff]
    %v342 = vld [vmem:[#allocation2 + $0x900] sm:$0xf]
    %v343 = vld [vmem:[#allocation2 + $0x908] sm:$0xf]
    %v344 = vld [vmem:[#allocation2 + $0x910] sm:$0xf]
    %v345 = vld [vmem:[#allocation2 + $0x918] sm:$0xf]
    %v346 = vld [vmem:[#allocation2 + $0x920] sm:$0xf]
    %v347 = vld [vmem:[#allocation2 + $0x928] sm:$0xf]
    %v348 = vld [vmem:[#allocation2 + $0x930] sm:$0xf]
    %v349 = vld [vmem:[#allocation2 + $0x938] sm:$0xf]
    %v350 = vld [vmem:[#allocation2 + $0x940] sm:$0xf]
    %v351 = vld [vmem:[#allocation2 + $0x948] sm:$0xf]
    %v352 = vld [vmem:[#allocation2 + $0x950] sm:$0xf]
    %v353 = vld [vmem:[#allocation2 + $0x958] sm:$0xf]
    %v354 = vmul.f32 %v54, 0.5
    %v355 = vmul.f32 %v55, 0.5
    %v356 = vmul.f32 %v56, 0.5
    %v357 = vmul.f32 %v57, 0.5
    %v358 = vmul.f32 %v58, 0.5
    %v359 = vmul.f32 %v59, 0.5
    %v360 = vmul.f32 %v60, 0.5
    %v361 = vmul.f32 %v61, 0.5
    %v362 = vmul.f32 %v62, 0.5
    %v363 = vmul.f32 %v63, 0.5
    %v364 = vmul.f32 %v64, 0.5
    %v365 = vmul.f32 %v65, 0.5
    %v366 = vmul.f32 %v66, 0.5
    %v367 = vmul.f32 %v67, 0.5
    %v368 = vmul.f32 %v68, 0.5
    %v369 = vmul.f32 %v69, 0.5
    %v370 = vmul.f32 %v70, 0.5
    %v371 = vmul.f32 %v71, 0.5
    %v372 = vmul.f32 %v72, 0.5
    %v373 = vmul.f32 %v73, 0.5
    %v374 = vmul.f32 %v74, 0.5
    %v375 = vmul.f32 %v75, 0.5
    %v376 = vmul.f32 %v76, 0.5
    %v377 = vmul.f32 %v77, 0.5
    %v378 = vmul.f32 %v78, 0.5
    %v379 = vmul.f32 %v79, 0.5
    %v380 = vmul.f32 %v80, 0.5
    %v381 = vmul.f32 %v81, 0.5
    %v382 = vmul.f32 %v82, 0.5
    %v383 = vmul.f32 %v83, 0.5
    %v384 = vmul.f32 %v84, 0.5
    %v385 = vmul.f32 %v85, 0.5
    %v386 = vmul.f32 %v86, 0.5
    %v387 = vmul.f32 %v87, 0.5
    %v388 = vmul.f32 %v88, 0.5
    %v389 = vmul.f32 %v89, 0.5
    %v390 = vmul.f32 %v90, 0.5
    %v391 = vmul.f32 %v91, 0.5
    %v392 = vmul.f32 %v92, 0.5
    %v393 = vmul.f32 %v93, 0.5
    %v394 = vmul.f32 %v94, 0.5
    %v395 = vmul.f32 %v95, 0.5
    %v396 = vmul.f32 %v96, 0.5
    %v397 = vmul.f32 %v97, 0.5
    %v398 = vmul.f32 %v98, 0.5
    %v399 = vmul.f32 %v99, 0.5
    %v400 = vmul.f32 %v100, 0.5
    %v401 = vmul.f32 %v101, 0.5
    %v402 = vmul.f32 %v102, 0.5
    %v403 = vmul.f32 %v103, 0.5
    %v404 = vmul.f32 %v104, 0.5
    %v405 = vmul.f32 %v105, 0.5
    %v406 = vmul.f32 %v106, 0.5
    %v407 = vmul.f32 %v107, 0.5
    %v408 = vmul.f32 %v108, 0.5
    %v409 = vmul.f32 %v109, 0.5
    %v410 = vmul.f32 %v110, 0.5
    %v411 = vmul.f32 %v111, 0.5
    %v412 = vmul.f32 %v112, 0.5
    %v413 = vmul.f32 %v113, 0.5
    %v414 = vmul.f32 %v114, 0.5
    %v415 = vmul.f32 %v115, 0.5
    %v416 = vmul.f32 %v116, 0.5
    %v417 = vmul.f32 %v117, 0.5
    %v418 = vmul.f32 %v118, 0.5
    %v419 = vmul.f32 %v119, 0.5
    %v420 = vmul.f32 %v120, 0.5
    %v421 = vmul.f32 %v121, 0.5
    %v422 = vmul.f32 %v122, 0.5
    %v423 = vmul.f32 %v123, 0.5
    %v424 = vmul.f32 %v124, 0.5
    %v425 = vmul.f32 %v125, 0.5
    %v426 = vmul.f32 %v126, 0.5
    %v427 = vmul.f32 %v127, 0.5
    %v428 = vmul.f32 %v128, 0.5
    %v429 = vmul.f32 %v129, 0.5
    %v430 = vmul.f32 %v130, 0.5
    %v431 = vmul.f32 %v131, 0.5
    %v432 = vmul.f32 %v132, 0.5
    %v433 = vmul.f32 %v133, 0.5
    %v434 = vmul.f32 %v134, 0.5
    %v435 = vmul.f32 %v135, 0.5
    %v436 = vmul.f32 %v136, 0.5
    %v437 = vmul.f32 %v137, 0.5
    %v438 = vmul.f32 %v138, 0.5
    %v439 = vmul.f32 %v139, 0.5
    %v440 = vmul.f32 %v140, 0.5
    %v441 = vmul.f32 %v141, 0.5
    %v442 = vmul.f32 %v142, 0.5
    %v443 = vmul.f32 %v143, 0.5
    %v444 = vmul.f32 %v144, 0.5
    %v445 = vmul.f32 %v145, 0.5
    %v446 = vmul.f32 %v146, 0.5
    %v447 = vmul.f32 %v147, 0.5
    %v448 = vmul.f32 %v148, 0.5
    %v449 = vmul.f32 %v149, 0.5
    %v450 = vmul.f32 %v150, 0.5
    %v451 = vmul.f32 %v151, 0.5
    %v452 = vmul.f32 %v152, 0.5
    %v453 = vmul.f32 %v153, 0.5
    %v454 = vmul.f32 %v154, 0.5
    %v455 = vmul.f32 %v155, 0.5
    %v456 = vmul.f32 %v156, 0.5
    %v457 = vmul.f32 %v157, 0.5
    %v458 = vmul.f32 %v158, 0.5
    %v459 = vmul.f32 %v159, 0.5
    %v460 = vmul.f32 %v160, 0.5
    %v461 = vmul.f32 %v161, 0.5
    %v462 = vmul.f32 %v162, 0.5
    %v463 = vmul.f32 %v163, 0.5
    %v464 = vmul.f32 %v164, 0.5
    %v465 = vmul.f32 %v165, 0.5
    %v466 = vmul.f32 %v166, 0.5
    %v467 = vmul.f32 %v167, 0.5
    %v468 = vmul.f32 %v168, 0.5
    %v469 = vmul.f32 %v169, 0.5
    %v470 = vmul.f32 %v170, 0.5
    %v471 = vmul.f32 %v171, 0.5
    %v472 = vmul.f32 %v172, 0.5
    %v473 = vmul.f32 %v173, 0.5
    %v474 = vmul.f32 %v174, 0.5
    %v475 = vmul.f32 %v175, 0.5
    %v476 = vmul.f32 %v176, 0.5
    %v477 = vmul.f32 %v177, 0.5
    %v478 = vmul.f32 %v178, 0.5
    %v479 = vmul.f32 %v179, 0.5
    %v480 = vmul.f32 %v180, 0.5
    %v481 = vmul.f32 %v181, 0.5
    %v482 = vmul.f32 %v182, 0.5
    %v483 = vmul.f32 %v183, 0.5
    %v484 = vmul.f32 %v184, 0.5
    %v485 = vmul.f32 %v185, 0.5
    %v486 = vmul.f32 %v186, 0.5
    %v487 = vmul.f32 %v187, 0.5
    %v488 = vmul.f32 %v188, 0.5
    %v489 = vmul.f32 %v189, 0.5
    %v490 = vmul.f32 %v190, 0.5
    %v491 = vmul.f32 %v191, 0.5
    %v492 = vmul.f32 %v192, 0.5
    %v493 = vmul.f32 %v193, 0.5
    %v494 = vmul.f32 %v194, 0.5
    %v495 = vmul.f32 %v195, 0.5
    %v496 = vmul.f32 %v196, 0.5
    %v497 = vmul.f32 %v197, 0.5
    %v498 = vmul.f32 %v198, 0.5
    %v499 = vmul.f32 %v199, 0.5
    %v500 = vmul.f32 %v200, 0.5
    %v501 = vmul.f32 %v201, 0.5
    %v502 = vmul.f32 %v202, 0.5
    %v503 = vmul.f32 %v203, 0.5
    %v504 = vmul.f32 %v204, 0.5
    %v505 = vmul.f32 %v205, 0.5
    %v506 = vmul.f32 %v206, 0.5
    %v507 = vmul.f32 %v207, 0.5
    %v508 = vmul.f32 %v208, 0.5
    %v509 = vmul.f32 %v209, 0.5
    %v510 = vmul.f32 %v210, 0.5
    %v511 = vmul.f32 %v211, 0.5
    %v512 = vmul.f32 %v212, 0.5
    %v513 = vmul.f32 %v213, 0.5
    %v514 = vmul.f32 %v214, 0.5
    %v515 = vmul.f32 %v215, 0.5
    %v516 = vmul.f32 %v216, 0.5
    %v517 = vmul.f32 %v217, 0.5
    %v518 = vmul.f32 %v218, 0.5
    %v519 = vmul.f32 %v219, 0.5
    %v520 = vmul.f32 %v220, 0.5
    %v521 = vmul.f32 %v221, 0.5
    %v522 = vmul.f32 %v222, 0.5
    %v523 = vmul.f32 %v223, 0.5
    %v524 = vmul.f32 %v224, 0.5
    %v525 = vmul.f32 %v225, 0.5
    %v526 = vmul.f32 %v226, 0.5
    %v527 = vmul.f32 %v227, 0.5
    %v528 = vmul.f32 %v228, 0.5
    %v529 = vmul.f32 %v229, 0.5
    %v530 = vmul.f32 %v230, 0.5
    %v531 = vmul.f32 %v231, 0.5
    %v532 = vmul.f32 %v232, 0.5
    %v533 = vmul.f32 %v233, 0.5
    %v534 = vmul.f32 %v234, 0.5
    %v535 = vmul.f32 %v235, 0.5
    %v536 = vmul.f32 %v236, 0.5
    %v537 = vmul.f32 %v237, 0.5
    %v538 = vmul.f32 %v238, 0.5
    %v539 = vmul.f32 %v239, 0.5
    %v540 = vmul.f32 %v240, 0.5
    %v541 = vmul.f32 %v241, 0.5
    %v542 = vmul.f32 %v242, 0.5
    %v543 = vmul.f32 %v243, 0.5
    %v544 = vmul.f32 %v244, 0.5
    %v545 = vmul.f32 %v245, 0.5
    %v546 = vmul.f32 %v246, 0.5
    %v547 = vmul.f32 %v247, 0.5
    %v548 = vmul.f32 %v248, 0.5
    %v549 = vmul.f32 %v249, 0.5
    %v550 = vmul.f32 %v250, 0.5
    %v551 = vmul.f32 %v251, 0.5
    %v552 = vmul.f32 %v252, 0.5
    %v553 = vmul.f32 %v253, 0.5
    %v554 = vmul.f32 %v254, 0.5
    %v555 = vmul.f32 %v255, 0.5
    %v556 = vmul.f32 %v256, 0.5
    %v557 = vmul.f32 %v257, 0.5
    %v558 = vmul.f32 %v258, 0.5
    %v559 = vmul.f32 %v259, 0.5
    %v560 = vmul.f32 %v260, 0.5
    %v561 = vmul.f32 %v261, 0.5
    %v562 = vmul.f32 %v262, 0.5
    %v563 = vmul.f32 %v263, 0.5
    %v564 = vmul.f32 %v264, 0.5
    %v565 = vmul.f32 %v265, 0.5
    %v566 = vmul.f32 %v266, 0.5
    %v567 = vmul.f32 %v267, 0.5
    %v568 = vmul.f32 %v268, 0.5
    %v569 = vmul.f32 %v269, 0.5
    %v570 = vmul.f32 %v270, 0.5
    %v571 = vmul.f32 %v271, 0.5
    %v572 = vmul.f32 %v272, 0.5
    %v573 = vmul.f32 %v273, 0.5
    %v574 = vmul.f32 %v274, 0.5
    %v575 = vmul.f32 %v275, 0.5
    %v576 = vmul.f32 %v276, 0.5
    %v577 = vmul.f32 %v277, 0.5
    %v578 = vmul.f32 %v278, 0.5
    %v579 = vmul.f32 %v279, 0.5
    %v580 = vmul.f32 %v280, 0.5
    %v581 = vmul.f32 %v281, 0.5
    %v582 = vmul.f32 %v282, 0.5
    %v583 = vmul.f32 %v283, 0.5
    %v584 = vmul.f32 %v284, 0.5
    %v585 = vmul.f32 %v285, 0.5
    %v586 = vmul.f32 %v286, 0.5
    %v587 = vmul.f32 %v287, 0.5
    %v588 = vmul.f32 %v288, 0.5
    %v589 = vmul.f32 %v289, 0.5
    %v590 = vmul.f32 %v290, 0.5
    %v591 = vmul.f32 %v291, 0.5
    %v592 = vmul.f32 %v292, 0.5
    %v593 = vmul.f32 %v293, 0.5
    %v594 = vmul.f32 %v294, 0.5
    %v595 = vmul.f32 %v295, 0.5
    %v596 = vmul.f32 %v296, 0.5
    %v597 = vmul.f32 %v297, 0.5
    %v598 = vmul.f32 %v298, 0.5
    %v599 = vmul.f32 %v299, 0.5
    %v600 = vmul.f32 %v300, 0.5
    %v601 = vmul.f32 %v301, 0.5
    %v602 = vmul.f32 %v302, 0.5
    %v603 = vmul.f32 %v303, 0.5
    %v604 = vmul.f32 %v304, 0.5
    %v605 = vmul.f32 %v305, 0.5
    %v606 = vmul.f32 %v306, 0.5
    %v607 = vmul.f32 %v307, 0.5
    %v608 = vmul.f32 %v308, 0.5
    %v609 = vmul.f32 %v309, 0.5
    %v610 = vmul.f32 %v310, 0.5
    %v611 = vmul.f32 %v311, 0.5
    %v612 = vmul.f32 %v312, 0.5
    %v613 = vmul.f32 %v313, 0.5
    %v614 = vmul.f32 %v314, 0.5
    %v615 = vmul.f32 %v315, 0.5
    %v616 = vmul.f32 %v316, 0.5
    %v617 = vmul.f32 %v317, 0.5
    %v618 = vmul.f32 %v318, 0.5
    %v619 = vmul.f32 %v319, 0.5
    %v620 = vmul.f32 %v320, 0.5
    %v621 = vmul.f32 %v321, 0.5
    %v622 = vmul.f32 %v322, 0.5
    %v623 = vmul.f32 %v323, 0.5
    %v624 = vmul.f32 %v324, 0.5
    %v625 = vmul.f32 %v325, 0.5
    %v626 = vmul.f32 %v326, 0.5
    %v627 = vmul.f32 %v327, 0.5
    %v628 = vmul.f32 %v328, 0.5
    %v629 = vmul.f32 %v329, 0.5
    %v630 = vmul.f32 %v330, 0.5
    %v631 = vmul.f32 %v331, 0.5
    %v632 = vmul.f32 %v332, 0.5
    %v633 = vmul.f32 %v333, 0.5
    %v634 = vmul.f32 %v334, 0.5
    %v635 = vmul.f32 %v335, 0.5
    %v636 = vmul.f32 %v336, 0.5
    %v637 = vmul.f32 %v337, 0.5
    %v638 = vmul.f32 %v338, 0.5
    %v639 = vmul.f32 %v339, 0.5
    %v640 = vmul.f32 %v340, 0.5
    %v641 = vmul.f32 %v341, 0.5
    %v642 = vmul.f32 %v342, 0.5
    %v643 = vmul.f32 %v343, 0.5
    %v644 = vmul.f32 %v344, 0.5
    %v645 = vmul.f32 %v345, 0.5
    %v646 = vmul.f32 %v346, 0.5
    %v647 = vmul.f32 %v347, 0.5
    %v648 = vmul.f32 %v348, 0.5
    %v649 = vmul.f32 %v349, 0.5
    %v650 = vmul.f32 %v350, 0.5
    %v651 = vmul.f32 %v351, 0.5
    %v652 = vmul.f32 %v352, 0.5
    %v653 = vmul.f32 %v353, 0.5
    %v654 = vmul.f32 %v54, 0.70710677
    %v655 = vmul.f32 %v55, 0.70710677
    %v656 = vmul.f32 %v56, 0.70710677
    %v657 = vmul.f32 %v57, 0.70710677
    %v658 = vmul.f32 %v58, 0.70710677
    %v659 = vmul.f32 %v59, 0.70710677
    %v660 = vmul.f32 %v60, 0.70710677
    %v661 = vmul.f32 %v61, 0.70710677
    %v662 = vmul.f32 %v62, 0.70710677
    %v663 = vmul.f32 %v63, 0.70710677
    %v664 = vmul.f32 %v64, 0.70710677
    %v665 = vmul.f32 %v65, 0.70710677
    %v666 = vmul.f32 %v66, 0.70710677
    %v667 = vmul.f32 %v67, 0.70710677
    %v668 = vmul.f32 %v68, 0.70710677
    %v669 = vmul.f32 %v69, 0.70710677
    %v670 = vmul.f32 %v70, 0.70710677
    %v671 = vmul.f32 %v71, 0.70710677
    %v672 = vmul.f32 %v72, 0.70710677
    %v673 = vmul.f32 %v73, 0.70710677
    %v674 = vmul.f32 %v74, 0.70710677
    %v675 = vmul.f32 %v75, 0.70710677
    %v676 = vmul.f32 %v76, 0.70710677
    %v677 = vmul.f32 %v77, 0.70710677
    %v678 = vmul.f32 %v78, 0.70710677
    %v679 = vmul.f32 %v79, 0.70710677
    %v680 = vmul.f32 %v80, 0.70710677
    %v681 = vmul.f32 %v81, 0.70710677
    %v682 = vmul.f32 %v82, 0.70710677
    %v683 = vmul.f32 %v83, 0.70710677
    %v684 = vmul.f32 %v84, 0.70710677
    %v685 = vmul.f32 %v85, 0.70710677
    %v686 = vmul.f32 %v86, 0.70710677
    %v687 = vmul.f32 %v87, 0.70710677
    %v688 = vmul.f32 %v88, 0.70710677
    %v689 = vmul.f32 %v89, 0.70710677
    %v690 = vmul.f32 %v90, 0.70710677
    %v691 = vmul.f32 %v91, 0.70710677
    %v692 = vmul.f32 %v92, 0.70710677
    %v693 = vmul.f32 %v93, 0.70710677
    %v694 = vmul.f32 %v94, 0.70710677
    %v695 = vmul.f32 %v95, 0.70710677
    %v696 = vmul.f32 %v96, 0.70710677
    %v697 = vmul.f32 %v97, 0.70710677
    %v698 = vmul.f32 %v98, 0.70710677
    %v699 = vmul.f32 %v99, 0.70710677
    %v700 = vmul.f32 %v100, 0.70710677
    %v701 = vmul.f32 %v101, 0.70710677
    %v702 = vmul.f32 %v102, 0.70710677
    %v703 = vmul.f32 %v103, 0.70710677
    %v704 = vmul.f32 %v104, 0.70710677
    %v705 = vmul.f32 %v105, 0.70710677
    %v706 = vmul.f32 %v106, 0.70710677
    %v707 = vmul.f32 %v107, 0.70710677
    %v708 = vmul.f32 %v108, 0.70710677
    %v709 = vmul.f32 %v109, 0.70710677
    %v710 = vmul.f32 %v110, 0.70710677
    %v711 = vmul.f32 %v111, 0.70710677
    %v712 = vmul.f32 %v112, 0.70710677
    %v713 = vmul.f32 %v113, 0.70710677
    %v714 = vmul.f32 %v114, 0.70710677
    %v715 = vmul.f32 %v115, 0.70710677
    %v716 = vmul.f32 %v116, 0.70710677
    %v717 = vmul.f32 %v117, 0.70710677
    %v718 = vmul.f32 %v118, 0.70710677
    %v719 = vmul.f32 %v119, 0.70710677
    %v720 = vmul.f32 %v120, 0.70710677
    %v721 = vmul.f32 %v121, 0.70710677
    %v722 = vmul.f32 %v122, 0.70710677
    %v723 = vmul.f32 %v123, 0.70710677
    %v724 = vmul.f32 %v124, 0.70710677
    %v725 = vmul.f32 %v125, 0.70710677
    %v726 = vmul.f32 %v126, 0.70710677
    %v727 = vmul.f32 %v127, 0.70710677
    %v728 = vmul.f32 %v128, 0.70710677
    %v729 = vmul.f32 %v129, 0.70710677
    %v730 = vmul.f32 %v130, 0.70710677
    %v731 = vmul.f32 %v131, 0.70710677
    %v732 = vmul.f32 %v132, 0.70710677
    %v733 = vmul.f32 %v133, 0.70710677
    %v734 = vmul.f32 %v134, 0.70710677
    %v735 = vmul.f32 %v135, 0.70710677
    %v736 = vmul.f32 %v136, 0.70710677
    %v737 = vmul.f32 %v137, 0.70710677
    %v738 = vmul.f32 %v138, 0.70710677
    %v739 = vmul.f32 %v139, 0.70710677
    %v740 = vmul.f32 %v140, 0.70710677
    %v741 = vmul.f32 %v141, 0.70710677
    %v742 = vmul.f32 %v142, 0.70710677
    %v743 = vmul.f32 %v143, 0.70710677
    %v744 = vmul.f32 %v144, 0.70710677
    %v745 = vmul.f32 %v145, 0.70710677
    %v746 = vmul.f32 %v146, 0.70710677
    %v747 = vmul.f32 %v147, 0.70710677
    %v748 = vmul.f32 %v148, 0.70710677
    %v749 = vmul.f32 %v149, 0.70710677
    %v750 = vmul.f32 %v150, 0.70710677
    %v751 = vmul.f32 %v151, 0.70710677
    %v752 = vmul.f32 %v152, 0.70710677
    %v753 = vmul.f32 %v153, 0.70710677
    %v754 = vmul.f32 %v154, 0.70710677
    %v755 = vmul.f32 %v155, 0.70710677
    %v756 = vmul.f32 %v156, 0.70710677
    %v757 = vmul.f32 %v157, 0.70710677
    %v758 = vmul.f32 %v158, 0.70710677
    %v759 = vmul.f32 %v159, 0.70710677
    %v760 = vmul.f32 %v160, 0.70710677
    %v761 = vmul.f32 %v161, 0.70710677
    %v762 = vmul.f32 %v162, 0.70710677
    %v763 = vmul.f32 %v163, 0.70710677
    %v764 = vmul.f32 %v164, 0.70710677
    %v765 = vmul.f32 %v165, 0.70710677
    %v766 = vmul.f32 %v166, 0.70710677
    %v767 = vmul.f32 %v167, 0.70710677
    %v768 = vmul.f32 %v168, 0.70710677
    %v769 = vmul.f32 %v169, 0.70710677
    %v770 = vmul.f32 %v170, 0.70710677
    %v771 = vmul.f32 %v171, 0.70710677
    %v772 = vmul.f32 %v172, 0.70710677
    %v773 = vmul.f32 %v173, 0.70710677
    %v774 = vmul.f32 %v174, 0.70710677
    %v775 = vmul.f32 %v175, 0.70710677
    %v776 = vmul.f32 %v176, 0.70710677
    %v777 = vmul.f32 %v177, 0.70710677
    %v778 = vmul.f32 %v178, 0.70710677
    %v779 = vmul.f32 %v179, 0.70710677
    %v780 = vmul.f32 %v180, 0.70710677
    %v781 = vmul.f32 %v181, 0.70710677
    %v782 = vmul.f32 %v182, 0.70710677
    %v783 = vmul.f32 %v183, 0.70710677
    %v784 = vmul.f32 %v184, 0.70710677
    %v785 = vmul.f32 %v185, 0.70710677
    %v786 = vmul.f32 %v186, 0.70710677
    %v787 = vmul.f32 %v187, 0.70710677
    %v788 = vmul.f32 %v188, 0.70710677
    %v789 = vmul.f32 %v189, 0.70710677
    %v790 = vmul.f32 %v190, 0.70710677
    %v791 = vmul.f32 %v191, 0.70710677
    %v792 = vmul.f32 %v192, 0.70710677
    %v793 = vmul.f32 %v193, 0.70710677
    %v794 = vmul.f32 %v194, 0.70710677
    %v795 = vmul.f32 %v195, 0.70710677
    %v796 = vmul.f32 %v196, 0.70710677
    %v797 = vmul.f32 %v197, 0.70710677
    %v798 = vmul.f32 %v198, 0.70710677
    %v799 = vmul.f32 %v199, 0.70710677
    %v800 = vmul.f32 %v200, 0.70710677
    %v801 = vmul.f32 %v201, 0.70710677
    %v802 = vmul.f32 %v202, 0.70710677
    %v803 = vmul.f32 %v203, 0.70710677
    %v804 = vmul.f32 %v204, 0.70710677
    %v805 = vmul.f32 %v205, 0.70710677
    %v806 = vmul.f32 %v206, 0.70710677
    %v807 = vmul.f32 %v207, 0.70710677
    %v808 = vmul.f32 %v208, 0.70710677
    %v809 = vmul.f32 %v209, 0.70710677
    %v810 = vmul.f32 %v210, 0.70710677
    %v811 = vmul.f32 %v211, 0.70710677
    %v812 = vmul.f32 %v212, 0.70710677
    %v813 = vmul.f32 %v213, 0.70710677
    %v814 = vmul.f32 %v214, 0.70710677
    %v815 = vmul.f32 %v215, 0.70710677
    %v816 = vmul.f32 %v216, 0.70710677
    %v817 = vmul.f32 %v217, 0.70710677
    %v818 = vmul.f32 %v218, 0.70710677
    %v819 = vmul.f32 %v219, 0.70710677
    %v820 = vmul.f32 %v220, 0.70710677
    %v821 = vmul.f32 %v221, 0.70710677
    %v822 = vmul.f32 %v222, 0.70710677
    %v823 = vmul.f32 %v223, 0.70710677
    %v824 = vmul.f32 %v224, 0.70710677
    %v825 = vmul.f32 %v225, 0.70710677
    %v826 = vmul.f32 %v226, 0.70710677
    %v827 = vmul.f32 %v227, 0.70710677
    %v828 = vmul.f32 %v228, 0.70710677
    %v829 = vmul.f32 %v229, 0.70710677
    %v830 = vmul.f32 %v230, 0.70710677
    %v831 = vmul.f32 %v231, 0.70710677
    %v832 = vmul.f32 %v232, 0.70710677
    %v833 = vmul.f32 %v233, 0.70710677
    %v834 = vmul.f32 %v234, 0.70710677
    %v835 = vmul.f32 %v235, 0.70710677
    %v836 = vmul.f32 %v236, 0.70710677
    %v837 = vmul.f32 %v237, 0.70710677
    %v838 = vmul.f32 %v238, 0.70710677
    %v839 = vmul.f32 %v239, 0.70710677
    %v840 = vmul.f32 %v240, 0.70710677
    %v841 = vmul.f32 %v241, 0.70710677
    %v842 = vmul.f32 %v242, 0.70710677
    %v843 = vmul.f32 %v243, 0.70710677
    %v844 = vmul.f32 %v244, 0.70710677
    %v845 = vmul.f32 %v245, 0.70710677
    %v846 = vmul.f32 %v246, 0.70710677
    %v847 = vmul.f32 %v247, 0.70710677
    %v848 = vmul.f32 %v248, 0.70710677
    %v849 = vmul.f32 %v249, 0.70710677
    %v850 = vmul.f32 %v250, 0.70710677
    %v851 = vmul.f32 %v251, 0.70710677
    %v852 = vmul.f32 %v252, 0.70710677
    %v853 = vmul.f32 %v253, 0.70710677
    %v854 = vmul.f32 %v254, 0.70710677
    %v855 = vmul.f32 %v255, 0.70710677
    %v856 = vmul.f32 %v256, 0.70710677
    %v857 = vmul.f32 %v257, 0.70710677
    %v858 = vmul.f32 %v258, 0.70710677
    %v859 = vmul.f32 %v259, 0.70710677
    %v860 = vmul.f32 %v260, 0.70710677
    %v861 = vmul.f32 %v261, 0.70710677
    %v862 = vmul.f32 %v262, 0.70710677
    %v863 = vmul.f32 %v263, 0.70710677
    %v864 = vmul.f32 %v264, 0.70710677
    %v865 = vmul.f32 %v265, 0.70710677
    %v866 = vmul.f32 %v266, 0.70710677
    %v867 = vmul.f32 %v267, 0.70710677
    %v868 = vmul.f32 %v268, 0.70710677
    %v869 = vmul.f32 %v269, 0.70710677
    %v870 = vmul.f32 %v270, 0.70710677
    %v871 = vmul.f32 %v271, 0.70710677
    %v872 = vmul.f32 %v272, 0.70710677
    %v873 = vmul.f32 %v273, 0.70710677
    %v874 = vmul.f32 %v274, 0.70710677
    %v875 = vmul.f32 %v275, 0.70710677
    %v876 = vmul.f32 %v276, 0.70710677
    %v877 = vmul.f32 %v277, 0.70710677
    %v878 = vmul.f32 %v278, 0.70710677
    %v879 = vmul.f32 %v279, 0.70710677
    %v880 = vmul.f32 %v280, 0.70710677
    %v881 = vmul.f32 %v281, 0.70710677
    %v882 = vmul.f32 %v282, 0.70710677
    %v883 = vmul.f32 %v283, 0.70710677
    %v884 = vmul.f32 %v284, 0.70710677
    %v885 = vmul.f32 %v285, 0.70710677
    %v886 = vmul.f32 %v286, 0.70710677
    %v887 = vmul.f32 %v287, 0.70710677
    %v888 = vmul.f32 %v288, 0.70710677
    %v889 = vmul.f32 %v289, 0.70710677
    %v890 = vmul.f32 %v290, 0.70710677
    %v891 = vmul.f32 %v291, 0.70710677
    %v892 = vmul.f32 %v292, 0.70710677
    %v893 = vmul.f32 %v293, 0.70710677
    %v894 = vmul.f32 %v294, 0.70710677
    %v895 = vmul.f32 %v295, 0.70710677
    %v896 = vmul.f32 %v296, 0.70710677
    %v897 = vmul.f32 %v297, 0.70710677
    %v898 = vmul.f32 %v298, 0.70710677
    %v899 = vmul.f32 %v299, 0.70710677
    %v900 = vmul.f32 %v300, 0.70710677
    %v901 = vmul.f32 %v301, 0.70710677
    %v902 = vmul.f32 %v302, 0.70710677
    %v903 = vmul.f32 %v303, 0.70710677
    %v904 = vmul.f32 %v304, 0.70710677
    %v905 = vmul.f32 %v305, 0.70710677
    %v906 = vmul.f32 %v306, 0.70710677
    %v907 = vmul.f32 %v307, 0.70710677
    %v908 = vmul.f32 %v308, 0.70710677
    %v909 = vmul.f32 %v309, 0.70710677
    %v910 = vmul.f32 %v310, 0.70710677
    %v911 = vmul.f32 %v311, 0.70710677
    %v912 = vmul.f32 %v312, 0.70710677
    %v913 = vmul.f32 %v313, 0.70710677
    %v914 = vmul.f32 %v314, 0.70710677
    %v915 = vmul.f32 %v315, 0.70710677
    %v916 = vmul.f32 %v316, 0.70710677
    %v917 = vmul.f32 %v317, 0.70710677
    %v918 = vmul.f32 %v318, 0.70710677
    %v919 = vmul.f32 %v319, 0.70710677
    %v920 = vmul.f32 %v320, 0.70710677
    %v921 = vmul.f32 %v321, 0.70710677
    %v922 = vmul.f32 %v322, 0.70710677
    %v923 = vmul.f32 %v323, 0.70710677
    %v924 = vmul.f32 %v324, 0.70710677
    %v925 = vmul.f32 %v325, 0.70710677
    %v926 = vmul.f32 %v326, 0.70710677
    %v927 = vmul.f32 %v327, 0.70710677
    %v928 = vmul.f32 %v328, 0.70710677
    %v929 = vmul.f32 %v329, 0.70710677
    %v930 = vmul.f32 %v330, 0.70710677
    %v931 = vmul.f32 %v331, 0.70710677
    %v932 = vmul.f32 %v332, 0.70710677
    %v933 = vmul.f32 %v333, 0.70710677
    %v934 = vmul.f32 %v334, 0.70710677
    %v935 = vmul.f32 %v335, 0.70710677
    %v936 = vmul.f32 %v336, 0.70710677
    %v937 = vmul.f32 %v337, 0.70710677
    %v938 = vmul.f32 %v338, 0.70710677
    %v939 = vmul.f32 %v339, 0.70710677
    %v940 = vmul.f32 %v340, 0.70710677
    %v941 = vmul.f32 %v341, 0.70710677
    %v942 = vmul.f32 %v342, 0.70710677
    %v943 = vmul.f32 %v343, 0.70710677
    %v944 = vmul.f32 %v344, 0.70710677
    %v945 = vmul.f32 %v345, 0.70710677
    %v946 = vmul.f32 %v346, 0.70710677
    %v947 = vmul.f32 %v347, 0.70710677
    %v948 = vmul.f32 %v348, 0.70710677
    %v949 = vmul.f32 %v349, 0.70710677
    %v950 = vmul.f32 %v350, 0.70710677
    %v951 = vmul.f32 %v351, 0.70710677
    %v952 = vmul.f32 %v352, 0.70710677
    %v953 = vmul.f32 %v353, 0.70710677
    %v954 = verf.f32.pop %v654
    %v955 = verf.f32.pop %v655
    %v956 = verf.f32.pop %v656
    %v957 = verf.f32.pop %v657
    %v958 = verf.f32.pop %v658
    %v959 = verf.f32.pop %v659
    %v960 = verf.f32.pop %v660
    %v961 = verf.f32.pop %v661
    %v962 = verf.f32.pop %v662
    %v963 = verf.f32.pop %v663
    %v964 = verf.f32.pop %v664
    %v965 = verf.f32.pop %v665
    %v966 = verf.f32.pop %v666
    %v967 = verf.f32.pop %v667
    %v968 = verf.f32.pop %v668
    %v969 = verf.f32.pop %v669
    %v970 = verf.f32.pop %v670
    %v971 = verf.f32.pop %v671
    %v972 = verf.f32.pop %v672
    %v973 = verf.f32.pop %v673
    %v974 = verf.f32.pop %v674
    %v975 = verf.f32.pop %v675
    %v976 = verf.f32.pop %v676
    %v977 = verf.f32.pop %v677
    %v978 = verf.f32.pop %v678
    %v979 = verf.f32.pop %v679
    %v980 = verf.f32.pop %v680
    %v981 = verf.f32.pop %v681
    %v982 = verf.f32.pop %v682
    %v983 = verf.f32.pop %v683
    %v984 = verf.f32.pop %v684
    %v985 = verf.f32.pop %v685
    %v986 = verf.f32.pop %v686
    %v987 = verf.f32.pop %v687
    %v988 = verf.f32.pop %v688
    %v989 = verf.f32.pop %v689
    %v990 = verf.f32.pop %v690
    %v991 = verf.f32.pop %v691
    %v992 = verf.f32.pop %v692
    %v993 = verf.f32.pop %v693
    %v994 = verf.f32.pop %v694
    %v995 = verf.f32.pop %v695
    %v996 = verf.f32.pop %v696
    %v997 = verf.f32.pop %v697
    %v998 = verf.f32.pop %v698
    %v999 = verf.f32.pop %v699
    %v1000 = verf.f32.pop %v700
    %v1001 = verf.f32.pop %v701
    %v1002 = verf.f32.pop %v702
    %v1003 = verf.f32.pop %v703
    %v1004 = verf.f32.pop %v704
    %v1005 = verf.f32.pop %v705
    %v1006 = verf.f32.pop %v706
    %v1007 = verf.f32.pop %v707
    %v1008 = verf.f32.pop %v708
    %v1009 = verf.f32.pop %v709
    %v1010 = verf.f32.pop %v710
    %v1011 = verf.f32.pop %v711
    %v1012 = verf.f32.pop %v712
    %v1013 = verf.f32.pop %v713
    %v1014 = verf.f32.pop %v714
    %v1015 = verf.f32.pop %v715
    %v1016 = verf.f32.pop %v716
    %v1017 = verf.f32.pop %v717
    %v1018 = verf.f32.pop %v718
    %v1019 = verf.f32.pop %v719
    %v1020 = verf.f32.pop %v720
    %v1021 = verf.f32.pop %v721
    %v1022 = verf.f32.pop %v722
    %v1023 = verf.f32.pop %v723
    %v1024 = verf.f32.pop %v724
    %v1025 = verf.f32.pop %v725
    %v1026 = verf.f32.pop %v726
    %v1027 = verf.f32.pop %v727
    %v1028 = verf.f32.pop %v728
    %v1029 = verf.f32.pop %v729
    %v1030 = verf.f32.pop %v730
    %v1031 = verf.f32.pop %v731
    %v1032 = verf.f32.pop %v732
    %v1033 = verf.f32.pop %v733
    %v1034 = verf.f32.pop %v734
    %v1035 = verf.f32.pop %v735
    %v1036 = verf.f32.pop %v736
    %v1037 = verf.f32.pop %v737
    %v1038 = verf.f32.pop %v738
    %v1039 = verf.f32.pop %v739
    %v1040 = verf.f32.pop %v740
    %v1041 = verf.f32.pop %v741
    %v1042 = verf.f32.pop %v742
    %v1043 = verf.f32.pop %v743
    %v1044 = verf.f32.pop %v744
    %v1045 = verf.f32.pop %v745
    %v1046 = verf.f32.pop %v746
    %v1047 = verf.f32.pop %v747
    %v1048 = verf.f32.pop %v748
    %v1049 = verf.f32.pop %v749
    %v1050 = verf.f32.pop %v750
    %v1051 = verf.f32.pop %v751
    %v1052 = verf.f32.pop %v752
    %v1053 = verf.f32.pop %v753
    %v1054 = verf.f32.pop %v754
    %v1055 = verf.f32.pop %v755
    %v1056 = verf.f32.pop %v756
    %v1057 = verf.f32.pop %v757
    %v1058 = verf.f32.pop %v758
    %v1059 = verf.f32.pop %v759
    %v1060 = verf.f32.pop %v760
    %v1061 = verf.f32.pop %v761
    %v1062 = verf.f32.pop %v762
    %v1063 = verf.f32.pop %v763
    %v1064 = verf.f32.pop %v764
    %v1065 = verf.f32.pop %v765
    %v1066 = verf.f32.pop %v766
    %v1067 = verf.f32.pop %v767
    %v1068 = verf.f32.pop %v768
    %v1069 = verf.f32.pop %v769
    %v1070 = verf.f32.pop %v770
    %v1071 = verf.f32.pop %v771
    %v1072 = verf.f32.pop %v772
    %v1073 = verf.f32.pop %v773
    %v1074 = verf.f32.pop %v774
    %v1075 = verf.f32.pop %v775
    %v1076 = verf.f32.pop %v776
    %v1077 = verf.f32.pop %v777
    %v1078 = verf.f32.pop %v778
    %v1079 = verf.f32.pop %v779
    %v1080 = verf.f32.pop %v780
    %v1081 = verf.f32.pop %v781
    %v1082 = verf.f32.pop %v782
    %v1083 = verf.f32.pop %v783
    %v1084 = verf.f32.pop %v784
    %v1085 = verf.f32.pop %v785
    %v1086 = verf.f32.pop %v786
    %v1087 = verf.f32.pop %v787
    %v1088 = verf.f32.pop %v788
    %v1089 = verf.f32.pop %v789
    %v1090 = verf.f32.pop %v790
    %v1091 = verf.f32.pop %v791
    %v1092 = verf.f32.pop %v792
    %v1093 = verf.f32.pop %v793
    %v1094 = verf.f32.pop %v794
    %v1095 = verf.f32.pop %v795
    %v1096 = verf.f32.pop %v796
    %v1097 = verf.f32.pop %v797
    %v1098 = verf.f32.pop %v798
    %v1099 = verf.f32.pop %v799
    %v1100 = verf.f32.pop %v800
    %v1101 = verf.f32.pop %v801
    %v1102 = verf.f32.pop %v802
    %v1103 = verf.f32.pop %v803
    %v1104 = verf.f32.pop %v804
    %v1105 = verf.f32.pop %v805
    %v1106 = verf.f32.pop %v806
    %v1107 = verf.f32.pop %v807
    %v1108 = verf.f32.pop %v808
    %v1109 = verf.f32.pop %v809
    %v1110 = verf.f32.pop %v810
    %v1111 = verf.f32.pop %v811
    %v1112 = verf.f32.pop %v812
    %v1113 = verf.f32.pop %v813
    %v1114 = verf.f32.pop %v814
    %v1115 = verf.f32.pop %v815
    %v1116 = verf.f32.pop %v816
    %v1117 = verf.f32.pop %v817
    %v1118 = verf.f32.pop %v818
    %v1119 = verf.f32.pop %v819
    %v1120 = verf.f32.pop %v820
    %v1121 = verf.f32.pop %v821
    %v1122 = verf.f32.pop %v822
    %v1123 = verf.f32.pop %v823
    %v1124 = verf.f32.pop %v824
    %v1125 = verf.f32.pop %v825
    %v1126 = verf.f32.pop %v826
    %v1127 = verf.f32.pop %v827
    %v1128 = verf.f32.pop %v828
    %v1129 = verf.f32.pop %v829
    %v1130 = verf.f32.pop %v830
    %v1131 = verf.f32.pop %v831
    %v1132 = verf.f32.pop %v832
    %v1133 = verf.f32.pop %v833
    %v1134 = verf.f32.pop %v834
    %v1135 = verf.f32.pop %v835
    %v1136 = verf.f32.pop %v836
    %v1137 = verf.f32.pop %v837
    %v1138 = verf.f32.pop %v838
    %v1139 = verf.f32.pop %v839
    %v1140 = verf.f32.pop %v840
    %v1141 = verf.f32.pop %v841
    %v1142 = verf.f32.pop %v842
    %v1143 = verf.f32.pop %v843
    %v1144 = verf.f32.pop %v844
    %v1145 = verf.f32.pop %v845
    %v1146 = verf.f32.pop %v846
    %v1147 = verf.f32.pop %v847
    %v1148 = verf.f32.pop %v848
    %v1149 = verf.f32.pop %v849
    %v1150 = verf.f32.pop %v850
    %v1151 = verf.f32.pop %v851
    %v1152 = verf.f32.pop %v852
    %v1153 = verf.f32.pop %v853
    %v1154 = verf.f32.pop %v854
    %v1155 = verf.f32.pop %v855
    %v1156 = verf.f32.pop %v856
    %v1157 = verf.f32.pop %v857
    %v1158 = verf.f32.pop %v858
    %v1159 = verf.f32.pop %v859
    %v1160 = verf.f32.pop %v860
    %v1161 = verf.f32.pop %v861
    %v1162 = verf.f32.pop %v862
    %v1163 = verf.f32.pop %v863
    %v1164 = verf.f32.pop %v864
    %v1165 = verf.f32.pop %v865
    %v1166 = verf.f32.pop %v866
    %v1167 = verf.f32.pop %v867
    %v1168 = verf.f32.pop %v868
    %v1169 = verf.f32.pop %v869
    %v1170 = verf.f32.pop %v870
    %v1171 = verf.f32.pop %v871
    %v1172 = verf.f32.pop %v872
    %v1173 = verf.f32.pop %v873
    %v1174 = verf.f32.pop %v874
    %v1175 = verf.f32.pop %v875
    %v1176 = verf.f32.pop %v876
    %v1177 = verf.f32.pop %v877
    %v1178 = verf.f32.pop %v878
    %v1179 = verf.f32.pop %v879
    %v1180 = verf.f32.pop %v880
    %v1181 = verf.f32.pop %v881
    %v1182 = verf.f32.pop %v882
    %v1183 = verf.f32.pop %v883
    %v1184 = verf.f32.pop %v884
    %v1185 = verf.f32.pop %v885
    %v1186 = verf.f32.pop %v886
    %v1187 = verf.f32.pop %v887
    %v1188 = verf.f32.pop %v888
    %v1189 = verf.f32.pop %v889
    %v1190 = verf.f32.pop %v890
    %v1191 = verf.f32.pop %v891
    %v1192 = verf.f32.pop %v892
    %v1193 = verf.f32.pop %v893
    %v1194 = verf.f32.pop %v894
    %v1195 = verf.f32.pop %v895
    %v1196 = verf.f32.pop %v896
    %v1197 = verf.f32.pop %v897
    %v1198 = verf.f32.pop %v898
    %v1199 = verf.f32.pop %v899
    %v1200 = verf.f32.pop %v900
    %v1201 = verf.f32.pop %v901
    %v1202 = verf.f32.pop %v902
    %v1203 = verf.f32.pop %v903
    %v1204 = verf.f32.pop %v904
    %v1205 = verf.f32.pop %v905
    %v1206 = verf.f32.pop %v906
    %v1207 = verf.f32.pop %v907
    %v1208 = verf.f32.pop %v908
    %v1209 = verf.f32.pop %v909
    %v1210 = verf.f32.pop %v910
    %v1211 = verf.f32.pop %v911
    %v1212 = verf.f32.pop %v912
    %v1213 = verf.f32.pop %v913
    %v1214 = verf.f32.pop %v914
    %v1215 = verf.f32.pop %v915
    %v1216 = verf.f32.pop %v916
    %v1217 = verf.f32.pop %v917
    %v1218 = verf.f32.pop %v918
    %v1219 = verf.f32.pop %v919
    %v1220 = verf.f32.pop %v920
    %v1221 = verf.f32.pop %v921
    %v1222 = verf.f32.pop %v922
    %v1223 = verf.f32.pop %v923
    %v1224 = verf.f32.pop %v924
    %v1225 = verf.f32.pop %v925
    %v1226 = verf.f32.pop %v926
    %v1227 = verf.f32.pop %v927
    %v1228 = verf.f32.pop %v928
    %v1229 = verf.f32.pop %v929
    %v1230 = verf.f32.pop %v930
    %v1231 = verf.f32.pop %v931
    %v1232 = verf.f32.pop %v932
    %v1233 = verf.f32.pop %v933
    %v1234 = verf.f32.pop %v934
    %v1235 = verf.f32.pop %v935
    %v1236 = verf.f32.pop %v936
    %v1237 = verf.f32.pop %v937
    %v1238 = verf.f32.pop %v938
    %v1239 = verf.f32.pop %v939
    %v1240 = verf.f32.pop %v940
    %v1241 = verf.f32.pop %v941
    %v1242 = verf.f32.pop %v942
    %v1243 = verf.f32.pop %v943
    %v1244 = verf.f32.pop %v944
    %v1245 = verf.f32.pop %v945
    %v1246 = verf.f32.pop %v946
    %v1247 = verf.f32.pop %v947
    %v1248 = verf.f32.pop %v948
    %v1249 = verf.f32.pop %v949
    %v1250 = verf.f32.pop %v950
    %v1251 = verf.f32.pop %v951
    %v1252 = verf.f32.pop %v952
    %v1253 = verf.f32.pop %v953
    %v1254 = vadd.f32 %v954, 1.0
    %v1255 = vadd.f32 %v955, 1.0
    %v1256 = vadd.f32 %v956, 1.0
    %v1257 = vadd.f32 %v957, 1.0
    %v1258 = vadd.f32 %v958, 1.0
    %v1259 = vadd.f32 %v959, 1.0
    %v1260 = vadd.f32 %v960, 1.0
    %v1261 = vadd.f32 %v961, 1.0
    %v1262 = vadd.f32 %v962, 1.0
    %v1263 = vadd.f32 %v963, 1.0
    %v1264 = vadd.f32 %v964, 1.0
    %v1265 = vadd.f32 %v965, 1.0
    %v1266 = vadd.f32 %v966, 1.0
    %v1267 = vadd.f32 %v967, 1.0
    %v1268 = vadd.f32 %v968, 1.0
    %v1269 = vadd.f32 %v969, 1.0
    %v1270 = vadd.f32 %v970, 1.0
    %v1271 = vadd.f32 %v971, 1.0
    %v1272 = vadd.f32 %v972, 1.0
    %v1273 = vadd.f32 %v973, 1.0
    %v1274 = vadd.f32 %v974, 1.0
    %v1275 = vadd.f32 %v975, 1.0
    %v1276 = vadd.f32 %v976, 1.0
    %v1277 = vadd.f32 %v977, 1.0
    %v1278 = vadd.f32 %v978, 1.0
    %v1279 = vadd.f32 %v979, 1.0
    %v1280 = vadd.f32 %v980, 1.0
    %v1281 = vadd.f32 %v981, 1.0
    %v1282 = vadd.f32 %v982, 1.0
    %v1283 = vadd.f32 %v983, 1.0
    %v1284 = vadd.f32 %v984, 1.0
    %v1285 = vadd.f32 %v985, 1.0
    %v1286 = vadd.f32 %v986, 1.0
    %v1287 = vadd.f32 %v987, 1.0
    %v1288 = vadd.f32 %v988, 1.0
    %v1289 = vadd.f32 %v989, 1.0
    %v1290 = vadd.f32 %v990, 1.0
    %v1291 = vadd.f32 %v991, 1.0
    %v1292 = vadd.f32 %v992, 1.0
    %v1293 = vadd.f32 %v993, 1.0
    %v1294 = vadd.f32 %v994, 1.0
    %v1295 = vadd.f32 %v995, 1.0
    %v1296 = vadd.f32 %v996, 1.0
    %v1297 = vadd.f32 %v997, 1.0
    %v1298 = vadd.f32 %v998, 1.0
    %v1299 = vadd.f32 %v999, 1.0
    %v1300 = vadd.f32 %v1000, 1.0
    %v1301 = vadd.f32 %v1001, 1.0
    %v1302 = vadd.f32 %v1002, 1.0
    %v1303 = vadd.f32 %v1003, 1.0
    %v1304 = vadd.f32 %v1004, 1.0
    %v1305 = vadd.f32 %v1005, 1.0
    %v1306 = vadd.f32 %v1006, 1.0
    %v1307 = vadd.f32 %v1007, 1.0
    %v1308 = vadd.f32 %v1008, 1.0
    %v1309 = vadd.f32 %v1009, 1.0
    %v1310 = vadd.f32 %v1010, 1.0
    %v1311 = vadd.f32 %v1011, 1.0
    %v1312 = vadd.f32 %v1012, 1.0
    %v1313 = vadd.f32 %v1013, 1.0
    %v1314 = vadd.f32 %v1014, 1.0
    %v1315 = vadd.f32 %v1015, 1.0
    %v1316 = vadd.f32 %v1016, 1.0
    %v1317 = vadd.f32 %v1017, 1.0
    %v1318 = vadd.f32 %v1018, 1.0
    %v1319 = vadd.f32 %v1019, 1.0
    %v1320 = vadd.f32 %v1020, 1.0
    %v1321 = vadd.f32 %v1021, 1.0
    %v1322 = vadd.f32 %v1022, 1.0
    %v1323 = vadd.f32 %v1023, 1.0
    %v1324 = vadd.f32 %v1024, 1.0
    %v1325 = vadd.f32 %v1025, 1.0
    %v1326 = vadd.f32 %v1026, 1.0
    %v1327 = vadd.f32 %v1027, 1.0
    %v1328 = vadd.f32 %v1028, 1.0
    %v1329 = vadd.f32 %v1029, 1.0
    %v1330 = vadd.f32 %v1030, 1.0
    %v1331 = vadd.f32 %v1031, 1.0
    %v1332 = vadd.f32 %v1032, 1.0
    %v1333 = vadd.f32 %v1033, 1.0
    %v1334 = vadd.f32 %v1034, 1.0
    %v1335 = vadd.f32 %v1035, 1.0
    %v1336 = vadd.f32 %v1036, 1.0
    %v1337 = vadd.f32 %v1037, 1.0
    %v1338 = vadd.f32 %v1038, 1.0
    %v1339 = vadd.f32 %v1039, 1.0
    %v1340 = vadd.f32 %v1040, 1.0
    %v1341 = vadd.f32 %v1041, 1.0
    %v1342 = vadd.f32 %v1042, 1.0
    %v1343 = vadd.f32 %v1043, 1.0
    %v1344 = vadd.f32 %v1044, 1.0
    %v1345 = vadd.f32 %v1045, 1.0
    %v1346 = vadd.f32 %v1046, 1.0
    %v1347 = vadd.f32 %v1047, 1.0
    %v1348 = vadd.f32 %v1048, 1.0
    %v1349 = vadd.f32 %v1049, 1.0
    %v1350 = vadd.f32 %v1050, 1.0
    %v1351 = vadd.f32 %v1051, 1.0
    %v1352 = vadd.f32 %v1052, 1.0
    %v1353 = vadd.f32 %v1053, 1.0
    %v1354 = vadd.f32 %v1054, 1.0
    %v1355 = vadd.f32 %v1055, 1.0
    %v1356 = vadd.f32 %v1056, 1.0
    %v1357 = vadd.f32 %v1057, 1.0
    %v1358 = vadd.f32 %v1058, 1.0
    %v1359 = vadd.f32 %v1059, 1.0
    %v1360 = vadd.f32 %v1060, 1.0
    %v1361 = vadd.f32 %v1061, 1.0
    %v1362 = vadd.f32 %v1062, 1.0
    %v1363 = vadd.f32 %v1063, 1.0
    %v1364 = vadd.f32 %v1064, 1.0
    %v1365 = vadd.f32 %v1065, 1.0
    %v1366 = vadd.f32 %v1066, 1.0
    %v1367 = vadd.f32 %v1067, 1.0
    %v1368 = vadd.f32 %v1068, 1.0
    %v1369 = vadd.f32 %v1069, 1.0
    %v1370 = vadd.f32 %v1070, 1.0
    %v1371 = vadd.f32 %v1071, 1.0
    %v1372 = vadd.f32 %v1072, 1.0
    %v1373 = vadd.f32 %v1073, 1.0
    %v1374 = vadd.f32 %v1074, 1.0
    %v1375 = vadd.f32 %v1075, 1.0
    %v1376 = vadd.f32 %v1076, 1.0
    %v1377 = vadd.f32 %v1077, 1.0
    %v1378 = vadd.f32 %v1078, 1.0
    %v1379 = vadd.f32 %v1079, 1.0
    %v1380 = vadd.f32 %v1080, 1.0
    %v1381 = vadd.f32 %v1081, 1.0
    %v1382 = vadd.f32 %v1082, 1.0
    %v1383 = vadd.f32 %v1083, 1.0
    %v1384 = vadd.f32 %v1084, 1.0
    %v1385 = vadd.f32 %v1085, 1.0
    %v1386 = vadd.f32 %v1086, 1.0
    %v1387 = vadd.f32 %v1087, 1.0
    %v1388 = vadd.f32 %v1088, 1.0
    %v1389 = vadd.f32 %v1089, 1.0
    %v1390 = vadd.f32 %v1090, 1.0
    %v1391 = vadd.f32 %v1091, 1.0
    %v1392 = vadd.f32 %v1092, 1.0
    %v1393 = vadd.f32 %v1093, 1.0
    %v1394 = vadd.f32 %v1094, 1.0
    %v1395 = vadd.f32 %v1095, 1.0
    %v1396 = vadd.f32 %v1096, 1.0
    %v1397 = vadd.f32 %v1097, 1.0
    %v1398 = vadd.f32 %v1098, 1.0
    %v1399 = vadd.f32 %v1099, 1.0
    %v1400 = vadd.f32 %v1100, 1.0
    %v1401 = vadd.f32 %v1101, 1.0
    %v1402 = vadd.f32 %v1102, 1.0
    %v1403 = vadd.f32 %v1103, 1.0
    %v1404 = vadd.f32 %v1104, 1.0
    %v1405 = vadd.f32 %v1105, 1.0
    %v1406 = vadd.f32 %v1106, 1.0
    %v1407 = vadd.f32 %v1107, 1.0
    %v1408 = vadd.f32 %v1108, 1.0
    %v1409 = vadd.f32 %v1109, 1.0
    %v1410 = vadd.f32 %v1110, 1.0
    %v1411 = vadd.f32 %v1111, 1.0
    %v1412 = vadd.f32 %v1112, 1.0
    %v1413 = vadd.f32 %v1113, 1.0
    %v1414 = vadd.f32 %v1114, 1.0
    %v1415 = vadd.f32 %v1115, 1.0
    %v1416 = vadd.f32 %v1116, 1.0
    %v1417 = vadd.f32 %v1117, 1.0
    %v1418 = vadd.f32 %v1118, 1.0
    %v1419 = vadd.f32 %v1119, 1.0
    %v1420 = vadd.f32 %v1120, 1.0
    %v1421 = vadd.f32 %v1121, 1.0
    %v1422 = vadd.f32 %v1122, 1.0
    %v1423 = vadd.f32 %v1123, 1.0
    %v1424 = vadd.f32 %v1124, 1.0
    %v1425 = vadd.f32 %v1125, 1.0
    %v1426 = vadd.f32 %v1126, 1.0
    %v1427 = vadd.f32 %v1127, 1.0
    %v1428 = vadd.f32 %v1128, 1.0
    %v1429 = vadd.f32 %v1129, 1.0
    %v1430 = vadd.f32 %v1130, 1.0
    %v1431 = vadd.f32 %v1131, 1.0
    %v1432 = vadd.f32 %v1132, 1.0
    %v1433 = vadd.f32 %v1133, 1.0
    %v1434 = vadd.f32 %v1134, 1.0
    %v1435 = vadd.f32 %v1135, 1.0
    %v1436 = vadd.f32 %v1136, 1.0
    %v1437 = vadd.f32 %v1137, 1.0
    %v1438 = vadd.f32 %v1138, 1.0
    %v1439 = vadd.f32 %v1139, 1.0
    %v1440 = vadd.f32 %v1140, 1.0
    %v1441 = vadd.f32 %v1141, 1.0
    %v1442 = vadd.f32 %v1142, 1.0
    %v1443 = vadd.f32 %v1143, 1.0
    %v1444 = vadd.f32 %v1144, 1.0
    %v1445 = vadd.f32 %v1145, 1.0
    %v1446 = vadd.f32 %v1146, 1.0
    %v1447 = vadd.f32 %v1147, 1.0
    %v1448 = vadd.f32 %v1148, 1.0
    %v1449 = vadd.f32 %v1149, 1.0
    %v1450 = vadd.f32 %v1150, 1.0
    %v1451 = vadd.f32 %v1151, 1.0
    %v1452 = vadd.f32 %v1152, 1.0
    %v1453 = vadd.f32 %v1153, 1.0
    %v1454 = vadd.f32 %v1154, 1.0
    %v1455 = vadd.f32 %v1155, 1.0
    %v1456 = vadd.f32 %v1156, 1.0
    %v1457 = vadd.f32 %v1157, 1.0
    %v1458 = vadd.f32 %v1158, 1.0
    %v1459 = vadd.f32 %v1159, 1.0
    %v1460 = vadd.f32 %v1160, 1.0
    %v1461 = vadd.f32 %v1161, 1.0
    %v1462 = vadd.f32 %v1162, 1.0
    %v1463 = vadd.f32 %v1163, 1.0
    %v1464 = vadd.f32 %v1164, 1.0
    %v1465 = vadd.f32 %v1165, 1.0
    %v1466 = vadd.f32 %v1166, 1.0
    %v1467 = vadd.f32 %v1167, 1.0
    %v1468 = vadd.f32 %v1168, 1.0
    %v1469 = vadd.f32 %v1169, 1.0
    %v1470 = vadd.f32 %v1170, 1.0
    %v1471 = vadd.f32 %v1171, 1.0
    %v1472 = vadd.f32 %v1172, 1.0
    %v1473 = vadd.f32 %v1173, 1.0
    %v1474 = vadd.f32 %v1174, 1.0
    %v1475 = vadd.f32 %v1175, 1.0
    %v1476 = vadd.f32 %v1176, 1.0
    %v1477 = vadd.f32 %v1177, 1.0
    %v1478 = vadd.f32 %v1178, 1.0
    %v1479 = vadd.f32 %v1179, 1.0
    %v1480 = vadd.f32 %v1180, 1.0
    %v1481 = vadd.f32 %v1181, 1.0
    %v1482 = vadd.f32 %v1182, 1.0
    %v1483 = vadd.f32 %v1183, 1.0
    %v1484 = vadd.f32 %v1184, 1.0
    %v1485 = vadd.f32 %v1185, 1.0
    %v1486 = vadd.f32 %v1186, 1.0
    %v1487 = vadd.f32 %v1187, 1.0
    %v1488 = vadd.f32 %v1188, 1.0
    %v1489 = vadd.f32 %v1189, 1.0
    %v1490 = vadd.f32 %v1190, 1.0
    %v1491 = vadd.f32 %v1191, 1.0
    %v1492 = vadd.f32 %v1192, 1.0
    %v1493 = vadd.f32 %v1193, 1.0
    %v1494 = vadd.f32 %v1194, 1.0
    %v1495 = vadd.f32 %v1195, 1.0
    %v1496 = vadd.f32 %v1196, 1.0
    %v1497 = vadd.f32 %v1197, 1.0
    %v1498 = vadd.f32 %v1198, 1.0
    %v1499 = vadd.f32 %v1199, 1.0
    %v1500 = vadd.f32 %v1200, 1.0
    %v1501 = vadd.f32 %v1201, 1.0
    %v1502 = vadd.f32 %v1202, 1.0
    %v1503 = vadd.f32 %v1203, 1.0
    %v1504 = vadd.f32 %v1204, 1.0
    %v1505 = vadd.f32 %v1205, 1.0
    %v1506 = vadd.f32 %v1206, 1.0
    %v1507 = vadd.f32 %v1207, 1.0
    %v1508 = vadd.f32 %v1208, 1.0
    %v1509 = vadd.f32 %v1209, 1.0
    %v1510 = vadd.f32 %v1210, 1.0
    %v1511 = vadd.f32 %v1211, 1.0
    %v1512 = vadd.f32 %v1212, 1.0
    %v1513 = vadd.f32 %v1213, 1.0
    %v1514 = vadd.f32 %v1214, 1.0
    %v1515 = vadd.f32 %v1215, 1.0
    %v1516 = vadd.f32 %v1216, 1.0
    %v1517 = vadd.f32 %v1217, 1.0
    %v1518 = vadd.f32 %v1218, 1.0
    %v1519 = vadd.f32 %v1219, 1.0
    %v1520 = vadd.f32 %v1220, 1.0
    %v1521 = vadd.f32 %v1221, 1.0
    %v1522 = vadd.f32 %v1222, 1.0
    %v1523 = vadd.f32 %v1223, 1.0
    %v1524 = vadd.f32 %v1224, 1.0
    %v1525 = vadd.f32 %v1225, 1.0
    %v1526 = vadd.f32 %v1226, 1.0
    %v1527 = vadd.f32 %v1227, 1.0
    %v1528 = vadd.f32 %v1228, 1.0
    %v1529 = vadd.f32 %v1229, 1.0
    %v1530 = vadd.f32 %v1230, 1.0
    %v1531 = vadd.f32 %v1231, 1.0
    %v1532 = vadd.f32 %v1232, 1.0
    %v1533 = vadd.f32 %v1233, 1.0
    %v1534 = vadd.f32 %v1234, 1.0
    %v1535 = vadd.f32 %v1235, 1.0
    %v1536 = vadd.f32 %v1236, 1.0
    %v1537 = vadd.f32 %v1237, 1.0
    %v1538 = vadd.f32 %v1238, 1.0
    %v1539 = vadd.f32 %v1239, 1.0
    %v1540 = vadd.f32 %v1240, 1.0
    %v1541 = vadd.f32 %v1241, 1.0
    %v1542 = vadd.f32 %v1242, 1.0
    %v1543 = vadd.f32 %v1243, 1.0
    %v1544 = vadd.f32 %v1244, 1.0
    %v1545 = vadd.f32 %v1245, 1.0
    %v1546 = vadd.f32 %v1246, 1.0
    %v1547 = vadd.f32 %v1247, 1.0
    %v1548 = vadd.f32 %v1248, 1.0
    %v1549 = vadd.f32 %v1249, 1.0
    %v1550 = vadd.f32 %v1250, 1.0
    %v1551 = vadd.f32 %v1251, 1.0
    %v1552 = vadd.f32 %v1252, 1.0
    %v1553 = vadd.f32 %v1253, 1.0
    %v1554 = vmul.f32 %v354, %v1254
    %v1555 = vmul.f32 %v355, %v1255
    %v1556 = vmul.f32 %v356, %v1256
    %v1557 = vmul.f32 %v357, %v1257
    %v1558 = vmul.f32 %v358, %v1258
    %v1559 = vmul.f32 %v359, %v1259
    %v1560 = vmul.f32 %v360, %v1260
    %v1561 = vmul.f32 %v361, %v1261
    %v1562 = vmul.f32 %v362, %v1262
    %v1563 = vmul.f32 %v363, %v1263
    %v1564 = vmul.f32 %v364, %v1264
    %v1565 = vmul.f32 %v365, %v1265
    %v1566 = vmul.f32 %v366, %v1266
    %v1567 = vmul.f32 %v367, %v1267
    %v1568 = vmul.f32 %v368, %v1268
    %v1569 = vmul.f32 %v369, %v1269
    %v1570 = vmul.f32 %v370, %v1270
    %v1571 = vmul.f32 %v371, %v1271
    %v1572 = vmul.f32 %v372, %v1272
    %v1573 = vmul.f32 %v373, %v1273
    %v1574 = vmul.f32 %v374, %v1274
    %v1575 = vmul.f32 %v375, %v1275
    %v1576 = vmul.f32 %v376, %v1276
    %v1577 = vmul.f32 %v377, %v1277
    %v1578 = vmul.f32 %v378, %v1278
    %v1579 = vmul.f32 %v379, %v1279
    %v1580 = vmul.f32 %v380, %v1280
    %v1581 = vmul.f32 %v381, %v1281
    %v1582 = vmul.f32 %v382, %v1282
    %v1583 = vmul.f32 %v383, %v1283
    %v1584 = vmul.f32 %v384, %v1284
    %v1585 = vmul.f32 %v385, %v1285
    %v1586 = vmul.f32 %v386, %v1286
    %v1587 = vmul.f32 %v387, %v1287
    %v1588 = vmul.f32 %v388, %v1288
    %v1589 = vmul.f32 %v389, %v1289
    %v1590 = vmul.f32 %v390, %v1290
    %v1591 = vmul.f32 %v391, %v1291
    %v1592 = vmul.f32 %v392, %v1292
    %v1593 = vmul.f32 %v393, %v1293
    %v1594 = vmul.f32 %v394, %v1294
    %v1595 = vmul.f32 %v395, %v1295
    %v1596 = vmul.f32 %v396, %v1296
    %v1597 = vmul.f32 %v397, %v1297
    %v1598 = vmul.f32 %v398, %v1298
    %v1599 = vmul.f32 %v399, %v1299
    %v1600 = vmul.f32 %v400, %v1300
    %v1601 = vmul.f32 %v401, %v1301
    %v1602 = vmul.f32 %v402, %v1302
    %v1603 = vmul.f32 %v403, %v1303
    %v1604 = vmul.f32 %v404, %v1304
    %v1605 = vmul.f32 %v405, %v1305
    %v1606 = vmul.f32 %v406, %v1306
    %v1607 = vmul.f32 %v407, %v1307
    %v1608 = vmul.f32 %v408, %v1308
    %v1609 = vmul.f32 %v409, %v1309
    %v1610 = vmul.f32 %v410, %v1310
    %v1611 = vmul.f32 %v411, %v1311
    %v1612 = vmul.f32 %v412, %v1312
    %v1613 = vmul.f32 %v413, %v1313
    %v1614 = vmul.f32 %v414, %v1314
    %v1615 = vmul.f32 %v415, %v1315
    %v1616 = vmul.f32 %v416, %v1316
    %v1617 = vmul.f32 %v417, %v1317
    %v1618 = vmul.f32 %v418, %v1318
    %v1619 = vmul.f32 %v419, %v1319
    %v1620 = vmul.f32 %v420, %v1320
    %v1621 = vmul.f32 %v421, %v1321
    %v1622 = vmul.f32 %v422, %v1322
    %v1623 = vmul.f32 %v423, %v1323
    %v1624 = vmul.f32 %v424, %v1324
    %v1625 = vmul.f32 %v425, %v1325
    %v1626 = vmul.f32 %v426, %v1326
    %v1627 = vmul.f32 %v427, %v1327
    %v1628 = vmul.f32 %v428, %v1328
    %v1629 = vmul.f32 %v429, %v1329
    %v1630 = vmul.f32 %v430, %v1330
    %v1631 = vmul.f32 %v431, %v1331
    %v1632 = vmul.f32 %v432, %v1332
    %v1633 = vmul.f32 %v433, %v1333
    %v1634 = vmul.f32 %v434, %v1334
    %v1635 = vmul.f32 %v435, %v1335
    %v1636 = vmul.f32 %v436, %v1336
    %v1637 = vmul.f32 %v437, %v1337
    %v1638 = vmul.f32 %v438, %v1338
    %v1639 = vmul.f32 %v439, %v1339
    %v1640 = vmul.f32 %v440, %v1340
    %v1641 = vmul.f32 %v441, %v1341
    %v1642 = vmul.f32 %v442, %v1342
    %v1643 = vmul.f32 %v443, %v1343
    %v1644 = vmul.f32 %v444, %v1344
    %v1645 = vmul.f32 %v445, %v1345
    %v1646 = vmul.f32 %v446, %v1346
    %v1647 = vmul.f32 %v447, %v1347
    %v1648 = vmul.f32 %v448, %v1348
    %v1649 = vmul.f32 %v449, %v1349
    %v1650 = vmul.f32 %v450, %v1350
    %v1651 = vmul.f32 %v451, %v1351
    %v1652 = vmul.f32 %v452, %v1352
    %v1653 = vmul.f32 %v453, %v1353
    %v1654 = vmul.f32 %v454, %v1354
    %v1655 = vmul.f32 %v455, %v1355
    %v1656 = vmul.f32 %v456, %v1356
    %v1657 = vmul.f32 %v457, %v1357
    %v1658 = vmul.f32 %v458, %v1358
    %v1659 = vmul.f32 %v459, %v1359
    %v1660 = vmul.f32 %v460, %v1360
    %v1661 = vmul.f32 %v461, %v1361
    %v1662 = vmul.f32 %v462, %v1362
    %v1663 = vmul.f32 %v463, %v1363
    %v1664 = vmul.f32 %v464, %v1364
    %v1665 = vmul.f32 %v465, %v1365
    %v1666 = vmul.f32 %v466, %v1366
    %v1667 = vmul.f32 %v467, %v1367
    %v1668 = vmul.f32 %v468, %v1368
    %v1669 = vmul.f32 %v469, %v1369
    %v1670 = vmul.f32 %v470, %v1370
    %v1671 = vmul.f32 %v471, %v1371
    %v1672 = vmul.f32 %v472, %v1372
    %v1673 = vmul.f32 %v473, %v1373
    %v1674 = vmul.f32 %v474, %v1374
    %v1675 = vmul.f32 %v475, %v1375
    %v1676 = vmul.f32 %v476, %v1376
    %v1677 = vmul.f32 %v477, %v1377
    %v1678 = vmul.f32 %v478, %v1378
    %v1679 = vmul.f32 %v479, %v1379
    %v1680 = vmul.f32 %v480, %v1380
    %v1681 = vmul.f32 %v481, %v1381
    %v1682 = vmul.f32 %v482, %v1382
    %v1683 = vmul.f32 %v483, %v1383
    %v1684 = vmul.f32 %v484, %v1384
    %v1685 = vmul.f32 %v485, %v1385
    %v1686 = vmul.f32 %v486, %v1386
    %v1687 = vmul.f32 %v487, %v1387
    %v1688 = vmul.f32 %v488, %v1388
    %v1689 = vmul.f32 %v489, %v1389
    %v1690 = vmul.f32 %v490, %v1390
    %v1691 = vmul.f32 %v491, %v1391
    %v1692 = vmul.f32 %v492, %v1392
    %v1693 = vmul.f32 %v493, %v1393
    %v1694 = vmul.f32 %v494, %v1394
    %v1695 = vmul.f32 %v495, %v1395
    %v1696 = vmul.f32 %v496, %v1396
    %v1697 = vmul.f32 %v497, %v1397
    %v1698 = vmul.f32 %v498, %v1398
    %v1699 = vmul.f32 %v499, %v1399
    %v1700 = vmul.f32 %v500, %v1400
    %v1701 = vmul.f32 %v501, %v1401
    %v1702 = vmul.f32 %v502, %v1402
    %v1703 = vmul.f32 %v503, %v1403
    %v1704 = vmul.f32 %v504, %v1404
    %v1705 = vmul.f32 %v505, %v1405
    %v1706 = vmul.f32 %v506, %v1406
    %v1707 = vmul.f32 %v507, %v1407
    %v1708 = vmul.f32 %v508, %v1408
    %v1709 = vmul.f32 %v509, %v1409
    %v1710 = vmul.f32 %v510, %v1410
    %v1711 = vmul.f32 %v511, %v1411
    %v1712 = vmul.f32 %v512, %v1412
    %v1713 = vmul.f32 %v513, %v1413
    %v1714 = vmul.f32 %v514, %v1414
    %v1715 = vmul.f32 %v515, %v1415
    %v1716 = vmul.f32 %v516, %v1416
    %v1717 = vmul.f32 %v517, %v1417
    %v1718 = vmul.f32 %v518, %v1418
    %v1719 = vmul.f32 %v519, %v1419
    %v1720 = vmul.f32 %v520, %v1420
    %v1721 = vmul.f32 %v521, %v1421
    %v1722 = vmul.f32 %v522, %v1422
    %v1723 = vmul.f32 %v523, %v1423
    %v1724 = vmul.f32 %v524, %v1424
    %v1725 = vmul.f32 %v525, %v1425
    %v1726 = vmul.f32 %v526, %v1426
    %v1727 = vmul.f32 %v527, %v1427
    %v1728 = vmul.f32 %v528, %v1428
    %v1729 = vmul.f32 %v529, %v1429
    %v1730 = vmul.f32 %v530, %v1430
    %v1731 = vmul.f32 %v531, %v1431
    %v1732 = vmul.f32 %v532, %v1432
    %v1733 = vmul.f32 %v533, %v1433
    %v1734 = vmul.f32 %v534, %v1434
    %v1735 = vmul.f32 %v535, %v1435
    %v1736 = vmul.f32 %v536, %v1436
    %v1737 = vmul.f32 %v537, %v1437
    %v1738 = vmul.f32 %v538, %v1438
    %v1739 = vmul.f32 %v539, %v1439
    %v1740 = vmul.f32 %v540, %v1440
    %v1741 = vmul.f32 %v541, %v1441
    %v1742 = vmul.f32 %v542, %v1442
    %v1743 = vmul.f32 %v543, %v1443
    %v1744 = vmul.f32 %v544, %v1444
    %v1745 = vmul.f32 %v545, %v1445
    %v1746 = vmul.f32 %v546, %v1446
    %v1747 = vmul.f32 %v547, %v1447
    %v1748 = vmul.f32 %v548, %v1448
    %v1749 = vmul.f32 %v549, %v1449
    %v1750 = vmul.f32 %v550, %v1450
    %v1751 = vmul.f32 %v551, %v1451
    %v1752 = vmul.f32 %v552, %v1452
    %v1753 = vmul.f32 %v553, %v1453
    %v1754 = vmul.f32 %v554, %v1454
    %v1755 = vmul.f32 %v555, %v1455
    %v1756 = vmul.f32 %v556, %v1456
    %v1757 = vmul.f32 %v557, %v1457
    %v1758 = vmul.f32 %v558, %v1458
    %v1759 = vmul.f32 %v559, %v1459
    %v1760 = vmul.f32 %v560, %v1460
    %v1761 = vmul.f32 %v561, %v1461
    %v1762 = vmul.f32 %v562, %v1462
    %v1763 = vmul.f32 %v563, %v1463
    %v1764 = vmul.f32 %v564, %v1464
    %v1765 = vmul.f32 %v565, %v1465
    %v1766 = vmul.f32 %v566, %v1466
    %v1767 = vmul.f32 %v567, %v1467
    %v1768 = vmul.f32 %v568, %v1468
    %v1769 = vmul.f32 %v569, %v1469
    %v1770 = vmul.f32 %v570, %v1470
    %v1771 = vmul.f32 %v571, %v1471
    %v1772 = vmul.f32 %v572, %v1472
    %v1773 = vmul.f32 %v573, %v1473
    %v1774 = vmul.f32 %v574, %v1474
    %v1775 = vmul.f32 %v575, %v1475
    %v1776 = vmul.f32 %v576, %v1476
    %v1777 = vmul.f32 %v577, %v1477
    %v1778 = vmul.f32 %v578, %v1478
    %v1779 = vmul.f32 %v579, %v1479
    %v1780 = vmul.f32 %v580, %v1480
    %v1781 = vmul.f32 %v581, %v1481
    %v1782 = vmul.f32 %v582, %v1482
    %v1783 = vmul.f32 %v583, %v1483
    %v1784 = vmul.f32 %v584, %v1484
    %v1785 = vmul.f32 %v585, %v1485
    %v1786 = vmul.f32 %v586, %v1486
    %v1787 = vmul.f32 %v587, %v1487
    %v1788 = vmul.f32 %v588, %v1488
    %v1789 = vmul.f32 %v589, %v1489
    %v1790 = vmul.f32 %v590, %v1490
    %v1791 = vmul.f32 %v591, %v1491
    %v1792 = vmul.f32 %v592, %v1492
    %v1793 = vmul.f32 %v593, %v1493
    %v1794 = vmul.f32 %v594, %v1494
    %v1795 = vmul.f32 %v595, %v1495
    %v1796 = vmul.f32 %v596, %v1496
    %v1797 = vmul.f32 %v597, %v1497
    %v1798 = vmul.f32 %v598, %v1498
    %v1799 = vmul.f32 %v599, %v1499
    %v1800 = vmul.f32 %v600, %v1500
    %v1801 = vmul.f32 %v601, %v1501
    %v1802 = vmul.f32 %v602, %v1502
    %v1803 = vmul.f32 %v603, %v1503
    %v1804 = vmul.f32 %v604, %v1504
    %v1805 = vmul.f32 %v605, %v1505
    %v1806 = vmul.f32 %v606, %v1506
    %v1807 = vmul.f32 %v607, %v1507
    %v1808 = vmul.f32 %v608, %v1508
    %v1809 = vmul.f32 %v609, %v1509
    %v1810 = vmul.f32 %v610, %v1510
    %v1811 = vmul.f32 %v611, %v1511
    %v1812 = vmul.f32 %v612, %v1512
    %v1813 = vmul.f32 %v613, %v1513
    %v1814 = vmul.f32 %v614, %v1514
    %v1815 = vmul.f32 %v615, %v1515
    %v1816 = vmul.f32 %v616, %v1516
    %v1817 = vmul.f32 %v617, %v1517
    %v1818 = vmul.f32 %v618, %v1518
    %v1819 = vmul.f32 %v619, %v1519
    %v1820 = vmul.f32 %v620, %v1520
    %v1821 = vmul.f32 %v621, %v1521
    %v1822 = vmul.f32 %v622, %v1522
    %v1823 = vmul.f32 %v623, %v1523
    %v1824 = vmul.f32 %v624, %v1524
    %v1825 = vmul.f32 %v625, %v1525
    %v1826 = vmul.f32 %v626, %v1526
    %v1827 = vmul.f32 %v627, %v1527
    %v1828 = vmul.f32 %v628, %v1528
    %v1829 = vmul.f32 %v629, %v1529
    %v1830 = vmul.f32 %v630, %v1530
    %v1831 = vmul.f32 %v631, %v1531
    %v1832 = vmul.f32 %v632, %v1532
    %v1833 = vmul.f32 %v633, %v1533
    %v1834 = vmul.f32 %v634, %v1534
    %v1835 = vmul.f32 %v635, %v1535
    %v1836 = vmul.f32 %v636, %v1536
    %v1837 = vmul.f32 %v637, %v1537
    %v1838 = vmul.f32 %v638, %v1538
    %v1839 = vmul.f32 %v639, %v1539
    %v1840 = vmul.f32 %v640, %v1540
    %v1841 = vmul.f32 %v641, %v1541
    %v1842 = vmul.f32 %v642, %v1542
    %v1843 = vmul.f32 %v643, %v1543
    %v1844 = vmul.f32 %v644, %v1544
    %v1845 = vmul.f32 %v645, %v1545
    %v1846 = vmul.f32 %v646, %v1546
    %v1847 = vmul.f32 %v647, %v1547
    %v1848 = vmul.f32 %v648, %v1548
    %v1849 = vmul.f32 %v649, %v1549
    %v1850 = vmul.f32 %v650, %v1550
    %v1851 = vmul.f32 %v651, %v1551
    %v1852 = vmul.f32 %v652, %v1552
    %v1853 = vmul.f32 %v653, %v1553
    %v1854 = vld [vmem:[#allocation5] sm:$0xff]
    %v1855 = vld [vmem:[#allocation5 + $0x8] sm:$0xff]
    %v1856 = vld [vmem:[#allocation5 + $0x10] sm:$0xff]
    %v1857 = vld [vmem:[#allocation5 + $0x18] sm:$0xff]
    %v1858 = vld [vmem:[#allocation5 + $0x20] sm:$0xff]
    %v1859 = vld [vmem:[#allocation5 + $0x28] sm:$0xff]
    %v1860 = vld [vmem:[#allocation5 + $0x30] sm:$0xff]
    %v1861 = vld [vmem:[#allocation5 + $0x38] sm:$0xff]
    %v1862 = vld [vmem:[#allocation5 + $0x40] sm:$0xff]
    %v1863 = vld [vmem:[#allocation5 + $0x48] sm:$0xff]
    %v1864 = vld [vmem:[#allocation5 + $0x50] sm:$0xff]
    %v1865 = vld [vmem:[#allocation5 + $0x58] sm:$0xff]
    %v1866 = vld [vmem:[#allocation5 + $0x60] sm:$0xff]
    %v1867 = vld [vmem:[#allocation5 + $0x68] sm:$0xff]
    %v1868 = vld [vmem:[#allocation5 + $0x70] sm:$0xff]
    %v1869 = vld [vmem:[#allocation5 + $0x78] sm:$0xff]
    %v1870 = vld [vmem:[#allocation5 + $0x80] sm:$0xff]
    %v1871 = vld [vmem:[#allocation5 + $0x88] sm:$0xff]
    %v1872 = vld [vmem:[#allocation5 + $0x90] sm:$0xff]
    %v1873 = vld [vmem:[#allocation5 + $0x98] sm:$0xff]
    %v1874 = vld [vmem:[#allocation5 + $0xa0] sm:$0xff]
    %v1875 = vld [vmem:[#allocation5 + $0xa8] sm:$0xff]
    %v1876 = vld [vmem:[#allocation5 + $0xb0] sm:$0xff]
    %v1877 = vld [vmem:[#allocation5 + $0xb8] sm:$0xff]
    %v1878 = vld [vmem:[#allocation5 + $0xc0] sm:$0xff]
    %v1879 = vld [vmem:[#allocation5 + $0xc8] sm:$0xff]
    %v1880 = vld [vmem:[#allocation5 + $0xd0] sm:$0xff]
    %v1881 = vld [vmem:[#allocation5 + $0xd8] sm:$0xff]
    %v1882 = vld [vmem:[#allocation5 + $0xe0] sm:$0xff]
    %v1883 = vld [vmem:[#allocation5 + $0xe8] sm:$0xff]
    %v1884 = vld [vmem:[#allocation5 + $0xf0] sm:$0xff]
    %v1885 = vld [vmem:[#allocation5 + $0xf8] sm:$0xff]
    %v1886 = vld [vmem:[#allocation5 + $0x100] sm:$0xff]
    %v1887 = vld [vmem:[#allocation5 + $0x108] sm:$0xff]
    %v1888 = vld [vmem:[#allocation5 + $0x110] sm:$0xff]
    %v1889 = vld [vmem:[#allocation5 + $0x118] sm:$0xff]
    %v1890 = vld [vmem:[#allocation5 + $0x120] sm:$0xff]
    %v1891 = vld [vmem:[#allocation5 + $0x128] sm:$0xff]
    %v1892 = vld [vmem:[#allocation5 + $0x130] sm:$0xff]
    %v1893 = vld [vmem:[#allocation5 + $0x138] sm:$0xff]
    %v1894 = vld [vmem:[#allocation5 + $0x140] sm:$0xff]
    %v1895 = vld [vmem:[#allocation5 + $0x148] sm:$0xff]
    %v1896 = vld [vmem:[#allocation5 + $0x150] sm:$0xff]
    %v1897 = vld [vmem:[#allocation5 + $0x158] sm:$0xff]
    %v1898 = vld [vmem:[#allocation5 + $0x160] sm:$0xff]
    %v1899 = vld [vmem:[#allocation5 + $0x168] sm:$0xff]
    %v1900 = vld [vmem:[#allocation5 + $0x170] sm:$0xff]
    %v1901 = vld [vmem:[#allocation5 + $0x178] sm:$0xff]
    %v1902 = vld [vmem:[#allocation5 + $0x180] sm:$0xff]
    %v1903 = vld [vmem:[#allocation5 + $0x188] sm:$0xff]
    %v1904 = vld [vmem:[#allocation5 + $0x190] sm:$0xff]
    %v1905 = vld [vmem:[#allocation5 + $0x198] sm:$0xff]
    %v1906 = vld [vmem:[#allocation5 + $0x1a0] sm:$0xff]
    %v1907 = vld [vmem:[#allocation5 + $0x1a8] sm:$0xff]
    %v1908 = vld [vmem:[#allocation5 + $0x1b0] sm:$0xff]
    %v1909 = vld [vmem:[#allocation5 + $0x1b8] sm:$0xff]
    %v1910 = vld [vmem:[#allocation5 + $0x1c0] sm:$0xff]
    %v1911 = vld [vmem:[#allocation5 + $0x1c8] sm:$0xff]
    %v1912 = vld [vmem:[#allocation5 + $0x1d0] sm:$0xff]
    %v1913 = vld [vmem:[#allocation5 + $0x1d8] sm:$0xff]
    %v1914 = vld [vmem:[#allocation5 + $0x1e0] sm:$0xff]
    %v1915 = vld [vmem:[#allocation5 + $0x1e8] sm:$0xff]
    %v1916 = vld [vmem:[#allocation5 + $0x1f0] sm:$0xff]
    %v1917 = vld [vmem:[#allocation5 + $0x1f8] sm:$0xff]
    %v1918 = vld [vmem:[#allocation5 + $0x200] sm:$0xff]
    %v1919 = vld [vmem:[#allocation5 + $0x208] sm:$0xff]
    %v1920 = vld [vmem:[#allocation5 + $0x210] sm:$0xff]
    %v1921 = vld [vmem:[#allocation5 + $0x218] sm:$0xff]
    %v1922 = vld [vmem:[#allocation5 + $0x220] sm:$0xff]
    %v1923 = vld [vmem:[#allocation5 + $0x228] sm:$0xff]
    %v1924 = vld [vmem:[#allocation5 + $0x230] sm:$0xff]
    %v1925 = vld [vmem:[#allocation5 + $0x238] sm:$0xff]
    %v1926 = vld [vmem:[#allocation5 + $0x240] sm:$0xff]
    %v1927 = vld [vmem:[#allocation5 + $0x248] sm:$0xff]
    %v1928 = vld [vmem:[#allocation5 + $0x250] sm:$0xff]
    %v1929 = vld [vmem:[#allocation5 + $0x258] sm:$0xff]
    %v1930 = vld [vmem:[#allocation5 + $0x260] sm:$0xff]
    %v1931 = vld [vmem:[#allocation5 + $0x268] sm:$0xff]
    %v1932 = vld [vmem:[#allocation5 + $0x270] sm:$0xff]
    %v1933 = vld [vmem:[#allocation5 + $0x278] sm:$0xff]
    %v1934 = vld [vmem:[#allocation5 + $0x280] sm:$0xff]
    %v1935 = vld [vmem:[#allocation5 + $0x288] sm:$0xff]
    %v1936 = vld [vmem:[#allocation5 + $0x290] sm:$0xff]
    %v1937 = vld [vmem:[#allocation5 + $0x298] sm:$0xff]
    %v1938 = vld [vmem:[#allocation5 + $0x2a0] sm:$0xff]
    %v1939 = vld [vmem:[#allocation5 + $0x2a8] sm:$0xff]
    %v1940 = vld [vmem:[#allocation5 + $0x2b0] sm:$0xff]
    %v1941 = vld [vmem:[#allocation5 + $0x2b8] sm:$0xff]
    %v1942 = vld [vmem:[#allocation5 + $0x2c0] sm:$0xff]
    %v1943 = vld [vmem:[#allocation5 + $0x2c8] sm:$0xff]
    %v1944 = vld [vmem:[#allocation5 + $0x2d0] sm:$0xff]
    %v1945 = vld [vmem:[#allocation5 + $0x2d8] sm:$0xff]
    %v1946 = vld [vmem:[#allocation5 + $0x2e0] sm:$0xff]
    %v1947 = vld [vmem:[#allocation5 + $0x2e8] sm:$0xff]
    %v1948 = vld [vmem:[#allocation5 + $0x2f0] sm:$0xff]
    %v1949 = vld [vmem:[#allocation5 + $0x2f8] sm:$0xff]
    %v1950 = vld [vmem:[#allocation5 + $0x300] sm:$0xff]
    %v1951 = vld [vmem:[#allocation5 + $0x308] sm:$0xff]
    %v1952 = vld [vmem:[#allocation5 + $0x310] sm:$0xff]
    %v1953 = vld [vmem:[#allocation5 + $0x318] sm:$0xff]
    %v1954 = vld [vmem:[#allocation5 + $0x320] sm:$0xff]
    %v1955 = vld [vmem:[#allocation5 + $0x328] sm:$0xff]
    %v1956 = vld [vmem:[#allocation5 + $0x330] sm:$0xff]
    %v1957 = vld [vmem:[#allocation5 + $0x338] sm:$0xff]
    %v1958 = vld [vmem:[#allocation5 + $0x340] sm:$0xff]
    %v1959 = vld [vmem:[#allocation5 + $0x348] sm:$0xff]
    %v1960 = vld [vmem:[#allocation5 + $0x350] sm:$0xff]
    %v1961 = vld [vmem:[#allocation5 + $0x358] sm:$0xff]
    %v1962 = vld [vmem:[#allocation5 + $0x360] sm:$0xff]
    %v1963 = vld [vmem:[#allocation5 + $0x368] sm:$0xff]
    %v1964 = vld [vmem:[#allocation5 + $0x370] sm:$0xff]
    %v1965 = vld [vmem:[#allocation5 + $0x378] sm:$0xff]
    %v1966 = vld [vmem:[#allocation5 + $0x380] sm:$0xff]
    %v1967 = vld [vmem:[#allocation5 + $0x388] sm:$0xff]
    %v1968 = vld [vmem:[#allocation5 + $0x390] sm:$0xff]
    %v1969 = vld [vmem:[#allocation5 + $0x398] sm:$0xff]
    %v1970 = vld [vmem:[#allocation5 + $0x3a0] sm:$0xff]
    %v1971 = vld [vmem:[#allocation5 + $0x3a8] sm:$0xff]
    %v1972 = vld [vmem:[#allocation5 + $0x3b0] sm:$0xff]
    %v1973 = vld [vmem:[#allocation5 + $0x3b8] sm:$0xff]
    %v1974 = vld [vmem:[#allocation5 + $0x3c0] sm:$0xff]
    %v1975 = vld [vmem:[#allocation5 + $0x3c8] sm:$0xff]
    %v1976 = vld [vmem:[#allocation5 + $0x3d0] sm:$0xff]
    %v1977 = vld [vmem:[#allocation5 + $0x3d8] sm:$0xff]
    %v1978 = vld [vmem:[#allocation5 + $0x3e0] sm:$0xff]
    %v1979 = vld [vmem:[#allocation5 + $0x3e8] sm:$0xff]
    %v1980 = vld [vmem:[#allocation5 + $0x3f0] sm:$0xff]
    %v1981 = vld [vmem:[#allocation5 + $0x3f8] sm:$0xff]
    %v1982 = vld [vmem:[#allocation5 + $0x400] sm:$0xff]
    %v1983 = vld [vmem:[#allocation5 + $0x408] sm:$0xff]
    %v1984 = vld [vmem:[#allocation5 + $0x410] sm:$0xff]
    %v1985 = vld [vmem:[#allocation5 + $0x418] sm:$0xff]
    %v1986 = vld [vmem:[#allocation5 + $0x420] sm:$0xff]
    %v1987 = vld [vmem:[#allocation5 + $0x428] sm:$0xff]
    %v1988 = vld [vmem:[#allocation5 + $0x430] sm:$0xff]
    %v1989 = vld [vmem:[#allocation5 + $0x438] sm:$0xff]
    %v1990 = vld [vmem:[#allocation5 + $0x440] sm:$0xff]
    %v1991 = vld [vmem:[#allocation5 + $0x448] sm:$0xff]
    %v1992 = vld [vmem:[#allocation5 + $0x450] sm:$0xff]
    %v1993 = vld [vmem:[#allocation5 + $0x458] sm:$0xff]
    %v1994 = vld [vmem:[#allocation5 + $0x460] sm:$0xff]
    %v1995 = vld [vmem:[#allocation5 + $0x468] sm:$0xff]
    %v1996 = vld [vmem:[#allocation5 + $0x470] sm:$0xff]
    %v1997 = vld [vmem:[#allocation5 + $0x478] sm:$0xff]
    %v1998 = vld [vmem:[#allocation5 + $0x480] sm:$0xff]
    %v1999 = vld [vmem:[#allocation5 + $0x488] sm:$0xff]
    %v2000 = vld [vmem:[#allocation5 + $0x490] sm:$0xff]
    %v2001 = vld [vmem:[#allocation5 + $0x498] sm:$0xff]
    %v2002 = vld [vmem:[#allocation5 + $0x4a0] sm:$0xff]
    %v2003 = vld [vmem:[#allocation5 + $0x4a8] sm:$0xff]
    %v2004 = vld [vmem:[#allocation5 + $0x4b0] sm:$0xff]
    %v2005 = vld [vmem:[#allocation5 + $0x4b8] sm:$0xff]
    %v2006 = vld [vmem:[#allocation5 + $0x4c0] sm:$0xff]
    %v2007 = vld [vmem:[#allocation5 + $0x4c8] sm:$0xff]
    %v2008 = vld [vmem:[#allocation5 + $0x4d0] sm:$0xff]
    %v2009 = vld [vmem:[#allocation5 + $0x4d8] sm:$0xff]
    %v2010 = vld [vmem:[#allocation5 + $0x4e0] sm:$0xff]
    %v2011 = vld [vmem:[#allocation5 + $0x4e8] sm:$0xff]
    %v2012 = vld [vmem:[#allocation5 + $0x4f0] sm:$0xff]
    %v2013 = vld [vmem:[#allocation5 + $0x4f8] sm:$0xff]
    %v2014 = vld [vmem:[#allocation5 + $0x500] sm:$0xff]
    %v2015 = vld [vmem:[#allocation5 + $0x508] sm:$0xff]
    %v2016 = vld [vmem:[#allocation5 + $0x510] sm:$0xff]
    %v2017 = vld [vmem:[#allocation5 + $0x518] sm:$0xff]
    %v2018 = vld [vmem:[#allocation5 + $0x520] sm:$0xff]
    %v2019 = vld [vmem:[#allocation5 + $0x528] sm:$0xff]
    %v2020 = vld [vmem:[#allocation5 + $0x530] sm:$0xff]
    %v2021 = vld [vmem:[#allocation5 + $0x538] sm:$0xff]
    %v2022 = vld [vmem:[#allocation5 + $0x540] sm:$0xff]
    %v2023 = vld [vmem:[#allocation5 + $0x548] sm:$0xff]
    %v2024 = vld [vmem:[#allocation5 + $0x550] sm:$0xff]
    %v2025 = vld [vmem:[#allocation5 + $0x558] sm:$0xff]
    %v2026 = vld [vmem:[#allocation5 + $0x560] sm:$0xff]
    %v2027 = vld [vmem:[#allocation5 + $0x568] sm:$0xff]
    %v2028 = vld [vmem:[#allocation5 + $0x570] sm:$0xff]
    %v2029 = vld [vmem:[#allocation5 + $0x578] sm:$0xff]
    %v2030 = vld [vmem:[#allocation5 + $0x580] sm:$0xff]
    %v2031 = vld [vmem:[#allocation5 + $0x588] sm:$0xff]
    %v2032 = vld [vmem:[#allocation5 + $0x590] sm:$0xff]
    %v2033 = vld [vmem:[#allocation5 + $0x598] sm:$0xff]
    %v2034 = vld [vmem:[#allocation5 + $0x5a0] sm:$0xff]
    %v2035 = vld [vmem:[#allocation5 + $0x5a8] sm:$0xff]
    %v2036 = vld [vmem:[#allocation5 + $0x5b0] sm:$0xff]
    %v2037 = vld [vmem:[#allocation5 + $0x5b8] sm:$0xff]
    %v2038 = vld [vmem:[#allocation5 + $0x5c0] sm:$0xff]
    %v2039 = vld [vmem:[#allocation5 + $0x5c8] sm:$0xff]
    %v2040 = vld [vmem:[#allocation5 + $0x5d0] sm:$0xff]
    %v2041 = vld [vmem:[#allocation5 + $0x5d8] sm:$0xff]
    %v2042 = vld [vmem:[#allocation5 + $0x5e0] sm:$0xff]
    %v2043 = vld [vmem:[#allocation5 + $0x5e8] sm:$0xff]
    %v2044 = vld [vmem:[#allocation5 + $0x5f0] sm:$0xff]
    %v2045 = vld [vmem:[#allocation5 + $0x5f8] sm:$0xff]
    %v2046 = vld [vmem:[#allocation5 + $0x600] sm:$0xff]
    %v2047 = vld [vmem:[#allocation5 + $0x608] sm:$0xff]
    %v2048 = vld [vmem:[#allocation5 + $0x610] sm:$0xff]
    %v2049 = vld [vmem:[#allocation5 + $0x618] sm:$0xff]
    %v2050 = vld [vmem:[#allocation5 + $0x620] sm:$0xff]
    %v2051 = vld [vmem:[#allocation5 + $0x628] sm:$0xff]
    %v2052 = vld [vmem:[#allocation5 + $0x630] sm:$0xff]
    %v2053 = vld [vmem:[#allocation5 + $0x638] sm:$0xff]
    %v2054 = vld [vmem:[#allocation5 + $0x640] sm:$0xff]
    %v2055 = vld [vmem:[#allocation5 + $0x648] sm:$0xff]
    %v2056 = vld [vmem:[#allocation5 + $0x650] sm:$0xff]
    %v2057 = vld [vmem:[#allocation5 + $0x658] sm:$0xff]
    %v2058 = vld [vmem:[#allocation5 + $0x660] sm:$0xff]
    %v2059 = vld [vmem:[#allocation5 + $0x668] sm:$0xff]
    %v2060 = vld [vmem:[#allocation5 + $0x670] sm:$0xff]
    %v2061 = vld [vmem:[#allocation5 + $0x678] sm:$0xff]
    %v2062 = vld [vmem:[#allocation5 + $0x680] sm:$0xff]
    %v2063 = vld [vmem:[#allocation5 + $0x688] sm:$0xff]
    %v2064 = vld [vmem:[#allocation5 + $0x690] sm:$0xff]
    %v2065 = vld [vmem:[#allocation5 + $0x698] sm:$0xff]
    %v2066 = vld [vmem:[#allocation5 + $0x6a0] sm:$0xff]
    %v2067 = vld [vmem:[#allocation5 + $0x6a8] sm:$0xff]
    %v2068 = vld [vmem:[#allocation5 + $0x6b0] sm:$0xff]
    %v2069 = vld [vmem:[#allocation5 + $0x6b8] sm:$0xff]
    %v2070 = vld [vmem:[#allocation5 + $0x6c0] sm:$0xff]
    %v2071 = vld [vmem:[#allocation5 + $0x6c8] sm:$0xff]
    %v2072 = vld [vmem:[#allocation5 + $0x6d0] sm:$0xff]
    %v2073 = vld [vmem:[#allocation5 + $0x6d8] sm:$0xff]
    %v2074 = vld [vmem:[#allocation5 + $0x6e0] sm:$0xff]
    %v2075 = vld [vmem:[#allocation5 + $0x6e8] sm:$0xff]
    %v2076 = vld [vmem:[#allocation5 + $0x6f0] sm:$0xff]
    %v2077 = vld [vmem:[#allocation5 + $0x6f8] sm:$0xff]
    %v2078 = vld [vmem:[#allocation5 + $0x700] sm:$0xff]
    %v2079 = vld [vmem:[#allocation5 + $0x708] sm:$0xff]
    %v2080 = vld [vmem:[#allocation5 + $0x710] sm:$0xff]
    %v2081 = vld [vmem:[#allocation5 + $0x718] sm:$0xff]
    %v2082 = vld [vmem:[#allocation5 + $0x720] sm:$0xff]
    %v2083 = vld [vmem:[#allocation5 + $0x728] sm:$0xff]
    %v2084 = vld [vmem:[#allocation5 + $0x730] sm:$0xff]
    %v2085 = vld [vmem:[#allocation5 + $0x738] sm:$0xff]
    %v2086 = vld [vmem:[#allocation5 + $0x740] sm:$0xff]
    %v2087 = vld [vmem:[#allocation5 + $0x748] sm:$0xff]
    %v2088 = vld [vmem:[#allocation5 + $0x750] sm:$0xff]
    %v2089 = vld [vmem:[#allocation5 + $0x758] sm:$0xff]
    %v2090 = vld [vmem:[#allocation5 + $0x760] sm:$0xff]
    %v2091 = vld [vmem:[#allocation5 + $0x768] sm:$0xff]
    %v2092 = vld [vmem:[#allocation5 + $0x770] sm:$0xff]
    %v2093 = vld [vmem:[#allocation5 + $0x778] sm:$0xff]
    %v2094 = vld [vmem:[#allocation5 + $0x780] sm:$0xff]
    %v2095 = vld [vmem:[#allocation5 + $0x788] sm:$0xff]
    %v2096 = vld [vmem:[#allocation5 + $0x790] sm:$0xff]
    %v2097 = vld [vmem:[#allocation5 + $0x798] sm:$0xff]
    %v2098 = vld [vmem:[#allocation5 + $0x7a0] sm:$0xff]
    %v2099 = vld [vmem:[#allocation5 + $0x7a8] sm:$0xff]
    %v2100 = vld [vmem:[#allocation5 + $0x7b0] sm:$0xff]
    %v2101 = vld [vmem:[#allocation5 + $0x7b8] sm:$0xff]
    %v2102 = vld [vmem:[#allocation5 + $0x7c0] sm:$0xff]
    %v2103 = vld [vmem:[#allocation5 + $0x7c8] sm:$0xff]
    %v2104 = vld [vmem:[#allocation5 + $0x7d0] sm:$0xff]
    %v2105 = vld [vmem:[#allocation5 + $0x7d8] sm:$0xff]
    %v2106 = vld [vmem:[#allocation5 + $0x7e0] sm:$0xff]
    %v2107 = vld [vmem:[#allocation5 + $0x7e8] sm:$0xff]
    %v2108 = vld [vmem:[#allocation5 + $0x7f0] sm:$0xff]
    %v2109 = vld [vmem:[#allocation5 + $0x7f8] sm:$0xff]
    %v2110 = vld [vmem:[#allocation5 + $0x800] sm:$0xff]
    %v2111 = vld [vmem:[#allocation5 + $0x808] sm:$0xff]
    %v2112 = vld [vmem:[#allocation5 + $0x810] sm:$0xff]
    %v2113 = vld [vmem:[#allocation5 + $0x818] sm:$0xff]
    %v2114 = vld [vmem:[#allocation5 + $0x820] sm:$0xff]
    %v2115 = vld [vmem:[#allocation5 + $0x828] sm:$0xff]
    %v2116 = vld [vmem:[#allocation5 + $0x830] sm:$0xff]
    %v2117 = vld [vmem:[#allocation5 + $0x838] sm:$0xff]
    %v2118 = vld [vmem:[#allocation5 + $0x840] sm:$0xff]
    %v2119 = vld [vmem:[#allocation5 + $0x848] sm:$0xff]
    %v2120 = vld [vmem:[#allocation5 + $0x850] sm:$0xff]
    %v2121 = vld [vmem:[#allocation5 + $0x858] sm:$0xff]
    %v2122 = vld [vmem:[#allocation5 + $0x860] sm:$0xff]
    %v2123 = vld [vmem:[#allocation5 + $0x868] sm:$0xff]
    %v2124 = vld [vmem:[#allocation5 + $0x870] sm:$0xff]
    %v2125 = vld [vmem:[#allocation5 + $0x878] sm:$0xff]
    %v2126 = vld [vmem:[#allocation5 + $0x880] sm:$0xff]
    %v2127 = vld [vmem:[#allocation5 + $0x888] sm:$0xff]
    %v2128 = vld [vmem:[#allocation5 + $0x890] sm:$0xff]
    %v2129 = vld [vmem:[#allocation5 + $0x898] sm:$0xff]
    %v2130 = vld [vmem:[#allocation5 + $0x8a0] sm:$0xff]
    %v2131 = vld [vmem:[#allocation5 + $0x8a8] sm:$0xff]
    %v2132 = vld [vmem:[#allocation5 + $0x8b0] sm:$0xff]
    %v2133 = vld [vmem:[#allocation5 + $0x8b8] sm:$0xff]
    %v2134 = vld [vmem:[#allocation5 + $0x8c0] sm:$0xff]
    %v2135 = vld [vmem:[#allocation5 + $0x8c8] sm:$0xff]
    %v2136 = vld [vmem:[#allocation5 + $0x8d0] sm:$0xff]
    %v2137 = vld [vmem:[#allocation5 + $0x8d8] sm:$0xff]
    %v2138 = vld [vmem:[#allocation5 + $0x8e0] sm:$0xff]
    %v2139 = vld [vmem:[#allocation5 + $0x8e8] sm:$0xff]
    %v2140 = vld [vmem:[#allocation5 + $0x8f0] sm:$0xff]
    %v2141 = vld [vmem:[#allocation5 + $0x8f8] sm:$0xff]
    %v2142 = vld [vmem:[#allocation5 + $0x900] sm:$0xff]
    %v2143 = vld [vmem:[#allocation5 + $0x908] sm:$0xff]
    %v2144 = vld [vmem:[#allocation5 + $0x910] sm:$0xff]
    %v2145 = vld [vmem:[#allocation5 + $0x918] sm:$0xff]
    %v2146 = vld [vmem:[#allocation5 + $0x920] sm:$0xff]
    %v2147 = vld [vmem:[#allocation5 + $0x928] sm:$0xff]
    %v2148 = vld [vmem:[#allocation5 + $0x930] sm:$0xff]
    %v2149 = vld [vmem:[#allocation5 + $0x938] sm:$0xff]
    %v2150 = vld [vmem:[#allocation5 + $0x940] sm:$0xff]
    %v2151 = vld [vmem:[#allocation5 + $0x948] sm:$0xff]
    %v2152 = vld [vmem:[#allocation5 + $0x950] sm:$0xff]
    %v2153 = vld [vmem:[#allocation5 + $0x958] sm:$0xff]
    %v2154 = vld [vmem:[#allocation5 + $0x960] sm:$0xff]
    %v2155 = vld [vmem:[#allocation5 + $0x968] sm:$0xff]
    %v2156 = vld [vmem:[#allocation5 + $0x970] sm:$0xff]
    %v2157 = vld [vmem:[#allocation5 + $0x978] sm:$0xff]
    %v2158 = vld [vmem:[#allocation5 + $0x980] sm:$0xff]
    %v2159 = vld [vmem:[#allocation5 + $0x988] sm:$0xff]
    %v2160 = vld [vmem:[#allocation5 + $0x990] sm:$0xff]
    %v2161 = vld [vmem:[#allocation5 + $0x998] sm:$0xff]
    %v2162 = vld [vmem:[#allocation5 + $0x9a0] sm:$0xff]
    %v2163 = vld [vmem:[#allocation5 + $0x9a8] sm:$0xff]
    %v2164 = vld [vmem:[#allocation5 + $0x9b0] sm:$0xff]
    %v2165 = vld [vmem:[#allocation5 + $0x9b8] sm:$0xff]
    %v2166 = vld [vmem:[#allocation5 + $0x9c0] sm:$0xff]
    %v2167 = vld [vmem:[#allocation5 + $0x9c8] sm:$0xff]
    %v2168 = vld [vmem:[#allocation5 + $0x9d0] sm:$0xff]
    %v2169 = vld [vmem:[#allocation5 + $0x9d8] sm:$0xff]
    %v2170 = vld [vmem:[#allocation5 + $0x9e0] sm:$0xff]
    %v2171 = vld [vmem:[#allocation5 + $0x9e8] sm:$0xff]
    %v2172 = vld [vmem:[#allocation5 + $0x9f0] sm:$0xff]
    %v2173 = vld [vmem:[#allocation5 + $0x9f8] sm:$0xff]
    %v2174 = vld [vmem:[#allocation5 + $0xa00] sm:$0xff]
    %v2175 = vld [vmem:[#allocation5 + $0xa08] sm:$0xff]
    %v2176 = vld [vmem:[#allocation5 + $0xa10] sm:$0xff]
    %v2177 = vld [vmem:[#allocation5 + $0xa18] sm:$0xff]
    %v2178 = vld [vmem:[#allocation5 + $0xa20] sm:$0xff]
    %v2179 = vld [vmem:[#allocation5 + $0xa28] sm:$0xff]
    %v2180 = vld [vmem:[#allocation5 + $0xa30] sm:$0xff]
    %v2181 = vld [vmem:[#allocation5 + $0xa38] sm:$0xff]
    %v2182 = vld [vmem:[#allocation5 + $0xa40] sm:$0xff]
    %v2183 = vld [vmem:[#allocation5 + $0xa48] sm:$0xff]
    %v2184 = vld [vmem:[#allocation5 + $0xa50] sm:$0xff]
    %v2185 = vld [vmem:[#allocation5 + $0xa58] sm:$0xff]
    %v2186 = vld [vmem:[#allocation5 + $0xa60] sm:$0xff]
    %v2187 = vld [vmem:[#allocation5 + $0xa68] sm:$0xff]
    %v2188 = vld [vmem:[#allocation5 + $0xa70] sm:$0xff]
    %v2189 = vld [vmem:[#allocation5 + $0xa78] sm:$0xff]
    %v2190 = vld [vmem:[#allocation5 + $0xa80] sm:$0xff]
    %v2191 = vld [vmem:[#allocation5 + $0xa88] sm:$0xff]
    %v2192 = vld [vmem:[#allocation5 + $0xa90] sm:$0xff]
    %v2193 = vld [vmem:[#allocation5 + $0xa98] sm:$0xff]
    %v2194 = vld [vmem:[#allocation5 + $0xaa0] sm:$0xff]
    %v2195 = vld [vmem:[#allocation5 + $0xaa8] sm:$0xff]
    %v2196 = vld [vmem:[#allocation5 + $0xab0] sm:$0xff]
    %v2197 = vld [vmem:[#allocation5 + $0xab8] sm:$0xff]
    %v2198 = vld [vmem:[#allocation5 + $0xac0] sm:$0xff]
    %v2199 = vld [vmem:[#allocation5 + $0xac8] sm:$0xff]
    %v2200 = vld [vmem:[#allocation5 + $0xad0] sm:$0xff]
    %v2201 = vld [vmem:[#allocation5 + $0xad8] sm:$0xff]
    %v2202 = vld [vmem:[#allocation5 + $0xae0] sm:$0xff]
    %v2203 = vld [vmem:[#allocation5 + $0xae8] sm:$0xff]
    %v2204 = vld [vmem:[#allocation5 + $0xaf0] sm:$0xff]
    %v2205 = vld [vmem:[#allocation5 + $0xaf8] sm:$0xff]
    %v2206 = vld [vmem:[#allocation5 + $0xb00] sm:$0xff]
    %v2207 = vld [vmem:[#allocation5 + $0xb08] sm:$0xff]
    %v2208 = vld [vmem:[#allocation5 + $0xb10] sm:$0xff]
    %v2209 = vld [vmem:[#allocation5 + $0xb18] sm:$0xff]
    %v2210 = vld [vmem:[#allocation5 + $0xb20] sm:$0xff]
    %v2211 = vld [vmem:[#allocation5 + $0xb28] sm:$0xff]
    %v2212 = vld [vmem:[#allocation5 + $0xb30] sm:$0xff]
    %v2213 = vld [vmem:[#allocation5 + $0xb38] sm:$0xff]
    %v2214 = vld [vmem:[#allocation5 + $0xb40] sm:$0xff]
    %v2215 = vld [vmem:[#allocation5 + $0xb48] sm:$0xff]
    %v2216 = vld [vmem:[#allocation5 + $0xb50] sm:$0xff]
    %v2217 = vld [vmem:[#allocation5 + $0xb58] sm:$0xff]
    %v2218 = vld [vmem:[#allocation5 + $0xb60] sm:$0xff]
    %v2219 = vld [vmem:[#allocation5 + $0xb68] sm:$0xff]
    %v2220 = vld [vmem:[#allocation5 + $0xb70] sm:$0xff]
    %v2221 = vld [vmem:[#allocation5 + $0xb78] sm:$0xff]
    %v2222 = vld [vmem:[#allocation5 + $0xb80] sm:$0xff]
    %v2223 = vld [vmem:[#allocation5 + $0xb88] sm:$0xff]
    %v2224 = vld [vmem:[#allocation5 + $0xb90] sm:$0xff]
    %v2225 = vld [vmem:[#allocation5 + $0xb98] sm:$0xff]
    %v2226 = vld [vmem:[#allocation5 + $0xba0] sm:$0xff]
    %v2227 = vld [vmem:[#allocation5 + $0xba8] sm:$0xff]
    %v2228 = vld [vmem:[#allocation5 + $0xbb0] sm:$0xff]
    %v2229 = vld [vmem:[#allocation5 + $0xbb8] sm:$0xff]
    %v2230 = vld [vmem:[#allocation5 + $0xbc0] sm:$0xff]
    %v2231 = vld [vmem:[#allocation5 + $0xbc8] sm:$0xff]
    %v2232 = vld [vmem:[#allocation5 + $0xbd0] sm:$0xff]
    %v2233 = vld [vmem:[#allocation5 + $0xbd8] sm:$0xff]
    %v2234 = vld [vmem:[#allocation5 + $0xbe0] sm:$0xff]
    %v2235 = vld [vmem:[#allocation5 + $0xbe8] sm:$0xff]
    %v2236 = vld [vmem:[#allocation5 + $0xbf0] sm:$0xff]
    %v2237 = vld [vmem:[#allocation5 + $0xbf8] sm:$0xff]
    %v2238 = vld [vmem:[#allocation5 + $0xc00] sm:$0xff]
    %v2239 = vld [vmem:[#allocation5 + $0xc08] sm:$0xff]
    %v2240 = vld [vmem:[#allocation5 + $0xc10] sm:$0xff]
    %v2241 = vld [vmem:[#allocation5 + $0xc18] sm:$0xff]
    %v2242 = vld [vmem:[#allocation5 + $0xc20] sm:$0xff]
    %v2243 = vld [vmem:[#allocation5 + $0xc28] sm:$0xff]
    %v2244 = vld [vmem:[#allocation5 + $0xc30] sm:$0xff]
    %v2245 = vld [vmem:[#allocation5 + $0xc38] sm:$0xff]
    %v2246 = vld [vmem:[#allocation5 + $0xc40] sm:$0xff]
    %v2247 = vld [vmem:[#allocation5 + $0xc48] sm:$0xff]
    %v2248 = vld [vmem:[#allocation5 + $0xc50] sm:$0xff]
    %v2249 = vld [vmem:[#allocation5 + $0xc58] sm:$0xff]
    %v2250 = vld [vmem:[#allocation5 + $0xc60] sm:$0xff]
    %v2251 = vld [vmem:[#allocation5 + $0xc68] sm:$0xff]
    %v2252 = vld [vmem:[#allocation5 + $0xc70] sm:$0xff]
    %v2253 = vld [vmem:[#allocation5 + $0xc78] sm:$0xff]
    %v2254 = vld [vmem:[#allocation5 + $0xc80] sm:$0xff]
    %v2255 = vld [vmem:[#allocation5 + $0xc88] sm:$0xff]
    %v2256 = vld [vmem:[#allocation5 + $0xc90] sm:$0xff]
    %v2257 = vld [vmem:[#allocation5 + $0xc98] sm:$0xff]
    %v2258 = vld [vmem:[#allocation5 + $0xca0] sm:$0xff]
    %v2259 = vld [vmem:[#allocation5 + $0xca8] sm:$0xff]
    %v2260 = vld [vmem:[#allocation5 + $0xcb0] sm:$0xff]
    %v2261 = vld [vmem:[#allocation5 + $0xcb8] sm:$0xff]
    %v2262 = vld [vmem:[#allocation5 + $0xcc0] sm:$0xff]
    %v2263 = vld [vmem:[#allocation5 + $0xcc8] sm:$0xff]
    %v2264 = vld [vmem:[#allocation5 + $0xcd0] sm:$0xff]
    %v2265 = vld [vmem:[#allocation5 + $0xcd8] sm:$0xff]
    %v2266 = vld [vmem:[#allocation5 + $0xce0] sm:$0xff]
    %v2267 = vld [vmem:[#allocation5 + $0xce8] sm:$0xff]
    %v2268 = vld [vmem:[#allocation5 + $0xcf0] sm:$0xff]
    %v2269 = vld [vmem:[#allocation5 + $0xcf8] sm:$0xff]
    %v2270 = vld [vmem:[#allocation5 + $0xd00] sm:$0xff]
    %v2271 = vld [vmem:[#allocation5 + $0xd08] sm:$0xff]
    %v2272 = vld [vmem:[#allocation5 + $0xd10] sm:$0xff]
    %v2273 = vld [vmem:[#allocation5 + $0xd18] sm:$0xff]
    %v2274 = vld [vmem:[#allocation5 + $0xd20] sm:$0xff]
    %v2275 = vld [vmem:[#allocation5 + $0xd28] sm:$0xff]
    %v2276 = vld [vmem:[#allocation5 + $0xd30] sm:$0xff]
    %v2277 = vld [vmem:[#allocation5 + $0xd38] sm:$0xff]
    %v2278 = vld [vmem:[#allocation5 + $0xd40] sm:$0xff]
    %v2279 = vld [vmem:[#allocation5 + $0xd48] sm:$0xff]
    %v2280 = vld [vmem:[#allocation5 + $0xd50] sm:$0xff]
    %v2281 = vld [vmem:[#allocation5 + $0xd58] sm:$0xff]
    %v2282 = vld [vmem:[#allocation5 + $0xd60] sm:$0xff]
    %v2283 = vld [vmem:[#allocation5 + $0xd68] sm:$0xff]
    %v2284 = vld [vmem:[#allocation5 + $0xd70] sm:$0xff]
    %v2285 = vld [vmem:[#allocation5 + $0xd78] sm:$0xff]
    %v2286 = vld [vmem:[#allocation5 + $0xd80] sm:$0xff]
    %v2287 = vld [vmem:[#allocation5 + $0xd88] sm:$0xff]
    %v2288 = vld [vmem:[#allocation5 + $0xd90] sm:$0xff]
    %v2289 = vld [vmem:[#allocation5 + $0xd98] sm:$0xff]
    %v2290 = vld [vmem:[#allocation5 + $0xda0] sm:$0xff]
    %v2291 = vld [vmem:[#allocation5 + $0xda8] sm:$0xff]
    %v2292 = vld [vmem:[#allocation5 + $0xdb0] sm:$0xff]
    %v2293 = vld [vmem:[#allocation5 + $0xdb8] sm:$0xff]
    %v2294 = vld [vmem:[#allocation5 + $0xdc0] sm:$0xff]
    %v2295 = vld [vmem:[#allocation5 + $0xdc8] sm:$0xff]
    %v2296 = vld [vmem:[#allocation5 + $0xdd0] sm:$0xff]
    %v2297 = vld [vmem:[#allocation5 + $0xdd8] sm:$0xff]
    %v2298 = vld [vmem:[#allocation5 + $0xde0] sm:$0xff]
    %v2299 = vld [vmem:[#allocation5 + $0xde8] sm:$0xff]
    %v2300 = vld [vmem:[#allocation5 + $0xdf0] sm:$0xff]
    %v2301 = vld [vmem:[#allocation5 + $0xdf8] sm:$0xff]
    %v2302 = vld [vmem:[#allocation5 + $0xe00] sm:$0xff]
    %v2303 = vld [vmem:[#allocation5 + $0xe08] sm:$0xff]
    %v2304 = vld [vmem:[#allocation5 + $0xe10] sm:$0xff]
    %v2305 = vld [vmem:[#allocation5 + $0xe18] sm:$0xff]
    %v2306 = vld [vmem:[#allocation5 + $0xe20] sm:$0xff]
    %v2307 = vld [vmem:[#allocation5 + $0xe28] sm:$0xff]
    %v2308 = vld [vmem:[#allocation5 + $0xe30] sm:$0xff]
    %v2309 = vld [vmem:[#allocation5 + $0xe38] sm:$0xff]
    %v2310 = vld [vmem:[#allocation5 + $0xe40] sm:$0xff]
    %v2311 = vld [vmem:[#allocation5 + $0xe48] sm:$0xff]
    %v2312 = vld [vmem:[#allocation5 + $0xe50] sm:$0xff]
    %v2313 = vld [vmem:[#allocation5 + $0xe58] sm:$0xff]
    %v2314 = vld [vmem:[#allocation5 + $0xe60] sm:$0xff]
    %v2315 = vld [vmem:[#allocation5 + $0xe68] sm:$0xff]
    %v2316 = vld [vmem:[#allocation5 + $0xe70] sm:$0xff]
    %v2317 = vld [vmem:[#allocation5 + $0xe78] sm:$0xff]
    %v2318 = vld [vmem:[#allocation5 + $0xe80] sm:$0xff]
    %v2319 = vld [vmem:[#allocation5 + $0xe88] sm:$0xff]
    %v2320 = vld [vmem:[#allocation5 + $0xe90] sm:$0xff]
    %v2321 = vld [vmem:[#allocation5 + $0xe98] sm:$0xff]
    %v2322 = vld [vmem:[#allocation5 + $0xea0] sm:$0xff]
    %v2323 = vld [vmem:[#allocation5 + $0xea8] sm:$0xff]
    %v2324 = vld [vmem:[#allocation5 + $0xeb0] sm:$0xff]
    %v2325 = vld [vmem:[#allocation5 + $0xeb8] sm:$0xff]
    %v2326 = vld [vmem:[#allocation5 + $0xec0] sm:$0xff]
    %v2327 = vld [vmem:[#allocation5 + $0xec8] sm:$0xff]
    %v2328 = vld [vmem:[#allocation5 + $0xed0] sm:$0xff]
    %v2329 = vld [vmem:[#allocation5 + $0xed8] sm:$0xff]
    %v2330 = vld [vmem:[#allocation5 + $0xee0] sm:$0xff]
    %v2331 = vld [vmem:[#allocation5 + $0xee8] sm:$0xff]
    %v2332 = vld [vmem:[#allocation5 + $0xef0] sm:$0xff]
    %v2333 = vld [vmem:[#allocation5 + $0xef8] sm:$0xff]
    %v2334 = vld [vmem:[#allocation5 + $0xf00] sm:$0xff]
    %v2335 = vld [vmem:[#allocation5 + $0xf08] sm:$0xff]
    %v2336 = vld [vmem:[#allocation5 + $0xf10] sm:$0xff]
    %v2337 = vld [vmem:[#allocation5 + $0xf18] sm:$0xff]
    %v2338 = vld [vmem:[#allocation5 + $0xf20] sm:$0xff]
    %v2339 = vld [vmem:[#allocation5 + $0xf28] sm:$0xff]
    %v2340 = vld [vmem:[#allocation5 + $0xf30] sm:$0xff]
    %v2341 = vld [vmem:[#allocation5 + $0xf38] sm:$0xff]
    %v2342 = vld [vmem:[#allocation5 + $0xf40] sm:$0xff]
    %v2343 = vld [vmem:[#allocation5 + $0xf48] sm:$0xff]
    %v2344 = vld [vmem:[#allocation5 + $0xf50] sm:$0xff]
    %v2345 = vld [vmem:[#allocation5 + $0xf58] sm:$0xff]
    %v2346 = vld [vmem:[#allocation5 + $0xf60] sm:$0xff]
    %v2347 = vld [vmem:[#allocation5 + $0xf68] sm:$0xff]
    %v2348 = vld [vmem:[#allocation5 + $0xf70] sm:$0xff]
    %v2349 = vld [vmem:[#allocation5 + $0xf78] sm:$0xff]
    %v2350 = vld [vmem:[#allocation5 + $0xf80] sm:$0xff]
    %v2351 = vld [vmem:[#allocation5 + $0xf88] sm:$0xff]
    %v2352 = vld [vmem:[#allocation5 + $0xf90] sm:$0xff]
    %v2353 = vld [vmem:[#allocation5 + $0xf98] sm:$0xff]
    %v2354 = vld [vmem:[#allocation5 + $0xfa0] sm:$0xff]
    %v2355 = vld [vmem:[#allocation5 + $0xfa8] sm:$0xff]
    %v2356 = vld [vmem:[#allocation5 + $0xfb0] sm:$0xff]
    %v2357 = vld [vmem:[#allocation5 + $0xfb8] sm:$0xff]
    %v2358 = vld [vmem:[#allocation5 + $0xfc0] sm:$0xff]
    %v2359 = vld [vmem:[#allocation5 + $0xfc8] sm:$0xff]
    %v2360 = vld [vmem:[#allocation5 + $0xfd0] sm:$0xff]
    %v2361 = vld [vmem:[#allocation5 + $0xfd8] sm:$0xff]
    %v2362 = vld [vmem:[#allocation5 + $0xfe0] sm:$0xff]
    %v2363 = vld [vmem:[#allocation5 + $0xfe8] sm:$0xff]
    %v2364 = vld [vmem:[#allocation5 + $0xff0] sm:$0xff]
    %v2365 = vld [vmem:[#allocation5 + $0xff8] sm:$0xff]
    %v2366 = vld [vmem:[#allocation5 + $0x1000] sm:$0xff]
    %v2367 = vld [vmem:[#allocation5 + $0x1008] sm:$0xff]
    %v2368 = vld [vmem:[#allocation5 + $0x1010] sm:$0xff]
    %v2369 = vld [vmem:[#allocation5 + $0x1018] sm:$0xff]
    %v2370 = vld [vmem:[#allocation5 + $0x1020] sm:$0xff]
    %v2371 = vld [vmem:[#allocation5 + $0x1028] sm:$0xff]
    %v2372 = vld [vmem:[#allocation5 + $0x1030] sm:$0xff]
    %v2373 = vld [vmem:[#allocation5 + $0x1038] sm:$0xff]
    %v2374 = vld [vmem:[#allocation5 + $0x1040] sm:$0xff]
    %v2375 = vld [vmem:[#allocation5 + $0x1048] sm:$0xff]
    %v2376 = vld [vmem:[#allocation5 + $0x1050] sm:$0xff]
    %v2377 = vld [vmem:[#allocation5 + $0x1058] sm:$0xff]
    %v2378 = vld [vmem:[#allocation5 + $0x1060] sm:$0xff]
    %v2379 = vld [vmem:[#allocation5 + $0x1068] sm:$0xff]
    %v2380 = vld [vmem:[#allocation5 + $0x1070] sm:$0xff]
    %v2381 = vld [vmem:[#allocation5 + $0x1078] sm:$0xff]
    %v2382 = vld [vmem:[#allocation5 + $0x1080] sm:$0xff]
    %v2383 = vld [vmem:[#allocation5 + $0x1088] sm:$0xff]
    %v2384 = vld [vmem:[#allocation5 + $0x1090] sm:$0xff]
    %v2385 = vld [vmem:[#allocation5 + $0x1098] sm:$0xff]
    %v2386 = vld [vmem:[#allocation5 + $0x10a0] sm:$0xff]
    %v2387 = vld [vmem:[#allocation5 + $0x10a8] sm:$0xff]
    %v2388 = vld [vmem:[#allocation5 + $0x10b0] sm:$0xff]
    %v2389 = vld [vmem:[#allocation5 + $0x10b8] sm:$0xff]
    %v2390 = vld [vmem:[#allocation5 + $0x10c0] sm:$0xff]
    %v2391 = vld [vmem:[#allocation5 + $0x10c8] sm:$0xff]
    %v2392 = vld [vmem:[#allocation5 + $0x10d0] sm:$0xff]
    %v2393 = vld [vmem:[#allocation5 + $0x10d8] sm:$0xff]
    %v2394 = vld [vmem:[#allocation5 + $0x10e0] sm:$0xff]
    %v2395 = vld [vmem:[#allocation5 + $0x10e8] sm:$0xff]
    %v2396 = vld [vmem:[#allocation5 + $0x10f0] sm:$0xff]
    %v2397 = vld [vmem:[#allocation5 + $0x10f8] sm:$0xff]
    %v2398 = vld [vmem:[#allocation5 + $0x1100] sm:$0xff]
    %v2399 = vld [vmem:[#allocation5 + $0x1108] sm:$0xff]
    %v2400 = vld [vmem:[#allocation5 + $0x1110] sm:$0xff]
    %v2401 = vld [vmem:[#allocation5 + $0x1118] sm:$0xff]
    %v2402 = vld [vmem:[#allocation5 + $0x1120] sm:$0xff]
    %v2403 = vld [vmem:[#allocation5 + $0x1128] sm:$0xff]
    %v2404 = vld [vmem:[#allocation5 + $0x1130] sm:$0xff]
    %v2405 = vld [vmem:[#allocation5 + $0x1138] sm:$0xff]
    %v2406 = vld [vmem:[#allocation5 + $0x1140] sm:$0xff]
    %v2407 = vld [vmem:[#allocation5 + $0x1148] sm:$0xff]
    %v2408 = vld [vmem:[#allocation5 + $0x1150] sm:$0xff]
    %v2409 = vld [vmem:[#allocation5 + $0x1158] sm:$0xff]
    %v2410 = vld [vmem:[#allocation5 + $0x1160] sm:$0xff]
    %v2411 = vld [vmem:[#allocation5 + $0x1168] sm:$0xff]
    %v2412 = vld [vmem:[#allocation5 + $0x1170] sm:$0xff]
    %v2413 = vld [vmem:[#allocation5 + $0x1178] sm:$0xff]
    %v2414 = vld [vmem:[#allocation5 + $0x1180] sm:$0xff]
    %v2415 = vld [vmem:[#allocation5 + $0x1188] sm:$0xff]
    %v2416 = vld [vmem:[#allocation5 + $0x1190] sm:$0xff]
    %v2417 = vld [vmem:[#allocation5 + $0x1198] sm:$0xff]
    %v2418 = vld [vmem:[#allocation5 + $0x11a0] sm:$0xff]
    %v2419 = vld [vmem:[#allocation5 + $0x11a8] sm:$0xff]
    %v2420 = vld [vmem:[#allocation5 + $0x11b0] sm:$0xff]
    %v2421 = vld [vmem:[#allocation5 + $0x11b8] sm:$0xff]
    %v2422 = vld [vmem:[#allocation5 + $0x11c0] sm:$0xff]
    %v2423 = vld [vmem:[#allocation5 + $0x11c8] sm:$0xff]
    %v2424 = vld [vmem:[#allocation5 + $0x11d0] sm:$0xff]
    %v2425 = vld [vmem:[#allocation5 + $0x11d8] sm:$0xff]
    %v2426 = vld [vmem:[#allocation5 + $0x11e0] sm:$0xff]
    %v2427 = vld [vmem:[#allocation5 + $0x11e8] sm:$0xff]
    %v2428 = vld [vmem:[#allocation5 + $0x11f0] sm:$0xff]
    %v2429 = vld [vmem:[#allocation5 + $0x11f8] sm:$0xff]
    %v2430 = vld [vmem:[#allocation7] sm:$0x7]
    %v2432 = vlaneseq
    %v2433 = vshrl.u32 %v2432, 7
    %v2434 = vsub.s32 0, %v2433
    %v2435 = vrot.slane %v2430, %v2434
    %v2436 = vlaneseq
    %v2437 = vshrl.u32 %v2436, 7
    %v2438 = vsub.s32 1, %v2437
    %v2439 = vrot.slane %v2430, %v2438
    %v2440 = vlaneseq
    %v2441 = vshrl.u32 %v2440, 7
    %v2442 = vsub.s32 2, %v2441
    %v2443 = vrot.slane %v2430, %v2442
    %2447 = vmatprep.subr.mxu0 %v2035
    %2448 = vmatpush1.xpose.msra.mxu0 %v2034
    %2449 = vmatprep.subr.mxu0 %v2023
    %2450 = vmatpush1.xpose.msra.mxu0 %v2022
    %2451 = vmatprep.subr.mxu0 %v2011
    %2452 = vmatpush1.xpose.msra.mxu0 %v2010
    %2453 = vmatprep.subr.mxu0 %v1999
    %2454 = vmatpush1.xpose.msra.mxu0 %v1998
    %2455 = vmatprep.subr.mxu0 %v1987
    %2456 = vmatpush1.xpose.msra.mxu0 %v1986
    %2457 = vmatprep.subr.mxu0 %v1975
    %2458 = vmatpush1.xpose.msra.mxu0 %v1974
    %2459 = vmatprep.subr.mxu0 %v1963
    %2460 = vmatpush1.xpose.msra.mxu0 %v1962
    %2461 = vmatprep.subr.mxu0 %v1951
    %2462 = vmatpush1.xpose.msra.mxu0 %v1950
    %2463 = vmatprep.subr.mxu0 %v1939
    %2464 = vmatpush1.xpose.msra.mxu0 %v1938
    %2465 = vmatprep.subr.mxu0 %v1927
    %2466 = vmatpush1.xpose.msra.mxu0 %v1926
    %2467 = vmatprep.subr.mxu0 %v1915
    %2468 = vmatpush1.xpose.msra.mxu0 %v1914
    %2469 = vmatprep.subr.mxu0 %v1903
    %2470 = vmatpush1.xpose.msra.mxu0 %v1902
    %2471 = vmatprep.subr.mxu0 %v1891
    %2472 = vmatpush1.xpose.msra.mxu0 %v1890
    %2473 = vmatprep.subr.mxu0 %v1879
    %2474 = vmatpush1.xpose.msra.mxu0 %v1878
    %2475 = vmatprep.subr.mxu0 %v1867
    %2476 = vmatpush1.xpose.msra.mxu0 %v1866
    %2477 = vmatprep.subr.mxu0 %v1855
    %2478 = vmatpush1.xpose.msra.mxu0 %v1854
    %2479 = vmatprep.subr.mxu0 %v2227
    %2480 = vmatpush2.xpose.msra.mxu0 %v2226
    %2481 = vmatprep.subr.mxu0 %v2215
    %2482 = vmatpush2.xpose.msra.mxu0 %v2214
    %2483 = vmatprep.subr.mxu0 %v2203
    %2484 = vmatpush2.xpose.msra.mxu0 %v2202
    %2485 = vmatprep.subr.mxu0 %v2191
    %2486 = vmatpush2.xpose.msra.mxu0 %v2190
    %2487 = vmatprep.subr.mxu0 %v2179
    %2488 = vmatpush2.xpose.msra.mxu0 %v2178
    %2489 = vmatprep.subr.mxu0 %v2167
    %2490 = vmatpush2.xpose.msra.mxu0 %v2166
    %2491 = vmatprep.subr.mxu0 %v2155
    %2492 = vmatpush2.xpose.msra.mxu0 %v2154
    %2493 = vmatprep.subr.mxu0 %v2143
    %2494 = vmatpush2.xpose.msra.mxu0 %v2142
    %2495 = vmatprep.subr.mxu0 %v2131
    %2496 = vmatpush2.xpose.msra.mxu0 %v2130
    %2497 = vmatprep.subr.mxu0 %v2119
    %2498 = vmatpush2.xpose.msra.mxu0 %v2118
    %2499 = vmatprep.subr.mxu0 %v2107
    %2500 = vmatpush2.xpose.msra.mxu0 %v2106
    %2501 = vmatprep.subr.mxu0 %v2095
    %2502 = vmatpush2.xpose.msra.mxu0 %v2094
    %2503 = vmatprep.subr.mxu0 %v2083
    %2504 = vmatpush2.xpose.msra.mxu0 %v2082
    %2505 = vmatprep.subr.mxu0 %v2071
    %2506 = vmatpush2.xpose.msra.mxu0 %v2070
    %2507 = vmatprep.subr.mxu0 %v2059
    %2508 = vmatpush2.xpose.msra.mxu0 %v2058
    %2509 = vmatprep.subr.mxu0 %v2047
    %2510 = vmatpush2.xpose.msra.mxu0 %v2046
    %2511 = vmatprep.mubr.f32.mxu0 %v1555
    %2512 = vmatmul.mubr.f32.gmra.mxu0 %v1554
    %v2513 = vpop.f32.mrf.mxu0
    %v2514 = vadd.f32 %v2435, %v2513
    %v2515 = vpop.f32.mrf.mxu0
    %v2516 = vadd.f32 %v2439, %v2515
    %2517 = vmatprep.mubr.f32.mxu0 %v1567
    %2518 = vmatmul.mubr.f32.gmra.mxu0 %v1566
    %v2519 = vpop.f32.mrf.mxu0
    %v2520 = vadd.f32 %v2435, %v2519
    %v2521 = vpop.f32.mrf.mxu0
    %v2522 = vadd.f32 %v2439, %v2521
    %2523 = vmatprep.mubr.f32.mxu0 %v1579
    %2524 = vmatmul.mubr.f32.gmra.mxu0 %v1578
    %v2525 = vpop.f32.mrf.mxu0
    %v2526 = vadd.f32 %v2435, %v2525
    %v2527 = vpop.f32.mrf.mxu0
    %v2528 = vadd.f32 %v2439, %v2527
    %2529 = vmatprep.mubr.f32.mxu0 %v1591
    %2530 = vmatmul.mubr.f32.gmra.mxu0 %v1590
    %v2531 = vpop.f32.mrf.mxu0
    %v2532 = vadd.f32 %v2435, %v2531
    %v2533 = vpop.f32.mrf.mxu0
    %v2534 = vadd.f32 %v2439, %v2533
    %2535 = vmatprep.mubr.f32.mxu0 %v1603
    %2536 = vmatmul.mubr.f32.gmra.mxu0 %v1602
    %v2537 = vpop.f32.mrf.mxu0
    %v2538 = vadd.f32 %v2435, %v2537
    %v2539 = vpop.f32.mrf.mxu0
    %v2540 = vadd.f32 %v2439, %v2539
    %2541 = vmatprep.mubr.f32.mxu0 %v1615
    %2542 = vmatmul.mubr.f32.gmra.mxu0 %v1614
    %v2543 = vpop.f32.mrf.mxu0
    %v2544 = vadd.f32 %v2435, %v2543
    %v2545 = vpop.f32.mrf.mxu0
    %v2546 = vadd.f32 %v2439, %v2545
    %2547 = vmatprep.mubr.f32.mxu0 %v1627
    %2548 = vmatmul.mubr.f32.gmra.mxu0 %v1626
    %v2549 = vpop.f32.mrf.mxu0
    %v2550 = vadd.f32 %v2435, %v2549
    %v2551 = vpop.f32.mrf.mxu0
    %v2552 = vadd.f32 %v2439, %v2551
    %2553 = vmatprep.mubr.f32.mxu0 %v1639
    %2554 = vmatmul.mubr.f32.gmra.mxu0 %v1638
    %v2555 = vpop.f32.mrf.mxu0
    %v2556 = vadd.f32 %v2435, %v2555
    %v2557 = vpop.f32.mrf.mxu0
    %v2558 = vadd.f32 %v2439, %v2557
    %2559 = vmatprep.mubr.f32.mxu0 %v1651
    %2560 = vmatmul.mubr.f32.gmra.mxu0 %v1650
    %v2561 = vpop.f32.mrf.mxu0
    %v2562 = vadd.f32 %v2435, %v2561
    %v2563 = vpop.f32.mrf.mxu0
    %v2564 = vadd.f32 %v2439, %v2563
    %2565 = vmatprep.mubr.f32.mxu0 %v1663
    %2566 = vmatmul.mubr.f32.gmra.mxu0 %v1662
    %v2567 = vpop.f32.mrf.mxu0
    %v2568 = vadd.f32 %v2435, %v2567
    %v2569 = vpop.f32.mrf.mxu0
    %v2570 = vadd.f32 %v2439, %v2569
    %2571 = vmatprep.mubr.f32.mxu0 %v1675
    %2572 = vmatmul.mubr.f32.gmra.mxu0 %v1674
    %v2573 = vpop.f32.mrf.mxu0
    %v2574 = vadd.f32 %v2435, %v2573
    %v2575 = vpop.f32.mrf.mxu0
    %v2576 = vadd.f32 %v2439, %v2575
    %2577 = vmatprep.mubr.f32.mxu0 %v1687
    %2578 = vmatmul.mubr.f32.gmra.mxu0 %v1686
    %v2579 = vpop.f32.mrf.mxu0
    %v2580 = vadd.f32 %v2435, %v2579
    %v2581 = vpop.f32.mrf.mxu0
    %v2582 = vadd.f32 %v2439, %v2581
    %2583 = vmatprep.mubr.f32.mxu0 %v1699
    %2584 = vmatmul.mubr.f32.gmra.mxu0 %v1698
    %v2585 = vpop.f32.mrf.mxu0
    %v2586 = vadd.f32 %v2435, %v2585
    %v2587 = vpop.f32.mrf.mxu0
    %v2588 = vadd.f32 %v2439, %v2587
    %2589 = vmatprep.mubr.f32.mxu0 %v1711
    %2590 = vmatmul.mubr.f32.gmra.mxu0 %v1710
    %v2591 = vpop.f32.mrf.mxu0
    %v2592 = vadd.f32 %v2435, %v2591
    %v2593 = vpop.f32.mrf.mxu0
    %v2594 = vadd.f32 %v2439, %v2593
    %2595 = vmatprep.mubr.f32.mxu0 %v1723
    %2596 = vmatmul.mubr.f32.gmra.mxu0 %v1722
    %v2597 = vpop.f32.mrf.mxu0
    %v2598 = vadd.f32 %v2435, %v2597
    %v2599 = vpop.f32.mrf.mxu0
    %v2600 = vadd.f32 %v2439, %v2599
    %2601 = vmatprep.mubr.f32.mxu0 %v1735
    %2602 = vmatmul.mubr.f32.gmra.mxu0 %v1734
    %v2603 = vpop.f32.mrf.mxu0
    %v2604 = vadd.f32 %v2435, %v2603
    %v2605 = vpop.f32.mrf.mxu0
    %v2606 = vadd.f32 %v2439, %v2605
    %2607 = vmatprep.mubr.f32.mxu0 %v1747
    %2608 = vmatmul.mubr.f32.gmra.mxu0 %v1746
    %v2609 = vpop.f32.mrf.mxu0
    %v2610 = vadd.f32 %v2435, %v2609
    %v2611 = vpop.f32.mrf.mxu0
    %v2612 = vadd.f32 %v2439, %v2611
    %2613 = vmatprep.mubr.f32.mxu0 %v1759
    %2614 = vmatmul.mubr.f32.gmra.mxu0 %v1758
    %v2615 = vpop.f32.mrf.mxu0
    %v2616 = vadd.f32 %v2435, %v2615
    %v2617 = vpop.f32.mrf.mxu0
    %v2618 = vadd.f32 %v2439, %v2617
    %2619 = vmatprep.mubr.f32.mxu0 %v1771
    %2620 = vmatmul.mubr.f32.gmra.mxu0 %v1770
    %v2621 = vpop.f32.mrf.mxu0
    %v2622 = vadd.f32 %v2435, %v2621
    %v2623 = vpop.f32.mrf.mxu0
    %v2624 = vadd.f32 %v2439, %v2623
    %2625 = vmatprep.mubr.f32.mxu0 %v1783
    %2626 = vmatmul.mubr.f32.gmra.mxu0 %v1782
    %v2627 = vpop.f32.mrf.mxu0
    %v2628 = vadd.f32 %v2435, %v2627
    %v2629 = vpop.f32.mrf.mxu0
    %v2630 = vadd.f32 %v2439, %v2629
    %2631 = vmatprep.mubr.f32.mxu0 %v1795
    %2632 = vmatmul.mubr.f32.gmra.mxu0 %v1794
    %v2633 = vpop.f32.mrf.mxu0
    %v2634 = vadd.f32 %v2435, %v2633
    %v2635 = vpop.f32.mrf.mxu0
    %v2636 = vadd.f32 %v2439, %v2635
    %2637 = vmatprep.mubr.f32.mxu0 %v1807
    %2638 = vmatmul.mubr.f32.gmra.mxu0 %v1806
    %v2639 = vpop.f32.mrf.mxu0
    %v2640 = vadd.f32 %v2435, %v2639
    %v2641 = vpop.f32.mrf.mxu0
    %v2642 = vadd.f32 %v2439, %v2641
    %2643 = vmatprep.mubr.f32.mxu0 %v1819
    %2644 = vmatmul.mubr.f32.gmra.mxu0 %v1818
    %v2645 = vpop.f32.mrf.mxu0
    %v2646 = vadd.f32 %v2435, %v2645
    %v2647 = vpop.f32.mrf.mxu0
    %v2648 = vadd.f32 %v2439, %v2647
    %2649 = vmatprep.mubr.f32.mxu0 %v1831
    %2650 = vmatmul.mubr.f32.gmra.mxu0 %v1830
    %v2651 = vpop.f32.mrf.mxu0
    %v2652 = vadd.f32 %v2435, %v2651
    %v2653 = vpop.f32.mrf.mxu0
    %v2654 = vadd.f32 %v2439, %v2653
    %2655 = vmatprep.mubr.f32.mxu0 %v1843
    %2656 = vmatmul.mubr.f32.gmra.mxu0 %v1842
    %v2657 = vpop.f32.mrf.mxu0
    %v2658 = vadd.f32 %v2435, %v2657
    %v2659 = vpop.f32.mrf.mxu0
    %v2660 = vadd.f32 %v2439, %v2659
    %2661 = vdwg.mxu0
    %2662 = vmatprep.subr.mxu0 %v2037
    %2663 = vmatpush1.xpose.msra.mxu0 %v2036
    %2664 = vmatprep.subr.mxu0 %v2025
    %2665 = vmatpush1.xpose.msra.mxu0 %v2024
    %2666 = vmatprep.subr.mxu0 %v2013
    %2667 = vmatpush1.xpose.msra.mxu0 %v2012
    %2668 = vmatprep.subr.mxu0 %v2001
    %2669 = vmatpush1.xpose.msra.mxu0 %v2000
    %2670 = vmatprep.subr.mxu0 %v1989
    %2671 = vmatpush1.xpose.msra.mxu0 %v1988
    %2672 = vmatprep.subr.mxu0 %v1977
    %2673 = vmatpush1.xpose.msra.mxu0 %v1976
    %2674 = vmatprep.subr.mxu0 %v1965
    %2675 = vmatpush1.xpose.msra.mxu0 %v1964
    %2676 = vmatprep.subr.mxu0 %v1953
    %2677 = vmatpush1.xpose.msra.mxu0 %v1952
    %2678 = vmatprep.subr.mxu0 %v1941
    %2679 = vmatpush1.xpose.msra.mxu0 %v1940
    %2680 = vmatprep.subr.mxu0 %v1929
    %2681 = vmatpush1.xpose.msra.mxu0 %v1928
    %2682 = vmatprep.subr.mxu0 %v1917
    %2683 = vmatpush1.xpose.msra.mxu0 %v1916
    %2684 = vmatprep.subr.mxu0 %v1905
    %2685 = vmatpush1.xpose.msra.mxu0 %v1904
    %2686 = vmatprep.subr.mxu0 %v1893
    %2687 = vmatpush1.xpose.msra.mxu0 %v1892
    %2688 = vmatprep.subr.mxu0 %v1881
    %2689 = vmatpush1.xpose.msra.mxu0 %v1880
    %2690 = vmatprep.subr.mxu0 %v1869
    %2691 = vmatpush1.xpose.msra.mxu0 %v1868
    %2692 = vmatprep.subr.mxu0 %v1857
    %2693 = vmatpush1.xpose.msra.mxu0 %v1856
    %2694 = vmatprep.subr.mxu0 %v2229
    %2695 = vmatpush2.xpose.msra.mxu0 %v2228
    %2696 = vmatprep.subr.mxu0 %v2217
    %2697 = vmatpush2.xpose.msra.mxu0 %v2216
    %2698 = vmatprep.subr.mxu0 %v2205
    %2699 = vmatpush2.xpose.msra.mxu0 %v2204
    %2700 = vmatprep.subr.mxu0 %v2193
    %2701 = vmatpush2.xpose.msra.mxu0 %v2192
    %2702 = vmatprep.subr.mxu0 %v2181
    %2703 = vmatpush2.xpose.msra.mxu0 %v2180
    %2704 = vmatprep.subr.mxu0 %v2169
    %2705 = vmatpush2.xpose.msra.mxu0 %v2168
    %2706 = vmatprep.subr.mxu0 %v2157
    %2707 = vmatpush2.xpose.msra.mxu0 %v2156
    %2708 = vmatprep.subr.mxu0 %v2145
    %2709 = vmatpush2.xpose.msra.mxu0 %v2144
    %2710 = vmatprep.subr.mxu0 %v2133
    %2711 = vmatpush2.xpose.msra.mxu0 %v2132
    %2712 = vmatprep.subr.mxu0 %v2121
    %2713 = vmatpush2.xpose.msra.mxu0 %v2120
    %2714 = vmatprep.subr.mxu0 %v2109
    %2715 = vmatpush2.xpose.msra.mxu0 %v2108
    %2716 = vmatprep.subr.mxu0 %v2097
    %2717 = vmatpush2.xpose.msra.mxu0 %v2096
    %2718 = vmatprep.subr.mxu0 %v2085
    %2719 = vmatpush2.xpose.msra.mxu0 %v2084
    %2720 = vmatprep.subr.mxu0 %v2073
    %2721 = vmatpush2.xpose.msra.mxu0 %v2072
    %2722 = vmatprep.subr.mxu0 %v2061
    %2723 = vmatpush2.xpose.msra.mxu0 %v2060
    %2724 = vmatprep.subr.mxu0 %v2049
    %2725 = vmatpush2.xpose.msra.mxu0 %v2048
    %2726 = vmatprep.mubr.f32.mxu0 %v1557
    %2727 = vmatmul.mubr.f32.gmra.mxu0 %v1556
    %v2728 = vpop.f32.mrf.mxu0
    %v2729 = vadd.f32 %v2514, %v2728
    %v2730 = vpop.f32.mrf.mxu0
    %v2731 = vadd.f32 %v2516, %v2730
    %2732 = vmatprep.mubr.f32.mxu0 %v1569
    %2733 = vmatmul.mubr.f32.gmra.mxu0 %v1568
    %v2734 = vpop.f32.mrf.mxu0
    %v2735 = vadd.f32 %v2520, %v2734
    %v2736 = vpop.f32.mrf.mxu0
    %v2737 = vadd.f32 %v2522, %v2736
    %2738 = vmatprep.mubr.f32.mxu0 %v1581
    %2739 = vmatmul.mubr.f32.gmra.mxu0 %v1580
    %v2740 = vpop.f32.mrf.mxu0
    %v2741 = vadd.f32 %v2526, %v2740
    %v2742 = vpop.f32.mrf.mxu0
    %v2743 = vadd.f32 %v2528, %v2742
    %2744 = vmatprep.mubr.f32.mxu0 %v1593
    %2745 = vmatmul.mubr.f32.gmra.mxu0 %v1592
    %v2746 = vpop.f32.mrf.mxu0
    %v2747 = vadd.f32 %v2532, %v2746
    %v2748 = vpop.f32.mrf.mxu0
    %v2749 = vadd.f32 %v2534, %v2748
    %2750 = vmatprep.mubr.f32.mxu0 %v1605
    %2751 = vmatmul.mubr.f32.gmra.mxu0 %v1604
    %v2752 = vpop.f32.mrf.mxu0
    %v2753 = vadd.f32 %v2538, %v2752
    %v2754 = vpop.f32.mrf.mxu0
    %v2755 = vadd.f32 %v2540, %v2754
    %2756 = vmatprep.mubr.f32.mxu0 %v1617
    %2757 = vmatmul.mubr.f32.gmra.mxu0 %v1616
    %v2758 = vpop.f32.mrf.mxu0
    %v2759 = vadd.f32 %v2544, %v2758
    %v2760 = vpop.f32.mrf.mxu0
    %v2761 = vadd.f32 %v2546, %v2760
    %2762 = vmatprep.mubr.f32.mxu0 %v1629
    %2763 = vmatmul.mubr.f32.gmra.mxu0 %v1628
    %v2764 = vpop.f32.mrf.mxu0
    %v2765 = vadd.f32 %v2550, %v2764
    %v2766 = vpop.f32.mrf.mxu0
    %v2767 = vadd.f32 %v2552, %v2766
    %2768 = vmatprep.mubr.f32.mxu0 %v1641
    %2769 = vmatmul.mubr.f32.gmra.mxu0 %v1640
    %v2770 = vpop.f32.mrf.mxu0
    %v2771 = vadd.f32 %v2556, %v2770
    %v2772 = vpop.f32.mrf.mxu0
    %v2773 = vadd.f32 %v2558, %v2772
    %2774 = vmatprep.mubr.f32.mxu0 %v1653
    %2775 = vmatmul.mubr.f32.gmra.mxu0 %v1652
    %v2776 = vpop.f32.mrf.mxu0
    %v2777 = vadd.f32 %v2562, %v2776
    %v2778 = vpop.f32.mrf.mxu0
    %v2779 = vadd.f32 %v2564, %v2778
    %2780 = vmatprep.mubr.f32.mxu0 %v1665
    %2781 = vmatmul.mubr.f32.gmra.mxu0 %v1664
    %v2782 = vpop.f32.mrf.mxu0
    %v2783 = vadd.f32 %v2568, %v2782
    %v2784 = vpop.f32.mrf.mxu0
    %v2785 = vadd.f32 %v2570, %v2784
    %2786 = vmatprep.mubr.f32.mxu0 %v1677
    %2787 = vmatmul.mubr.f32.gmra.mxu0 %v1676
    %v2788 = vpop.f32.mrf.mxu0
    %v2789 = vadd.f32 %v2574, %v2788
    %v2790 = vpop.f32.mrf.mxu0
    %v2791 = vadd.f32 %v2576, %v2790
    %2792 = vmatprep.mubr.f32.mxu0 %v1689
    %2793 = vmatmul.mubr.f32.gmra.mxu0 %v1688
    %v2794 = vpop.f32.mrf.mxu0
    %v2795 = vadd.f32 %v2580, %v2794
    %v2796 = vpop.f32.mrf.mxu0
    %v2797 = vadd.f32 %v2582, %v2796
    %2798 = vmatprep.mubr.f32.mxu0 %v1701
    %2799 = vmatmul.mubr.f32.gmra.mxu0 %v1700
    %v2800 = vpop.f32.mrf.mxu0
    %v2801 = vadd.f32 %v2586, %v2800
    %v2802 = vpop.f32.mrf.mxu0
    %v2803 = vadd.f32 %v2588, %v2802
    %2804 = vmatprep.mubr.f32.mxu0 %v1713
    %2805 = vmatmul.mubr.f32.gmra.mxu0 %v1712
    %v2806 = vpop.f32.mrf.mxu0
    %v2807 = vadd.f32 %v2592, %v2806
    %v2808 = vpop.f32.mrf.mxu0
    %v2809 = vadd.f32 %v2594, %v2808
    %2810 = vmatprep.mubr.f32.mxu0 %v1725
    %2811 = vmatmul.mubr.f32.gmra.mxu0 %v1724
    %v2812 = vpop.f32.mrf.mxu0
    %v2813 = vadd.f32 %v2598, %v2812
    %v2814 = vpop.f32.mrf.mxu0
    %v2815 = vadd.f32 %v2600, %v2814
    %2816 = vmatprep.mubr.f32.mxu0 %v1737
    %2817 = vmatmul.mubr.f32.gmra.mxu0 %v1736
    %v2818 = vpop.f32.mrf.mxu0
    %v2819 = vadd.f32 %v2604, %v2818
    %v2820 = vpop.f32.mrf.mxu0
    %v2821 = vadd.f32 %v2606, %v2820
    %2822 = vmatprep.mubr.f32.mxu0 %v1749
    %2823 = vmatmul.mubr.f32.gmra.mxu0 %v1748
    %v2824 = vpop.f32.mrf.mxu0
    %v2825 = vadd.f32 %v2610, %v2824
    %v2826 = vpop.f32.mrf.mxu0
    %v2827 = vadd.f32 %v2612, %v2826
    %2828 = vmatprep.mubr.f32.mxu0 %v1761
    %2829 = vmatmul.mubr.f32.gmra.mxu0 %v1760
    %v2830 = vpop.f32.mrf.mxu0
    %v2831 = vadd.f32 %v2616, %v2830
    %v2832 = vpop.f32.mrf.mxu0
    %v2833 = vadd.f32 %v2618, %v2832
    %2834 = vmatprep.mubr.f32.mxu0 %v1773
    %2835 = vmatmul.mubr.f32.gmra.mxu0 %v1772
    %v2836 = vpop.f32.mrf.mxu0
    %v2837 = vadd.f32 %v2622, %v2836
    %v2838 = vpop.f32.mrf.mxu0
    %v2839 = vadd.f32 %v2624, %v2838
    %2840 = vmatprep.mubr.f32.mxu0 %v1785
    %2841 = vmatmul.mubr.f32.gmra.mxu0 %v1784
    %v2842 = vpop.f32.mrf.mxu0
    %v2843 = vadd.f32 %v2628, %v2842
    %v2844 = vpop.f32.mrf.mxu0
    %v2845 = vadd.f32 %v2630, %v2844
    %2846 = vmatprep.mubr.f32.mxu0 %v1797
    %2847 = vmatmul.mubr.f32.gmra.mxu0 %v1796
    %v2848 = vpop.f32.mrf.mxu0
    %v2849 = vadd.f32 %v2634, %v2848
    %v2850 = vpop.f32.mrf.mxu0
    %v2851 = vadd.f32 %v2636, %v2850
    %2852 = vmatprep.mubr.f32.mxu0 %v1809
    %2853 = vmatmul.mubr.f32.gmra.mxu0 %v1808
    %v2854 = vpop.f32.mrf.mxu0
    %v2855 = vadd.f32 %v2640, %v2854
    %v2856 = vpop.f32.mrf.mxu0
    %v2857 = vadd.f32 %v2642, %v2856
    %2858 = vmatprep.mubr.f32.mxu0 %v1821
    %2859 = vmatmul.mubr.f32.gmra.mxu0 %v1820
    %v2860 = vpop.f32.mrf.mxu0
    %v2861 = vadd.f32 %v2646, %v2860
    %v2862 = vpop.f32.mrf.mxu0
    %v2863 = vadd.f32 %v2648, %v2862
    %2864 = vmatprep.mubr.f32.mxu0 %v1833
    %2865 = vmatmul.mubr.f32.gmra.mxu0 %v1832
    %v2866 = vpop.f32.mrf.mxu0
    %v2867 = vadd.f32 %v2652, %v2866
    %v2868 = vpop.f32.mrf.mxu0
    %v2869 = vadd.f32 %v2654, %v2868
    %2870 = vmatprep.mubr.f32.mxu0 %v1845
    %2871 = vmatmul.mubr.f32.gmra.mxu0 %v1844
    %v2872 = vpop.f32.mrf.mxu0
    %v2873 = vadd.f32 %v2658, %v2872
    %v2874 = vpop.f32.mrf.mxu0
    %v2875 = vadd.f32 %v2660, %v2874
    %2876 = vdwg.mxu0
    %2877 = vmatprep.subr.mxu0 %v2039
    %2878 = vmatpush1.xpose.msra.mxu0 %v2038
    %2879 = vmatprep.subr.mxu0 %v2027
    %2880 = vmatpush1.xpose.msra.mxu0 %v2026
    %2881 = vmatprep.subr.mxu0 %v2015
    %2882 = vmatpush1.xpose.msra.mxu0 %v2014
    %2883 = vmatprep.subr.mxu0 %v2003
    %2884 = vmatpush1.xpose.msra.mxu0 %v2002
    %2885 = vmatprep.subr.mxu0 %v1991
    %2886 = vmatpush1.xpose.msra.mxu0 %v1990
    %2887 = vmatprep.subr.mxu0 %v1979
    %2888 = vmatpush1.xpose.msra.mxu0 %v1978
    %2889 = vmatprep.subr.mxu0 %v1967
    %2890 = vmatpush1.xpose.msra.mxu0 %v1966
    %2891 = vmatprep.subr.mxu0 %v1955
    %2892 = vmatpush1.xpose.msra.mxu0 %v1954
    %2893 = vmatprep.subr.mxu0 %v1943
    %2894 = vmatpush1.xpose.msra.mxu0 %v1942
    %2895 = vmatprep.subr.mxu0 %v1931
    %2896 = vmatpush1.xpose.msra.mxu0 %v1930
    %2897 = vmatprep.subr.mxu0 %v1919
    %2898 = vmatpush1.xpose.msra.mxu0 %v1918
    %2899 = vmatprep.subr.mxu0 %v1907
    %2900 = vmatpush1.xpose.msra.mxu0 %v1906
    %2901 = vmatprep.subr.mxu0 %v1895
    %2902 = vmatpush1.xpose.msra.mxu0 %v1894
    %2903 = vmatprep.subr.mxu0 %v1883
    %2904 = vmatpush1.xpose.msra.mxu0 %v1882
    %2905 = vmatprep.subr.mxu0 %v1871
    %2906 = vmatpush1.xpose.msra.mxu0 %v1870
    %2907 = vmatprep.subr.mxu0 %v1859
    %2908 = vmatpush1.xpose.msra.mxu0 %v1858
    %2909 = vmatprep.subr.mxu0 %v2231
    %2910 = vmatpush2.xpose.msra.mxu0 %v2230
    %2911 = vmatprep.subr.mxu0 %v2219
    %2912 = vmatpush2.xpose.msra.mxu0 %v2218
    %2913 = vmatprep.subr.mxu0 %v2207
    %2914 = vmatpush2.xpose.msra.mxu0 %v2206
    %2915 = vmatprep.subr.mxu0 %v2195
    %2916 = vmatpush2.xpose.msra.mxu0 %v2194
    %2917 = vmatprep.subr.mxu0 %v2183
    %2918 = vmatpush2.xpose.msra.mxu0 %v2182
    %2919 = vmatprep.subr.mxu0 %v2171
    %2920 = vmatpush2.xpose.msra.mxu0 %v2170
    %2921 = vmatprep.subr.mxu0 %v2159
    %2922 = vmatpush2.xpose.msra.mxu0 %v2158
    %2923 = vmatprep.subr.mxu0 %v2147
    %2924 = vmatpush2.xpose.msra.mxu0 %v2146
    %2925 = vmatprep.subr.mxu0 %v2135
    %2926 = vmatpush2.xpose.msra.mxu0 %v2134
    %2927 = vmatprep.subr.mxu0 %v2123
    %2928 = vmatpush2.xpose.msra.mxu0 %v2122
    %2929 = vmatprep.subr.mxu0 %v2111
    %2930 = vmatpush2.xpose.msra.mxu0 %v2110
    %2931 = vmatprep.subr.mxu0 %v2099
    %2932 = vmatpush2.xpose.msra.mxu0 %v2098
    %2933 = vmatprep.subr.mxu0 %v2087
    %2934 = vmatpush2.xpose.msra.mxu0 %v2086
    %2935 = vmatprep.subr.mxu0 %v2075
    %2936 = vmatpush2.xpose.msra.mxu0 %v2074
    %2937 = vmatprep.subr.mxu0 %v2063
    %2938 = vmatpush2.xpose.msra.mxu0 %v2062
    %2939 = vmatprep.subr.mxu0 %v2051
    %2940 = vmatpush2.xpose.msra.mxu0 %v2050
    %2941 = vmatprep.mubr.f32.mxu0 %v1559
    %2942 = vmatmul.mubr.f32.gmra.mxu0 %v1558
    %v2943 = vpop.f32.mrf.mxu0
    %v2944 = vadd.f32 %v2729, %v2943
    %v2945 = vpop.f32.mrf.mxu0
    %v2946 = vadd.f32 %v2731, %v2945
    %2947 = vmatprep.mubr.f32.mxu0 %v1571
    %2948 = vmatmul.mubr.f32.gmra.mxu0 %v1570
    %v2949 = vpop.f32.mrf.mxu0
    %v2950 = vadd.f32 %v2735, %v2949
    %v2951 = vpop.f32.mrf.mxu0
    %v2952 = vadd.f32 %v2737, %v2951
    %2953 = vmatprep.mubr.f32.mxu0 %v1583
    %2954 = vmatmul.mubr.f32.gmra.mxu0 %v1582
    %v2955 = vpop.f32.mrf.mxu0
    %v2956 = vadd.f32 %v2741, %v2955
    %v2957 = vpop.f32.mrf.mxu0
    %v2958 = vadd.f32 %v2743, %v2957
    %2959 = vmatprep.mubr.f32.mxu0 %v1595
    %2960 = vmatmul.mubr.f32.gmra.mxu0 %v1594
    %v2961 = vpop.f32.mrf.mxu0
    %v2962 = vadd.f32 %v2747, %v2961
    %v2963 = vpop.f32.mrf.mxu0
    %v2964 = vadd.f32 %v2749, %v2963
    %2965 = vmatprep.mubr.f32.mxu0 %v1607
    %2966 = vmatmul.mubr.f32.gmra.mxu0 %v1606
    %v2967 = vpop.f32.mrf.mxu0
    %v2968 = vadd.f32 %v2753, %v2967
    %v2969 = vpop.f32.mrf.mxu0
    %v2970 = vadd.f32 %v2755, %v2969
    %2971 = vmatprep.mubr.f32.mxu0 %v1619
    %2972 = vmatmul.mubr.f32.gmra.mxu0 %v1618
    %v2973 = vpop.f32.mrf.mxu0
    %v2974 = vadd.f32 %v2759, %v2973
    %v2975 = vpop.f32.mrf.mxu0
    %v2976 = vadd.f32 %v2761, %v2975
    %2977 = vmatprep.mubr.f32.mxu0 %v1631
    %2978 = vmatmul.mubr.f32.gmra.mxu0 %v1630
    %v2979 = vpop.f32.mrf.mxu0
    %v2980 = vadd.f32 %v2765, %v2979
    %v2981 = vpop.f32.mrf.mxu0
    %v2982 = vadd.f32 %v2767, %v2981
    %2983 = vmatprep.mubr.f32.mxu0 %v1643
    %2984 = vmatmul.mubr.f32.gmra.mxu0 %v1642
    %v2985 = vpop.f32.mrf.mxu0
    %v2986 = vadd.f32 %v2771, %v2985
    %v2987 = vpop.f32.mrf.mxu0
    %v2988 = vadd.f32 %v2773, %v2987
    %2989 = vmatprep.mubr.f32.mxu0 %v1655
    %2990 = vmatmul.mubr.f32.gmra.mxu0 %v1654
    %v2991 = vpop.f32.mrf.mxu0
    %v2992 = vadd.f32 %v2777, %v2991
    %v2993 = vpop.f32.mrf.mxu0
    %v2994 = vadd.f32 %v2779, %v2993
    %2995 = vmatprep.mubr.f32.mxu0 %v1667
    %2996 = vmatmul.mubr.f32.gmra.mxu0 %v1666
    %v2997 = vpop.f32.mrf.mxu0
    %v2998 = vadd.f32 %v2783, %v2997
    %v2999 = vpop.f32.mrf.mxu0
    %v3000 = vadd.f32 %v2785, %v2999
    %3001 = vmatprep.mubr.f32.mxu0 %v1679
    %3002 = vmatmul.mubr.f32.gmra.mxu0 %v1678
    %v3003 = vpop.f32.mrf.mxu0
    %v3004 = vadd.f32 %v2789, %v3003
    %v3005 = vpop.f32.mrf.mxu0
    %v3006 = vadd.f32 %v2791, %v3005
    %3007 = vmatprep.mubr.f32.mxu0 %v1691
    %3008 = vmatmul.mubr.f32.gmra.mxu0 %v1690
    %v3009 = vpop.f32.mrf.mxu0
    %v3010 = vadd.f32 %v2795, %v3009
    %v3011 = vpop.f32.mrf.mxu0
    %v3012 = vadd.f32 %v2797, %v3011
    %3013 = vmatprep.mubr.f32.mxu0 %v1703
    %3014 = vmatmul.mubr.f32.gmra.mxu0 %v1702
    %v3015 = vpop.f32.mrf.mxu0
    %v3016 = vadd.f32 %v2801, %v3015
    %v3017 = vpop.f32.mrf.mxu0
    %v3018 = vadd.f32 %v2803, %v3017
    %3019 = vmatprep.mubr.f32.mxu0 %v1715
    %3020 = vmatmul.mubr.f32.gmra.mxu0 %v1714
    %v3021 = vpop.f32.mrf.mxu0
    %v3022 = vadd.f32 %v2807, %v3021
    %v3023 = vpop.f32.mrf.mxu0
    %v3024 = vadd.f32 %v2809, %v3023
    %3025 = vmatprep.mubr.f32.mxu0 %v1727
    %3026 = vmatmul.mubr.f32.gmra.mxu0 %v1726
    %v3027 = vpop.f32.mrf.mxu0
    %v3028 = vadd.f32 %v2813, %v3027
    %v3029 = vpop.f32.mrf.mxu0
    %v3030 = vadd.f32 %v2815, %v3029
    %3031 = vmatprep.mubr.f32.mxu0 %v1739
    %3032 = vmatmul.mubr.f32.gmra.mxu0 %v1738
    %v3033 = vpop.f32.mrf.mxu0
    %v3034 = vadd.f32 %v2819, %v3033
    %v3035 = vpop.f32.mrf.mxu0
    %v3036 = vadd.f32 %v2821, %v3035
    %3037 = vmatprep.mubr.f32.mxu0 %v1751
    %3038 = vmatmul.mubr.f32.gmra.mxu0 %v1750
    %v3039 = vpop.f32.mrf.mxu0
    %v3040 = vadd.f32 %v2825, %v3039
    %v3041 = vpop.f32.mrf.mxu0
    %v3042 = vadd.f32 %v2827, %v3041
    %3043 = vmatprep.mubr.f32.mxu0 %v1763
    %3044 = vmatmul.mubr.f32.gmra.mxu0 %v1762
    %v3045 = vpop.f32.mrf.mxu0
    %v3046 = vadd.f32 %v2831, %v3045
    %v3047 = vpop.f32.mrf.mxu0
    %v3048 = vadd.f32 %v2833, %v3047
    %3049 = vmatprep.mubr.f32.mxu0 %v1775
    %3050 = vmatmul.mubr.f32.gmra.mxu0 %v1774
    %v3051 = vpop.f32.mrf.mxu0
    %v3052 = vadd.f32 %v2837, %v3051
    %v3053 = vpop.f32.mrf.mxu0
    %v3054 = vadd.f32 %v2839, %v3053
    %3055 = vmatprep.mubr.f32.mxu0 %v1787
    %3056 = vmatmul.mubr.f32.gmra.mxu0 %v1786
    %v3057 = vpop.f32.mrf.mxu0
    %v3058 = vadd.f32 %v2843, %v3057
    %v3059 = vpop.f32.mrf.mxu0
    %v3060 = vadd.f32 %v2845, %v3059
    %3061 = vmatprep.mubr.f32.mxu0 %v1799
    %3062 = vmatmul.mubr.f32.gmra.mxu0 %v1798
    %v3063 = vpop.f32.mrf.mxu0
    %v3064 = vadd.f32 %v2849, %v3063
    %v3065 = vpop.f32.mrf.mxu0
    %v3066 = vadd.f32 %v2851, %v3065
    %3067 = vmatprep.mubr.f32.mxu0 %v1811
    %3068 = vmatmul.mubr.f32.gmra.mxu0 %v1810
    %v3069 = vpop.f32.mrf.mxu0
    %v3070 = vadd.f32 %v2855, %v3069
    %v3071 = vpop.f32.mrf.mxu0
    %v3072 = vadd.f32 %v2857, %v3071
    %3073 = vmatprep.mubr.f32.mxu0 %v1823
    %3074 = vmatmul.mubr.f32.gmra.mxu0 %v1822
    %v3075 = vpop.f32.mrf.mxu0
    %v3076 = vadd.f32 %v2861, %v3075
    %v3077 = vpop.f32.mrf.mxu0
    %v3078 = vadd.f32 %v2863, %v3077
    %3079 = vmatprep.mubr.f32.mxu0 %v1835
    %3080 = vmatmul.mubr.f32.gmra.mxu0 %v1834
    %v3081 = vpop.f32.mrf.mxu0
    %v3082 = vadd.f32 %v2867, %v3081
    %v3083 = vpop.f32.mrf.mxu0
    %v3084 = vadd.f32 %v2869, %v3083
    %3085 = vmatprep.mubr.f32.mxu0 %v1847
    %3086 = vmatmul.mubr.f32.gmra.mxu0 %v1846
    %v3087 = vpop.f32.mrf.mxu0
    %v3088 = vadd.f32 %v2873, %v3087
    %v3089 = vpop.f32.mrf.mxu0
    %v3090 = vadd.f32 %v2875, %v3089
    %3091 = vdwg.mxu0
    %3092 = vmatprep.subr.mxu0 %v2041
    %3093 = vmatpush1.xpose.msra.mxu0 %v2040
    %3094 = vmatprep.subr.mxu0 %v2029
    %3095 = vmatpush1.xpose.msra.mxu0 %v2028
    %3096 = vmatprep.subr.mxu0 %v2017
    %3097 = vmatpush1.xpose.msra.mxu0 %v2016
    %3098 = vmatprep.subr.mxu0 %v2005
    %3099 = vmatpush1.xpose.msra.mxu0 %v2004
    %3100 = vmatprep.subr.mxu0 %v1993
    %3101 = vmatpush1.xpose.msra.mxu0 %v1992
    %3102 = vmatprep.subr.mxu0 %v1981
    %3103 = vmatpush1.xpose.msra.mxu0 %v1980
    %3104 = vmatprep.subr.mxu0 %v1969
    %3105 = vmatpush1.xpose.msra.mxu0 %v1968
    %3106 = vmatprep.subr.mxu0 %v1957
    %3107 = vmatpush1.xpose.msra.mxu0 %v1956
    %3108 = vmatprep.subr.mxu0 %v1945
    %3109 = vmatpush1.xpose.msra.mxu0 %v1944
    %3110 = vmatprep.subr.mxu0 %v1933
    %3111 = vmatpush1.xpose.msra.mxu0 %v1932
    %3112 = vmatprep.subr.mxu0 %v1921
    %3113 = vmatpush1.xpose.msra.mxu0 %v1920
    %3114 = vmatprep.subr.mxu0 %v1909
    %3115 = vmatpush1.xpose.msra.mxu0 %v1908
    %3116 = vmatprep.subr.mxu0 %v1897
    %3117 = vmatpush1.xpose.msra.mxu0 %v1896
    %3118 = vmatprep.subr.mxu0 %v1885
    %3119 = vmatpush1.xpose.msra.mxu0 %v1884
    %3120 = vmatprep.subr.mxu0 %v1873
    %3121 = vmatpush1.xpose.msra.mxu0 %v1872
    %3122 = vmatprep.subr.mxu0 %v1861
    %3123 = vmatpush1.xpose.msra.mxu0 %v1860
    %3124 = vmatprep.subr.mxu0 %v2233
    %3125 = vmatpush2.xpose.msra.mxu0 %v2232
    %3126 = vmatprep.subr.mxu0 %v2221
    %3127 = vmatpush2.xpose.msra.mxu0 %v2220
    %3128 = vmatprep.subr.mxu0 %v2209
    %3129 = vmatpush2.xpose.msra.mxu0 %v2208
    %3130 = vmatprep.subr.mxu0 %v2197
    %3131 = vmatpush2.xpose.msra.mxu0 %v2196
    %3132 = vmatprep.subr.mxu0 %v2185
    %3133 = vmatpush2.xpose.msra.mxu0 %v2184
    %3134 = vmatprep.subr.mxu0 %v2173
    %3135 = vmatpush2.xpose.msra.mxu0 %v2172
    %3136 = vmatprep.subr.mxu0 %v2161
    %3137 = vmatpush2.xpose.msra.mxu0 %v2160
    %3138 = vmatprep.subr.mxu0 %v2149
    %3139 = vmatpush2.xpose.msra.mxu0 %v2148
    %3140 = vmatprep.subr.mxu0 %v2137
    %3141 = vmatpush2.xpose.msra.mxu0 %v2136
    %3142 = vmatprep.subr.mxu0 %v2125
    %3143 = vmatpush2.xpose.msra.mxu0 %v2124
    %3144 = vmatprep.subr.mxu0 %v2113
    %3145 = vmatpush2.xpose.msra.mxu0 %v2112
    %3146 = vmatprep.subr.mxu0 %v2101
    %3147 = vmatpush2.xpose.msra.mxu0 %v2100
    %3148 = vmatprep.subr.mxu0 %v2089
    %3149 = vmatpush2.xpose.msra.mxu0 %v2088
    %3150 = vmatprep.subr.mxu0 %v2077
    %3151 = vmatpush2.xpose.msra.mxu0 %v2076
    %3152 = vmatprep.subr.mxu0 %v2065
    %3153 = vmatpush2.xpose.msra.mxu0 %v2064
    %3154 = vmatprep.subr.mxu0 %v2053
    %3155 = vmatpush2.xpose.msra.mxu0 %v2052
    %3156 = vmatprep.mubr.f32.mxu0 %v1561
    %3157 = vmatmul.mubr.f32.gmra.mxu0 %v1560
    %v3158 = vpop.f32.mrf.mxu0
    %v3159 = vadd.f32 %v2944, %v3158
    %v3160 = vpop.f32.mrf.mxu0
    %v3161 = vadd.f32 %v2946, %v3160
    %3162 = vmatprep.mubr.f32.mxu0 %v1573
    %3163 = vmatmul.mubr.f32.gmra.mxu0 %v1572
    %v3164 = vpop.f32.mrf.mxu0
    %v3165 = vadd.f32 %v2950, %v3164
    %v3166 = vpop.f32.mrf.mxu0
    %v3167 = vadd.f32 %v2952, %v3166
    %3168 = vmatprep.mubr.f32.mxu0 %v1585
    %3169 = vmatmul.mubr.f32.gmra.mxu0 %v1584
    %v3170 = vpop.f32.mrf.mxu0
    %v3171 = vadd.f32 %v2956, %v3170
    %v3172 = vpop.f32.mrf.mxu0
    %v3173 = vadd.f32 %v2958, %v3172
    %3174 = vmatprep.mubr.f32.mxu0 %v1597
    %3175 = vmatmul.mubr.f32.gmra.mxu0 %v1596
    %v3176 = vpop.f32.mrf.mxu0
    %v3177 = vadd.f32 %v2962, %v3176
    %v3178 = vpop.f32.mrf.mxu0
    %v3179 = vadd.f32 %v2964, %v3178
    %3180 = vmatprep.mubr.f32.mxu0 %v1609
    %3181 = vmatmul.mubr.f32.gmra.mxu0 %v1608
    %v3182 = vpop.f32.mrf.mxu0
    %v3183 = vadd.f32 %v2968, %v3182
    %v3184 = vpop.f32.mrf.mxu0
    %v3185 = vadd.f32 %v2970, %v3184
    %3186 = vmatprep.mubr.f32.mxu0 %v1621
    %3187 = vmatmul.mubr.f32.gmra.mxu0 %v1620
    %v3188 = vpop.f32.mrf.mxu0
    %v3189 = vadd.f32 %v2974, %v3188
    %v3190 = vpop.f32.mrf.mxu0
    %v3191 = vadd.f32 %v2976, %v3190
    %3192 = vmatprep.mubr.f32.mxu0 %v1633
    %3193 = vmatmul.mubr.f32.gmra.mxu0 %v1632
    %v3194 = vpop.f32.mrf.mxu0
    %v3195 = vadd.f32 %v2980, %v3194
    %v3196 = vpop.f32.mrf.mxu0
    %v3197 = vadd.f32 %v2982, %v3196
    %3198 = vmatprep.mubr.f32.mxu0 %v1645
    %3199 = vmatmul.mubr.f32.gmra.mxu0 %v1644
    %v3200 = vpop.f32.mrf.mxu0
    %v3201 = vadd.f32 %v2986, %v3200
    %v3202 = vpop.f32.mrf.mxu0
    %v3203 = vadd.f32 %v2988, %v3202
    %3204 = vmatprep.mubr.f32.mxu0 %v1657
    %3205 = vmatmul.mubr.f32.gmra.mxu0 %v1656
    %v3206 = vpop.f32.mrf.mxu0
    %v3207 = vadd.f32 %v2992, %v3206
    %v3208 = vpop.f32.mrf.mxu0
    %v3209 = vadd.f32 %v2994, %v3208
    %3210 = vmatprep.mubr.f32.mxu0 %v1669
    %3211 = vmatmul.mubr.f32.gmra.mxu0 %v1668
    %v3212 = vpop.f32.mrf.mxu0
    %v3213 = vadd.f32 %v2998, %v3212
    %v3214 = vpop.f32.mrf.mxu0
    %v3215 = vadd.f32 %v3000, %v3214
    %3216 = vmatprep.mubr.f32.mxu0 %v1681
    %3217 = vmatmul.mubr.f32.gmra.mxu0 %v1680
    %v3218 = vpop.f32.mrf.mxu0
    %v3219 = vadd.f32 %v3004, %v3218
    %v3220 = vpop.f32.mrf.mxu0
    %v3221 = vadd.f32 %v3006, %v3220
    %3222 = vmatprep.mubr.f32.mxu0 %v1693
    %3223 = vmatmul.mubr.f32.gmra.mxu0 %v1692
    %v3224 = vpop.f32.mrf.mxu0
    %v3225 = vadd.f32 %v3010, %v3224
    %v3226 = vpop.f32.mrf.mxu0
    %v3227 = vadd.f32 %v3012, %v3226
    %3228 = vmatprep.mubr.f32.mxu0 %v1705
    %3229 = vmatmul.mubr.f32.gmra.mxu0 %v1704
    %v3230 = vpop.f32.mrf.mxu0
    %v3231 = vadd.f32 %v3016, %v3230
    %v3232 = vpop.f32.mrf.mxu0
    %v3233 = vadd.f32 %v3018, %v3232
    %3234 = vmatprep.mubr.f32.mxu0 %v1717
    %3235 = vmatmul.mubr.f32.gmra.mxu0 %v1716
    %v3236 = vpop.f32.mrf.mxu0
    %v3237 = vadd.f32 %v3022, %v3236
    %v3238 = vpop.f32.mrf.mxu0
    %v3239 = vadd.f32 %v3024, %v3238
    %3240 = vmatprep.mubr.f32.mxu0 %v1729
    %3241 = vmatmul.mubr.f32.gmra.mxu0 %v1728
    %v3242 = vpop.f32.mrf.mxu0
    %v3243 = vadd.f32 %v3028, %v3242
    %v3244 = vpop.f32.mrf.mxu0
    %v3245 = vadd.f32 %v3030, %v3244
    %3246 = vmatprep.mubr.f32.mxu0 %v1741
    %3247 = vmatmul.mubr.f32.gmra.mxu0 %v1740
    %v3248 = vpop.f32.mrf.mxu0
    %v3249 = vadd.f32 %v3034, %v3248
    %v3250 = vpop.f32.mrf.mxu0
    %v3251 = vadd.f32 %v3036, %v3250
    %3252 = vmatprep.mubr.f32.mxu0 %v1753
    %3253 = vmatmul.mubr.f32.gmra.mxu0 %v1752
    %v3254 = vpop.f32.mrf.mxu0
    %v3255 = vadd.f32 %v3040, %v3254
    %v3256 = vpop.f32.mrf.mxu0
    %v3257 = vadd.f32 %v3042, %v3256
    %3258 = vmatprep.mubr.f32.mxu0 %v1765
    %3259 = vmatmul.mubr.f32.gmra.mxu0 %v1764
    %v3260 = vpop.f32.mrf.mxu0
    %v3261 = vadd.f32 %v3046, %v3260
    %v3262 = vpop.f32.mrf.mxu0
    %v3263 = vadd.f32 %v3048, %v3262
    %3264 = vmatprep.mubr.f32.mxu0 %v1777
    %3265 = vmatmul.mubr.f32.gmra.mxu0 %v1776
    %v3266 = vpop.f32.mrf.mxu0
    %v3267 = vadd.f32 %v3052, %v3266
    %v3268 = vpop.f32.mrf.mxu0
    %v3269 = vadd.f32 %v3054, %v3268
    %3270 = vmatprep.mubr.f32.mxu0 %v1789
    %3271 = vmatmul.mubr.f32.gmra.mxu0 %v1788
    %v3272 = vpop.f32.mrf.mxu0
    %v3273 = vadd.f32 %v3058, %v3272
    %v3274 = vpop.f32.mrf.mxu0
    %v3275 = vadd.f32 %v3060, %v3274
    %3276 = vmatprep.mubr.f32.mxu0 %v1801
    %3277 = vmatmul.mubr.f32.gmra.mxu0 %v1800
    %v3278 = vpop.f32.mrf.mxu0
    %v3279 = vadd.f32 %v3064, %v3278
    %v3280 = vpop.f32.mrf.mxu0
    %v3281 = vadd.f32 %v3066, %v3280
    %3282 = vmatprep.mubr.f32.mxu0 %v1813
    %3283 = vmatmul.mubr.f32.gmra.mxu0 %v1812
    %v3284 = vpop.f32.mrf.mxu0
    %v3285 = vadd.f32 %v3070, %v3284
    %v3286 = vpop.f32.mrf.mxu0
    %v3287 = vadd.f32 %v3072, %v3286
    %3288 = vmatprep.mubr.f32.mxu0 %v1825
    %3289 = vmatmul.mubr.f32.gmra.mxu0 %v1824
    %v3290 = vpop.f32.mrf.mxu0
    %v3291 = vadd.f32 %v3076, %v3290
    %v3292 = vpop.f32.mrf.mxu0
    %v3293 = vadd.f32 %v3078, %v3292
    %3294 = vmatprep.mubr.f32.mxu0 %v1837
    %3295 = vmatmul.mubr.f32.gmra.mxu0 %v1836
    %v3296 = vpop.f32.mrf.mxu0
    %v3297 = vadd.f32 %v3082, %v3296
    %v3298 = vpop.f32.mrf.mxu0
    %v3299 = vadd.f32 %v3084, %v3298
    %3300 = vmatprep.mubr.f32.mxu0 %v1849
    %3301 = vmatmul.mubr.f32.gmra.mxu0 %v1848
    %v3302 = vpop.f32.mrf.mxu0
    %v3303 = vadd.f32 %v3088, %v3302
    %v3304 = vpop.f32.mrf.mxu0
    %v3305 = vadd.f32 %v3090, %v3304
    %3306 = vdwg.mxu0
    %3307 = vmatprep.subr.mxu0 %v2043
    %3308 = vmatpush1.xpose.msra.mxu0 %v2042
    %3309 = vmatprep.subr.mxu0 %v2031
    %3310 = vmatpush1.xpose.msra.mxu0 %v2030
    %3311 = vmatprep.subr.mxu0 %v2019
    %3312 = vmatpush1.xpose.msra.mxu0 %v2018
    %3313 = vmatprep.subr.mxu0 %v2007
    %3314 = vmatpush1.xpose.msra.mxu0 %v2006
    %3315 = vmatprep.subr.mxu0 %v1995
    %3316 = vmatpush1.xpose.msra.mxu0 %v1994
    %3317 = vmatprep.subr.mxu0 %v1983
    %3318 = vmatpush1.xpose.msra.mxu0 %v1982
    %3319 = vmatprep.subr.mxu0 %v1971
    %3320 = vmatpush1.xpose.msra.mxu0 %v1970
    %3321 = vmatprep.subr.mxu0 %v1959
    %3322 = vmatpush1.xpose.msra.mxu0 %v1958
    %3323 = vmatprep.subr.mxu0 %v1947
    %3324 = vmatpush1.xpose.msra.mxu0 %v1946
    %3325 = vmatprep.subr.mxu0 %v1935
    %3326 = vmatpush1.xpose.msra.mxu0 %v1934
    %3327 = vmatprep.subr.mxu0 %v1923
    %3328 = vmatpush1.xpose.msra.mxu0 %v1922
    %3329 = vmatprep.subr.mxu0 %v1911
    %3330 = vmatpush1.xpose.msra.mxu0 %v1910
    %3331 = vmatprep.subr.mxu0 %v1899
    %3332 = vmatpush1.xpose.msra.mxu0 %v1898
    %3333 = vmatprep.subr.mxu0 %v1887
    %3334 = vmatpush1.xpose.msra.mxu0 %v1886
    %3335 = vmatprep.subr.mxu0 %v1875
    %3336 = vmatpush1.xpose.msra.mxu0 %v1874
    %3337 = vmatprep.subr.mxu0 %v1863
    %3338 = vmatpush1.xpose.msra.mxu0 %v1862
    %3339 = vmatprep.subr.mxu0 %v2235
    %3340 = vmatpush2.xpose.msra.mxu0 %v2234
    %3341 = vmatprep.subr.mxu0 %v2223
    %3342 = vmatpush2.xpose.msra.mxu0 %v2222
    %3343 = vmatprep.subr.mxu0 %v2211
    %3344 = vmatpush2.xpose.msra.mxu0 %v2210
    %3345 = vmatprep.subr.mxu0 %v2199
    %3346 = vmatpush2.xpose.msra.mxu0 %v2198
    %3347 = vmatprep.subr.mxu0 %v2187
    %3348 = vmatpush2.xpose.msra.mxu0 %v2186
    %3349 = vmatprep.subr.mxu0 %v2175
    %3350 = vmatpush2.xpose.msra.mxu0 %v2174
    %3351 = vmatprep.subr.mxu0 %v2163
    %3352 = vmatpush2.xpose.msra.mxu0 %v2162
    %3353 = vmatprep.subr.mxu0 %v2151
    %3354 = vmatpush2.xpose.msra.mxu0 %v2150
    %3355 = vmatprep.subr.mxu0 %v2139
    %3356 = vmatpush2.xpose.msra.mxu0 %v2138
    %3357 = vmatprep.subr.mxu0 %v2127
    %3358 = vmatpush2.xpose.msra.mxu0 %v2126
    %3359 = vmatprep.subr.mxu0 %v2115
    %3360 = vmatpush2.xpose.msra.mxu0 %v2114
    %3361 = vmatprep.subr.mxu0 %v2103
    %3362 = vmatpush2.xpose.msra.mxu0 %v2102
    %3363 = vmatprep.subr.mxu0 %v2091
    %3364 = vmatpush2.xpose.msra.mxu0 %v2090
    %3365 = vmatprep.subr.mxu0 %v2079
    %3366 = vmatpush2.xpose.msra.mxu0 %v2078
    %3367 = vmatprep.subr.mxu0 %v2067
    %3368 = vmatpush2.xpose.msra.mxu0 %v2066
    %3369 = vmatprep.subr.mxu0 %v2055
    %3370 = vmatpush2.xpose.msra.mxu0 %v2054
    %3371 = vmatprep.mubr.f32.mxu0 %v1563
    %3372 = vmatmul.mubr.f32.gmra.mxu0 %v1562
    %v3373 = vpop.f32.mrf.mxu0
    %v3374 = vadd.f32 %v3159, %v3373
    %v3375 = vpop.f32.mrf.mxu0
    %v3376 = vadd.f32 %v3161, %v3375
    %3377 = vmatprep.mubr.f32.mxu0 %v1575
    %3378 = vmatmul.mubr.f32.gmra.mxu0 %v1574
    %v3379 = vpop.f32.mrf.mxu0
    %v3380 = vadd.f32 %v3165, %v3379
    %v3381 = vpop.f32.mrf.mxu0
    %v3382 = vadd.f32 %v3167, %v3381
    %3383 = vmatprep.mubr.f32.mxu0 %v1587
    %3384 = vmatmul.mubr.f32.gmra.mxu0 %v1586
    %v3385 = vpop.f32.mrf.mxu0
    %v3386 = vadd.f32 %v3171, %v3385
    %v3387 = vpop.f32.mrf.mxu0
    %v3388 = vadd.f32 %v3173, %v3387
    %3389 = vmatprep.mubr.f32.mxu0 %v1599
    %3390 = vmatmul.mubr.f32.gmra.mxu0 %v1598
    %v3391 = vpop.f32.mrf.mxu0
    %v3392 = vadd.f32 %v3177, %v3391
    %v3393 = vpop.f32.mrf.mxu0
    %v3394 = vadd.f32 %v3179, %v3393
    %3395 = vmatprep.mubr.f32.mxu0 %v1611
    %3396 = vmatmul.mubr.f32.gmra.mxu0 %v1610
    %v3397 = vpop.f32.mrf.mxu0
    %v3398 = vadd.f32 %v3183, %v3397
    %v3399 = vpop.f32.mrf.mxu0
    %v3400 = vadd.f32 %v3185, %v3399
    %3401 = vmatprep.mubr.f32.mxu0 %v1623
    %3402 = vmatmul.mubr.f32.gmra.mxu0 %v1622
    %v3403 = vpop.f32.mrf.mxu0
    %v3404 = vadd.f32 %v3189, %v3403
    %v3405 = vpop.f32.mrf.mxu0
    %v3406 = vadd.f32 %v3191, %v3405
    %3407 = vmatprep.mubr.f32.mxu0 %v1635
    %3408 = vmatmul.mubr.f32.gmra.mxu0 %v1634
    %v3409 = vpop.f32.mrf.mxu0
    %v3410 = vadd.f32 %v3195, %v3409
    %v3411 = vpop.f32.mrf.mxu0
    %v3412 = vadd.f32 %v3197, %v3411
    %3413 = vmatprep.mubr.f32.mxu0 %v1647
    %3414 = vmatmul.mubr.f32.gmra.mxu0 %v1646
    %v3415 = vpop.f32.mrf.mxu0
    %v3416 = vadd.f32 %v3201, %v3415
    %v3417 = vpop.f32.mrf.mxu0
    %v3418 = vadd.f32 %v3203, %v3417
    %3419 = vmatprep.mubr.f32.mxu0 %v1659
    %3420 = vmatmul.mubr.f32.gmra.mxu0 %v1658
    %v3421 = vpop.f32.mrf.mxu0
    %v3422 = vadd.f32 %v3207, %v3421
    %v3423 = vpop.f32.mrf.mxu0
    %v3424 = vadd.f32 %v3209, %v3423
    %3425 = vmatprep.mubr.f32.mxu0 %v1671
    %3426 = vmatmul.mubr.f32.gmra.mxu0 %v1670
    %v3427 = vpop.f32.mrf.mxu0
    %v3428 = vadd.f32 %v3213, %v3427
    %v3429 = vpop.f32.mrf.mxu0
    %v3430 = vadd.f32 %v3215, %v3429
    %3431 = vmatprep.mubr.f32.mxu0 %v1683
    %3432 = vmatmul.mubr.f32.gmra.mxu0 %v1682
    %v3433 = vpop.f32.mrf.mxu0
    %v3434 = vadd.f32 %v3219, %v3433
    %v3435 = vpop.f32.mrf.mxu0
    %v3436 = vadd.f32 %v3221, %v3435
    %3437 = vmatprep.mubr.f32.mxu0 %v1695
    %3438 = vmatmul.mubr.f32.gmra.mxu0 %v1694
    %v3439 = vpop.f32.mrf.mxu0
    %v3440 = vadd.f32 %v3225, %v3439
    %v3441 = vpop.f32.mrf.mxu0
    %v3442 = vadd.f32 %v3227, %v3441
    %3443 = vmatprep.mubr.f32.mxu0 %v1707
    %3444 = vmatmul.mubr.f32.gmra.mxu0 %v1706
    %v3445 = vpop.f32.mrf.mxu0
    %v3446 = vadd.f32 %v3231, %v3445
    %v3447 = vpop.f32.mrf.mxu0
    %v3448 = vadd.f32 %v3233, %v3447
    %3449 = vmatprep.mubr.f32.mxu0 %v1719
    %3450 = vmatmul.mubr.f32.gmra.mxu0 %v1718
    %v3451 = vpop.f32.mrf.mxu0
    %v3452 = vadd.f32 %v3237, %v3451
    %v3453 = vpop.f32.mrf.mxu0
    %v3454 = vadd.f32 %v3239, %v3453
    %3455 = vmatprep.mubr.f32.mxu0 %v1731
    %3456 = vmatmul.mubr.f32.gmra.mxu0 %v1730
    %v3457 = vpop.f32.mrf.mxu0
    %v3458 = vadd.f32 %v3243, %v3457
    %v3459 = vpop.f32.mrf.mxu0
    %v3460 = vadd.f32 %v3245, %v3459
    %3461 = vmatprep.mubr.f32.mxu0 %v1743
    %3462 = vmatmul.mubr.f32.gmra.mxu0 %v1742
    %v3463 = vpop.f32.mrf.mxu0
    %v3464 = vadd.f32 %v3249, %v3463
    %v3465 = vpop.f32.mrf.mxu0
    %v3466 = vadd.f32 %v3251, %v3465
    %3467 = vmatprep.mubr.f32.mxu0 %v1755
    %3468 = vmatmul.mubr.f32.gmra.mxu0 %v1754
    %v3469 = vpop.f32.mrf.mxu0
    %v3470 = vadd.f32 %v3255, %v3469
    %v3471 = vpop.f32.mrf.mxu0
    %v3472 = vadd.f32 %v3257, %v3471
    %3473 = vmatprep.mubr.f32.mxu0 %v1767
    %3474 = vmatmul.mubr.f32.gmra.mxu0 %v1766
    %v3475 = vpop.f32.mrf.mxu0
    %v3476 = vadd.f32 %v3261, %v3475
    %v3477 = vpop.f32.mrf.mxu0
    %v3478 = vadd.f32 %v3263, %v3477
    %3479 = vmatprep.mubr.f32.mxu0 %v1779
    %3480 = vmatmul.mubr.f32.gmra.mxu0 %v1778
    %v3481 = vpop.f32.mrf.mxu0
    %v3482 = vadd.f32 %v3267, %v3481
    %v3483 = vpop.f32.mrf.mxu0
    %v3484 = vadd.f32 %v3269, %v3483
    %3485 = vmatprep.mubr.f32.mxu0 %v1791
    %3486 = vmatmul.mubr.f32.gmra.mxu0 %v1790
    %v3487 = vpop.f32.mrf.mxu0
    %v3488 = vadd.f32 %v3273, %v3487
    %v3489 = vpop.f32.mrf.mxu0
    %v3490 = vadd.f32 %v3275, %v3489
    %3491 = vmatprep.mubr.f32.mxu0 %v1803
    %3492 = vmatmul.mubr.f32.gmra.mxu0 %v1802
    %v3493 = vpop.f32.mrf.mxu0
    %v3494 = vadd.f32 %v3279, %v3493
    %v3495 = vpop.f32.mrf.mxu0
    %v3496 = vadd.f32 %v3281, %v3495
    %3497 = vmatprep.mubr.f32.mxu0 %v1815
    %3498 = vmatmul.mubr.f32.gmra.mxu0 %v1814
    %v3499 = vpop.f32.mrf.mxu0
    %v3500 = vadd.f32 %v3285, %v3499
    %v3501 = vpop.f32.mrf.mxu0
    %v3502 = vadd.f32 %v3287, %v3501
    %3503 = vmatprep.mubr.f32.mxu0 %v1827
    %3504 = vmatmul.mubr.f32.gmra.mxu0 %v1826
    %v3505 = vpop.f32.mrf.mxu0
    %v3506 = vadd.f32 %v3291, %v3505
    %v3507 = vpop.f32.mrf.mxu0
    %v3508 = vadd.f32 %v3293, %v3507
    %3509 = vmatprep.mubr.f32.mxu0 %v1839
    %3510 = vmatmul.mubr.f32.gmra.mxu0 %v1838
    %v3511 = vpop.f32.mrf.mxu0
    %v3512 = vadd.f32 %v3297, %v3511
    %v3513 = vpop.f32.mrf.mxu0
    %v3514 = vadd.f32 %v3299, %v3513
    %3515 = vmatprep.mubr.f32.mxu0 %v1851
    %3516 = vmatmul.mubr.f32.gmra.mxu0 %v1850
    %v3517 = vpop.f32.mrf.mxu0
    %v3518 = vadd.f32 %v3303, %v3517
    %v3519 = vpop.f32.mrf.mxu0
    %v3520 = vadd.f32 %v3305, %v3519
    %3521 = vdwg.mxu0
    %3522 = vmatprep.subr.mxu0 %v2045
    %3523 = vmatpush1.xpose.msra.mxu0 %v2044
    %3524 = vmatprep.subr.mxu0 %v2033
    %3525 = vmatpush1.xpose.msra.mxu0 %v2032
    %3526 = vmatprep.subr.mxu0 %v2021
    %3527 = vmatpush1.xpose.msra.mxu0 %v2020
    %3528 = vmatprep.subr.mxu0 %v2009
    %3529 = vmatpush1.xpose.msra.mxu0 %v2008
    %3530 = vmatprep.subr.mxu0 %v1997
    %3531 = vmatpush1.xpose.msra.mxu0 %v1996
    %3532 = vmatprep.subr.mxu0 %v1985
    %3533 = vmatpush1.xpose.msra.mxu0 %v1984
    %3534 = vmatprep.subr.mxu0 %v1973
    %3535 = vmatpush1.xpose.msra.mxu0 %v1972
    %3536 = vmatprep.subr.mxu0 %v1961
    %3537 = vmatpush1.xpose.msra.mxu0 %v1960
    %3538 = vmatprep.subr.mxu0 %v1949
    %3539 = vmatpush1.xpose.msra.mxu0 %v1948
    %3540 = vmatprep.subr.mxu0 %v1937
    %3541 = vmatpush1.xpose.msra.mxu0 %v1936
    %3542 = vmatprep.subr.mxu0 %v1925
    %3543 = vmatpush1.xpose.msra.mxu0 %v1924
    %3544 = vmatprep.subr.mxu0 %v1913
    %3545 = vmatpush1.xpose.msra.mxu0 %v1912
    %3546 = vmatprep.subr.mxu0 %v1901
    %3547 = vmatpush1.xpose.msra.mxu0 %v1900
    %3548 = vmatprep.subr.mxu0 %v1889
    %3549 = vmatpush1.xpose.msra.mxu0 %v1888
    %3550 = vmatprep.subr.mxu0 %v1877
    %3551 = vmatpush1.xpose.msra.mxu0 %v1876
    %3552 = vmatprep.subr.mxu0 %v1865
    %3553 = vmatpush1.xpose.msra.mxu0 %v1864
    %3554 = vmatprep.subr.mxu0 %v2237
    %3555 = vmatpush2.xpose.msra.mxu0 %v2236
    %3556 = vmatprep.subr.mxu0 %v2225
    %3557 = vmatpush2.xpose.msra.mxu0 %v2224
    %3558 = vmatprep.subr.mxu0 %v2213
    %3559 = vmatpush2.xpose.msra.mxu0 %v2212
    %3560 = vmatprep.subr.mxu0 %v2201
    %3561 = vmatpush2.xpose.msra.mxu0 %v2200
    %3562 = vmatprep.subr.mxu0 %v2189
    %3563 = vmatpush2.xpose.msra.mxu0 %v2188
    %3564 = vmatprep.subr.mxu0 %v2177
    %3565 = vmatpush2.xpose.msra.mxu0 %v2176
    %3566 = vmatprep.subr.mxu0 %v2165
    %3567 = vmatpush2.xpose.msra.mxu0 %v2164
    %3568 = vmatprep.subr.mxu0 %v2153
    %3569 = vmatpush2.xpose.msra.mxu0 %v2152
    %3570 = vmatprep.subr.mxu0 %v2141
    %3571 = vmatpush2.xpose.msra.mxu0 %v2140
    %3572 = vmatprep.subr.mxu0 %v2129
    %3573 = vmatpush2.xpose.msra.mxu0 %v2128
    %3574 = vmatprep.subr.mxu0 %v2117
    %3575 = vmatpush2.xpose.msra.mxu0 %v2116
    %3576 = vmatprep.subr.mxu0 %v2105
    %3577 = vmatpush2.xpose.msra.mxu0 %v2104
    %3578 = vmatprep.subr.mxu0 %v2093
    %3579 = vmatpush2.xpose.msra.mxu0 %v2092
    %3580 = vmatprep.subr.mxu0 %v2081
    %3581 = vmatpush2.xpose.msra.mxu0 %v2080
    %3582 = vmatprep.subr.mxu0 %v2069
    %3583 = vmatpush2.xpose.msra.mxu0 %v2068
    %3584 = vmatprep.subr.mxu0 %v2057
    %3585 = vmatpush2.xpose.msra.mxu0 %v2056
    %3586 = vmatprep.mubr.f32.mxu0 %v1565
    %3587 = vmatmul.mubr.f32.gmra.mxu0 %v1564
    %v3588 = vpop.f32.mrf.mxu0
    %v3589 = vadd.f32 %v3374, %v3588
    %v3590 = vpop.f32.mrf.mxu0
    %v3591 = vadd.f32 %v3376, %v3590
    %3592 = vmatprep.mubr.f32.mxu0 %v1577
    %3593 = vmatmul.mubr.f32.gmra.mxu0 %v1576
    %v3594 = vpop.f32.mrf.mxu0
    %v3595 = vadd.f32 %v3380, %v3594
    %v3596 = vpop.f32.mrf.mxu0
    %v3597 = vadd.f32 %v3382, %v3596
    %3598 = vmatprep.mubr.f32.mxu0 %v1589
    %3599 = vmatmul.mubr.f32.gmra.mxu0 %v1588
    %v3600 = vpop.f32.mrf.mxu0
    %v3601 = vadd.f32 %v3386, %v3600
    %v3602 = vpop.f32.mrf.mxu0
    %v3603 = vadd.f32 %v3388, %v3602
    %3604 = vmatprep.mubr.f32.mxu0 %v1601
    %3605 = vmatmul.mubr.f32.gmra.mxu0 %v1600
    %v3606 = vpop.f32.mrf.mxu0
    %v3607 = vadd.f32 %v3392, %v3606
    %v3608 = vpop.f32.mrf.mxu0
    %v3609 = vadd.f32 %v3394, %v3608
    %3610 = vmatprep.mubr.f32.mxu0 %v1613
    %3611 = vmatmul.mubr.f32.gmra.mxu0 %v1612
    %v3612 = vpop.f32.mrf.mxu0
    %v3613 = vadd.f32 %v3398, %v3612
    %v3614 = vpop.f32.mrf.mxu0
    %v3615 = vadd.f32 %v3400, %v3614
    %3616 = vmatprep.mubr.f32.mxu0 %v1625
    %3617 = vmatmul.mubr.f32.gmra.mxu0 %v1624
    %v3618 = vpop.f32.mrf.mxu0
    %v3619 = vadd.f32 %v3404, %v3618
    %v3620 = vpop.f32.mrf.mxu0
    %v3621 = vadd.f32 %v3406, %v3620
    %3622 = vmatprep.mubr.f32.mxu0 %v1637
    %3623 = vmatmul.mubr.f32.gmra.mxu0 %v1636
    %v3624 = vpop.f32.mrf.mxu0
    %v3625 = vadd.f32 %v3410, %v3624
    %v3626 = vpop.f32.mrf.mxu0
    %v3627 = vadd.f32 %v3412, %v3626
    %3628 = vmatprep.mubr.f32.mxu0 %v1649
    %3629 = vmatmul.mubr.f32.gmra.mxu0 %v1648
    %v3630 = vpop.f32.mrf.mxu0
    %v3631 = vadd.f32 %v3416, %v3630
    %v3632 = vpop.f32.mrf.mxu0
    %v3633 = vadd.f32 %v3418, %v3632
    %3634 = vmatprep.mubr.f32.mxu0 %v1661
    %3635 = vmatmul.mubr.f32.gmra.mxu0 %v1660
    %v3636 = vpop.f32.mrf.mxu0
    %v3637 = vadd.f32 %v3422, %v3636
    %v3638 = vpop.f32.mrf.mxu0
    %v3639 = vadd.f32 %v3424, %v3638
    %3640 = vmatprep.mubr.f32.mxu0 %v1673
    %3641 = vmatmul.mubr.f32.gmra.mxu0 %v1672
    %v3642 = vpop.f32.mrf.mxu0
    %v3643 = vadd.f32 %v3428, %v3642
    %v3644 = vpop.f32.mrf.mxu0
    %v3645 = vadd.f32 %v3430, %v3644
    %3646 = vmatprep.mubr.f32.mxu0 %v1685
    %3647 = vmatmul.mubr.f32.gmra.mxu0 %v1684
    %v3648 = vpop.f32.mrf.mxu0
    %v3649 = vadd.f32 %v3434, %v3648
    %v3650 = vpop.f32.mrf.mxu0
    %v3651 = vadd.f32 %v3436, %v3650
    %3652 = vmatprep.mubr.f32.mxu0 %v1697
    %3653 = vmatmul.mubr.f32.gmra.mxu0 %v1696
    %v3654 = vpop.f32.mrf.mxu0
    %v3655 = vadd.f32 %v3440, %v3654
    %v3656 = vpop.f32.mrf.mxu0
    %v3657 = vadd.f32 %v3442, %v3656
    %3658 = vmatprep.mubr.f32.mxu0 %v1709
    %3659 = vmatmul.mubr.f32.gmra.mxu0 %v1708
    %v3660 = vpop.f32.mrf.mxu0
    %v3661 = vadd.f32 %v3446, %v3660
    %v3662 = vpop.f32.mrf.mxu0
    %v3663 = vadd.f32 %v3448, %v3662
    %3664 = vmatprep.mubr.f32.mxu0 %v1721
    %3665 = vmatmul.mubr.f32.gmra.mxu0 %v1720
    %v3666 = vpop.f32.mrf.mxu0
    %v3667 = vadd.f32 %v3452, %v3666
    %v3668 = vpop.f32.mrf.mxu0
    %v3669 = vadd.f32 %v3454, %v3668
    %3670 = vmatprep.mubr.f32.mxu0 %v1733
    %3671 = vmatmul.mubr.f32.gmra.mxu0 %v1732
    %v3672 = vpop.f32.mrf.mxu0
    %v3673 = vadd.f32 %v3458, %v3672
    %v3674 = vpop.f32.mrf.mxu0
    %v3675 = vadd.f32 %v3460, %v3674
    %3676 = vmatprep.mubr.f32.mxu0 %v1745
    %3677 = vmatmul.mubr.f32.gmra.mxu0 %v1744
    %v3678 = vpop.f32.mrf.mxu0
    %v3679 = vadd.f32 %v3464, %v3678
    %v3680 = vpop.f32.mrf.mxu0
    %v3681 = vadd.f32 %v3466, %v3680
    %3682 = vmatprep.mubr.f32.mxu0 %v1757
    %3683 = vmatmul.mubr.f32.gmra.mxu0 %v1756
    %v3684 = vpop.f32.mrf.mxu0
    %v3685 = vadd.f32 %v3470, %v3684
    %v3686 = vpop.f32.mrf.mxu0
    %v3687 = vadd.f32 %v3472, %v3686
    %3688 = vmatprep.mubr.f32.mxu0 %v1769
    %3689 = vmatmul.mubr.f32.gmra.mxu0 %v1768
    %v3690 = vpop.f32.mrf.mxu0
    %v3691 = vadd.f32 %v3476, %v3690
    %v3692 = vpop.f32.mrf.mxu0
    %v3693 = vadd.f32 %v3478, %v3692
    %3694 = vmatprep.mubr.f32.mxu0 %v1781
    %3695 = vmatmul.mubr.f32.gmra.mxu0 %v1780
    %v3696 = vpop.f32.mrf.mxu0
    %v3697 = vadd.f32 %v3482, %v3696
    %v3698 = vpop.f32.mrf.mxu0
    %v3699 = vadd.f32 %v3484, %v3698
    %3700 = vmatprep.mubr.f32.mxu0 %v1793
    %3701 = vmatmul.mubr.f32.gmra.mxu0 %v1792
    %v3702 = vpop.f32.mrf.mxu0
    %v3703 = vadd.f32 %v3488, %v3702
    %v3704 = vpop.f32.mrf.mxu0
    %v3705 = vadd.f32 %v3490, %v3704
    %3706 = vmatprep.mubr.f32.mxu0 %v1805
    %3707 = vmatmul.mubr.f32.gmra.mxu0 %v1804
    %v3708 = vpop.f32.mrf.mxu0
    %v3709 = vadd.f32 %v3494, %v3708
    %v3710 = vpop.f32.mrf.mxu0
    %v3711 = vadd.f32 %v3496, %v3710
    %3712 = vmatprep.mubr.f32.mxu0 %v1817
    %3713 = vmatmul.mubr.f32.gmra.mxu0 %v1816
    %v3714 = vpop.f32.mrf.mxu0
    %v3715 = vadd.f32 %v3500, %v3714
    %v3716 = vpop.f32.mrf.mxu0
    %v3717 = vadd.f32 %v3502, %v3716
    %3718 = vmatprep.mubr.f32.mxu0 %v1829
    %3719 = vmatmul.mubr.f32.gmra.mxu0 %v1828
    %v3720 = vpop.f32.mrf.mxu0
    %v3721 = vadd.f32 %v3506, %v3720
    %v3722 = vpop.f32.mrf.mxu0
    %v3723 = vadd.f32 %v3508, %v3722
    %3724 = vmatprep.mubr.f32.mxu0 %v1841
    %3725 = vmatmul.mubr.f32.gmra.mxu0 %v1840
    %v3726 = vpop.f32.mrf.mxu0
    %v3727 = vadd.f32 %v3512, %v3726
    %v3728 = vpop.f32.mrf.mxu0
    %v3729 = vadd.f32 %v3514, %v3728
    %3730 = vmatprep.mubr.f32.mxu0 %v1853
    %3731 = vmatmul.mubr.f32.gmra.mxu0 %v1852
    %v3732 = vpop.f32.mrf.mxu0
    %v3733 = vadd.f32 %v3518, %v3732
    %v3734 = vpop.f32.mrf.mxu0
    %v3735 = vadd.f32 %v3520, %v3734
    %3736 = vdwg.mxu0
    %3737 = vmatprep.subr.mxu0 %v2419
    %3738 = vmatpush1.xpose.msra.mxu0 %v2418
    %3739 = vmatprep.subr.mxu0 %v2407
    %3740 = vmatpush1.xpose.msra.mxu0 %v2406
    %3741 = vmatprep.subr.mxu0 %v2395
    %3742 = vmatpush1.xpose.msra.mxu0 %v2394
    %3743 = vmatprep.subr.mxu0 %v2383
    %3744 = vmatpush1.xpose.msra.mxu0 %v2382
    %3745 = vmatprep.subr.mxu0 %v2371
    %3746 = vmatpush1.xpose.msra.mxu0 %v2370
    %3747 = vmatprep.subr.mxu0 %v2359
    %3748 = vmatpush1.xpose.msra.mxu0 %v2358
    %3749 = vmatprep.subr.mxu0 %v2347
    %3750 = vmatpush1.xpose.msra.mxu0 %v2346
    %3751 = vmatprep.subr.mxu0 %v2335
    %3752 = vmatpush1.xpose.msra.mxu0 %v2334
    %3753 = vmatprep.subr.mxu0 %v2323
    %3754 = vmatpush1.xpose.msra.mxu0 %v2322
    %3755 = vmatprep.subr.mxu0 %v2311
    %3756 = vmatpush1.xpose.msra.mxu0 %v2310
    %3757 = vmatprep.subr.mxu0 %v2299
    %3758 = vmatpush1.xpose.msra.mxu0 %v2298
    %3759 = vmatprep.subr.mxu0 %v2287
    %3760 = vmatpush1.xpose.msra.mxu0 %v2286
    %3761 = vmatprep.subr.mxu0 %v2275
    %3762 = vmatpush1.xpose.msra.mxu0 %v2274
    %3763 = vmatprep.subr.mxu0 %v2263
    %3764 = vmatpush1.xpose.msra.mxu0 %v2262
    %3765 = vmatprep.subr.mxu0 %v2251
    %3766 = vmatpush1.xpose.msra.mxu0 %v2250
    %3767 = vmatprep.subr.mxu0 %v2239
    %3768 = vmatpush1.xpose.msra.mxu0 %v2238
    %3769 = vmatprep.subr.mxu0 0.0
    %3770 = vmatpush2.xpose.msra.mxu0 0.0
    %3771 = vmatprep.subr.mxu0 0.0
    %3772 = vmatpush2.xpose.msra.mxu0 0.0
    %3773 = vmatprep.subr.mxu0 0.0
    %3774 = vmatpush2.xpose.msra.mxu0 0.0
    %3775 = vmatprep.subr.mxu0 0.0
    %3776 = vmatpush2.xpose.msra.mxu0 0.0
    %3777 = vmatprep.subr.mxu0 0.0
    %3778 = vmatpush2.xpose.msra.mxu0 0.0
    %3779 = vmatprep.subr.mxu0 0.0
    %3780 = vmatpush2.xpose.msra.mxu0 0.0
    %3781 = vmatprep.subr.mxu0 0.0
    %3782 = vmatpush2.xpose.msra.mxu0 0.0
    %3783 = vmatprep.subr.mxu0 0.0
    %3784 = vmatpush2.xpose.msra.mxu0 0.0
    %3785 = vmatprep.subr.mxu0 0.0
    %3786 = vmatpush2.xpose.msra.mxu0 0.0
    %3787 = vmatprep.subr.mxu0 0.0
    %3788 = vmatpush2.xpose.msra.mxu0 0.0
    %3789 = vmatprep.subr.mxu0 0.0
    %3790 = vmatpush2.xpose.msra.mxu0 0.0
    %3791 = vmatprep.subr.mxu0 0.0
    %3792 = vmatpush2.xpose.msra.mxu0 0.0
    %3793 = vmatprep.subr.mxu0 0.0
    %3794 = vmatpush2.xpose.msra.mxu0 0.0
    %3795 = vmatprep.subr.mxu0 0.0
    %3796 = vmatpush2.xpose.msra.mxu0 0.0
    %3797 = vmatprep.subr.mxu0 0.0
    %3798 = vmatpush2.xpose.msra.mxu0 0.0
    %3799 = vmatprep.subr.mxu0 0.0
    %3800 = vmatpush2.xpose.msra.mxu0 0.0
    %3801 = vmatprep.mubr.f32.mxu0 %v1555
    %3802 = vmatmul.mubr.f32.gmra.mxu0 %v1554
    %v3803 = vpop.f32.mrf.mxu0
    %v3804 = vadd.f32 %v2443, %v3803
    %v3805 = vpop.f32.mrf.mxu0
    %3806 = vmatprep.mubr.f32.mxu0 %v1567
    %3807 = vmatmul.mubr.f32.gmra.mxu0 %v1566
    %v3808 = vpop.f32.mrf.mxu0
    %v3809 = vadd.f32 %v2443, %v3808
    %v3810 = vpop.f32.mrf.mxu0
    %3811 = vmatprep.mubr.f32.mxu0 %v1579
    %3812 = vmatmul.mubr.f32.gmra.mxu0 %v1578
    %v3813 = vpop.f32.mrf.mxu0
    %v3814 = vadd.f32 %v2443, %v3813
    %v3815 = vpop.f32.mrf.mxu0
    %3816 = vmatprep.mubr.f32.mxu0 %v1591
    %3817 = vmatmul.mubr.f32.gmra.mxu0 %v1590
    %v3818 = vpop.f32.mrf.mxu0
    %v3819 = vadd.f32 %v2443, %v3818
    %v3820 = vpop.f32.mrf.mxu0
    %3821 = vmatprep.mubr.f32.mxu0 %v1603
    %3822 = vmatmul.mubr.f32.gmra.mxu0 %v1602
    %v3823 = vpop.f32.mrf.mxu0
    %v3824 = vadd.f32 %v2443, %v3823
    %v3825 = vpop.f32.mrf.mxu0
    %3826 = vmatprep.mubr.f32.mxu0 %v1615
    %3827 = vmatmul.mubr.f32.gmra.mxu0 %v1614
    %v3828 = vpop.f32.mrf.mxu0
    %v3829 = vadd.f32 %v2443, %v3828
    %v3830 = vpop.f32.mrf.mxu0
    %3831 = vmatprep.mubr.f32.mxu0 %v1627
    %3832 = vmatmul.mubr.f32.gmra.mxu0 %v1626
    %v3833 = vpop.f32.mrf.mxu0
    %v3834 = vadd.f32 %v2443, %v3833
    %v3835 = vpop.f32.mrf.mxu0
    %3836 = vmatprep.mubr.f32.mxu0 %v1639
    %3837 = vmatmul.mubr.f32.gmra.mxu0 %v1638
    %v3838 = vpop.f32.mrf.mxu0
    %v3839 = vadd.f32 %v2443, %v3838
    %v3840 = vpop.f32.mrf.mxu0
    %3841 = vmatprep.mubr.f32.mxu0 %v1651
    %3842 = vmatmul.mubr.f32.gmra.mxu0 %v1650
    %v3843 = vpop.f32.mrf.mxu0
    %v3844 = vadd.f32 %v2443, %v3843
    %v3845 = vpop.f32.mrf.mxu0
    %3846 = vmatprep.mubr.f32.mxu0 %v1663
    %3847 = vmatmul.mubr.f32.gmra.mxu0 %v1662
    %v3848 = vpop.f32.mrf.mxu0
    %v3849 = vadd.f32 %v2443, %v3848
    %v3850 = vpop.f32.mrf.mxu0
    %3851 = vmatprep.mubr.f32.mxu0 %v1675
    %3852 = vmatmul.mubr.f32.gmra.mxu0 %v1674
    %v3853 = vpop.f32.mrf.mxu0
    %v3854 = vadd.f32 %v2443, %v3853
    %v3855 = vpop.f32.mrf.mxu0
    %3856 = vmatprep.mubr.f32.mxu0 %v1687
    %3857 = vmatmul.mubr.f32.gmra.mxu0 %v1686
    %v3858 = vpop.f32.mrf.mxu0
    %v3859 = vadd.f32 %v2443, %v3858
    %v3860 = vpop.f32.mrf.mxu0
    %3861 = vmatprep.mubr.f32.mxu0 %v1699
    %3862 = vmatmul.mubr.f32.gmra.mxu0 %v1698
    %v3863 = vpop.f32.mrf.mxu0
    %v3864 = vadd.f32 %v2443, %v3863
    %v3865 = vpop.f32.mrf.mxu0
    %3866 = vmatprep.mubr.f32.mxu0 %v1711
    %3867 = vmatmul.mubr.f32.gmra.mxu0 %v1710
    %v3868 = vpop.f32.mrf.mxu0
    %v3869 = vadd.f32 %v2443, %v3868
    %v3870 = vpop.f32.mrf.mxu0
    %3871 = vmatprep.mubr.f32.mxu0 %v1723
    %3872 = vmatmul.mubr.f32.gmra.mxu0 %v1722
    %v3873 = vpop.f32.mrf.mxu0
    %v3874 = vadd.f32 %v2443, %v3873
    %v3875 = vpop.f32.mrf.mxu0
    %3876 = vmatprep.mubr.f32.mxu0 %v1735
    %3877 = vmatmul.mubr.f32.gmra.mxu0 %v1734
    %v3878 = vpop.f32.mrf.mxu0
    %v3879 = vadd.f32 %v2443, %v3878
    %v3880 = vpop.f32.mrf.mxu0
    %3881 = vmatprep.mubr.f32.mxu0 %v1747
    %3882 = vmatmul.mubr.f32.gmra.mxu0 %v1746
    %v3883 = vpop.f32.mrf.mxu0
    %v3884 = vadd.f32 %v2443, %v3883
    %v3885 = vpop.f32.mrf.mxu0
    %3886 = vmatprep.mubr.f32.mxu0 %v1759
    %3887 = vmatmul.mubr.f32.gmra.mxu0 %v1758
    %v3888 = vpop.f32.mrf.mxu0
    %v3889 = vadd.f32 %v2443, %v3888
    %v3890 = vpop.f32.mrf.mxu0
    %3891 = vmatprep.mubr.f32.mxu0 %v1771
    %3892 = vmatmul.mubr.f32.gmra.mxu0 %v1770
    %v3893 = vpop.f32.mrf.mxu0
    %v3894 = vadd.f32 %v2443, %v3893
    %v3895 = vpop.f32.mrf.mxu0
    %3896 = vmatprep.mubr.f32.mxu0 %v1783
    %3897 = vmatmul.mubr.f32.gmra.mxu0 %v1782
    %v3898 = vpop.f32.mrf.mxu0
    %v3899 = vadd.f32 %v2443, %v3898
    %v3900 = vpop.f32.mrf.mxu0
    %3901 = vmatprep.mubr.f32.mxu0 %v1795
    %3902 = vmatmul.mubr.f32.gmra.mxu0 %v1794
    %v3903 = vpop.f32.mrf.mxu0
    %v3904 = vadd.f32 %v2443, %v3903
    %v3905 = vpop.f32.mrf.mxu0
    %3906 = vmatprep.mubr.f32.mxu0 %v1807
    %3907 = vmatmul.mubr.f32.gmra.mxu0 %v1806
    %v3908 = vpop.f32.mrf.mxu0
    %v3909 = vadd.f32 %v2443, %v3908
    %v3910 = vpop.f32.mrf.mxu0
    %3911 = vmatprep.mubr.f32.mxu0 %v1819
    %3912 = vmatmul.mubr.f32.gmra.mxu0 %v1818
    %v3913 = vpop.f32.mrf.mxu0
    %v3914 = vadd.f32 %v2443, %v3913
    %v3915 = vpop.f32.mrf.mxu0
    %3916 = vmatprep.mubr.f32.mxu0 %v1831
    %3917 = vmatmul.mubr.f32.gmra.mxu0 %v1830
    %v3918 = vpop.f32.mrf.mxu0
    %v3919 = vadd.f32 %v2443, %v3918
    %v3920 = vpop.f32.mrf.mxu0
    %3921 = vmatprep.mubr.f32.mxu0 %v1843
    %3922 = vmatmul.mubr.f32.gmra.mxu0 %v1842
    %v3923 = vpop.f32.mrf.mxu0
    %v3924 = vadd.f32 %v2443, %v3923
    %v3925 = vpop.f32.mrf.mxu0
    %3926 = vdwg.mxu0
    %3927 = vmatprep.subr.mxu0 %v2421
    %3928 = vmatpush1.xpose.msra.mxu0 %v2420
    %3929 = vmatprep.subr.mxu0 %v2409
    %3930 = vmatpush1.xpose.msra.mxu0 %v2408
    %3931 = vmatprep.subr.mxu0 %v2397
    %3932 = vmatpush1.xpose.msra.mxu0 %v2396
    %3933 = vmatprep.subr.mxu0 %v2385
    %3934 = vmatpush1.xpose.msra.mxu0 %v2384
    %3935 = vmatprep.subr.mxu0 %v2373
    %3936 = vmatpush1.xpose.msra.mxu0 %v2372
    %3937 = vmatprep.subr.mxu0 %v2361
    %3938 = vmatpush1.xpose.msra.mxu0 %v2360
    %3939 = vmatprep.subr.mxu0 %v2349
    %3940 = vmatpush1.xpose.msra.mxu0 %v2348
    %3941 = vmatprep.subr.mxu0 %v2337
    %3942 = vmatpush1.xpose.msra.mxu0 %v2336
    %3943 = vmatprep.subr.mxu0 %v2325
    %3944 = vmatpush1.xpose.msra.mxu0 %v2324
    %3945 = vmatprep.subr.mxu0 %v2313
    %3946 = vmatpush1.xpose.msra.mxu0 %v2312
    %3947 = vmatprep.subr.mxu0 %v2301
    %3948 = vmatpush1.xpose.msra.mxu0 %v2300
    %3949 = vmatprep.subr.mxu0 %v2289
    %3950 = vmatpush1.xpose.msra.mxu0 %v2288
    %3951 = vmatprep.subr.mxu0 %v2277
    %3952 = vmatpush1.xpose.msra.mxu0 %v2276
    %3953 = vmatprep.subr.mxu0 %v2265
    %3954 = vmatpush1.xpose.msra.mxu0 %v2264
    %3955 = vmatprep.subr.mxu0 %v2253
    %3956 = vmatpush1.xpose.msra.mxu0 %v2252
    %3957 = vmatprep.subr.mxu0 %v2241
    %3958 = vmatpush1.xpose.msra.mxu0 %v2240
    %3959 = vmatprep.subr.mxu0 0.0
    %3960 = vmatpush2.xpose.msra.mxu0 0.0
    %3961 = vmatprep.subr.mxu0 0.0
    %3962 = vmatpush2.xpose.msra.mxu0 0.0
    %3963 = vmatprep.subr.mxu0 0.0
    %3964 = vmatpush2.xpose.msra.mxu0 0.0
    %3965 = vmatprep.subr.mxu0 0.0
    %3966 = vmatpush2.xpose.msra.mxu0 0.0
    %3967 = vmatprep.subr.mxu0 0.0
    %3968 = vmatpush2.xpose.msra.mxu0 0.0
    %3969 = vmatprep.subr.mxu0 0.0
    %3970 = vmatpush2.xpose.msra.mxu0 0.0
    %3971 = vmatprep.subr.mxu0 0.0
    %3972 = vmatpush2.xpose.msra.mxu0 0.0
    %3973 = vmatprep.subr.mxu0 0.0
    %3974 = vmatpush2.xpose.msra.mxu0 0.0
    %3975 = vmatprep.subr.mxu0 0.0
    %3976 = vmatpush2.xpose.msra.mxu0 0.0
    %3977 = vmatprep.subr.mxu0 0.0
    %3978 = vmatpush2.xpose.msra.mxu0 0.0
    %3979 = vmatprep.subr.mxu0 0.0
    %3980 = vmatpush2.xpose.msra.mxu0 0.0
    %3981 = vmatprep.subr.mxu0 0.0
    %3982 = vmatpush2.xpose.msra.mxu0 0.0
    %3983 = vmatprep.subr.mxu0 0.0
    %3984 = vmatpush2.xpose.msra.mxu0 0.0
    %3985 = vmatprep.subr.mxu0 0.0
    %3986 = vmatpush2.xpose.msra.mxu0 0.0
    %3987 = vmatprep.subr.mxu0 0.0
    %3988 = vmatpush2.xpose.msra.mxu0 0.0
    %3989 = vmatprep.subr.mxu0 0.0
    %3990 = vmatpush2.xpose.msra.mxu0 0.0
    %3991 = vmatprep.mubr.f32.mxu0 %v1557
    %3992 = vmatmul.mubr.f32.gmra.mxu0 %v1556
    %v3993 = vpop.f32.mrf.mxu0
    %v3994 = vadd.f32 %v3804, %v3993
    %v3995 = vpop.f32.mrf.mxu0
    %3996 = vmatprep.mubr.f32.mxu0 %v1569
    %3997 = vmatmul.mubr.f32.gmra.mxu0 %v1568
    %v3998 = vpop.f32.mrf.mxu0
    %v3999 = vadd.f32 %v3809, %v3998
    %v4000 = vpop.f32.mrf.mxu0
    %4001 = vmatprep.mubr.f32.mxu0 %v1581
    %4002 = vmatmul.mubr.f32.gmra.mxu0 %v1580
    %v4003 = vpop.f32.mrf.mxu0
    %v4004 = vadd.f32 %v3814, %v4003
    %v4005 = vpop.f32.mrf.mxu0
    %4006 = vmatprep.mubr.f32.mxu0 %v1593
    %4007 = vmatmul.mubr.f32.gmra.mxu0 %v1592
    %v4008 = vpop.f32.mrf.mxu0
    %v4009 = vadd.f32 %v3819, %v4008
    %v4010 = vpop.f32.mrf.mxu0
    %4011 = vmatprep.mubr.f32.mxu0 %v1605
    %4012 = vmatmul.mubr.f32.gmra.mxu0 %v1604
    %v4013 = vpop.f32.mrf.mxu0
    %v4014 = vadd.f32 %v3824, %v4013
    %v4015 = vpop.f32.mrf.mxu0
    %4016 = vmatprep.mubr.f32.mxu0 %v1617
    %4017 = vmatmul.mubr.f32.gmra.mxu0 %v1616
    %v4018 = vpop.f32.mrf.mxu0
    %v4019 = vadd.f32 %v3829, %v4018
    %v4020 = vpop.f32.mrf.mxu0
    %4021 = vmatprep.mubr.f32.mxu0 %v1629
    %4022 = vmatmul.mubr.f32.gmra.mxu0 %v1628
    %v4023 = vpop.f32.mrf.mxu0
    %v4024 = vadd.f32 %v3834, %v4023
    %v4025 = vpop.f32.mrf.mxu0
    %4026 = vmatprep.mubr.f32.mxu0 %v1641
    %4027 = vmatmul.mubr.f32.gmra.mxu0 %v1640
    %v4028 = vpop.f32.mrf.mxu0
    %v4029 = vadd.f32 %v3839, %v4028
    %v4030 = vpop.f32.mrf.mxu0
    %4031 = vmatprep.mubr.f32.mxu0 %v1653
    %4032 = vmatmul.mubr.f32.gmra.mxu0 %v1652
    %v4033 = vpop.f32.mrf.mxu0
    %v4034 = vadd.f32 %v3844, %v4033
    %v4035 = vpop.f32.mrf.mxu0
    %4036 = vmatprep.mubr.f32.mxu0 %v1665
    %4037 = vmatmul.mubr.f32.gmra.mxu0 %v1664
    %v4038 = vpop.f32.mrf.mxu0
    %v4039 = vadd.f32 %v3849, %v4038
    %v4040 = vpop.f32.mrf.mxu0
    %4041 = vmatprep.mubr.f32.mxu0 %v1677
    %4042 = vmatmul.mubr.f32.gmra.mxu0 %v1676
    %v4043 = vpop.f32.mrf.mxu0
    %v4044 = vadd.f32 %v3854, %v4043
    %v4045 = vpop.f32.mrf.mxu0
    %4046 = vmatprep.mubr.f32.mxu0 %v1689
    %4047 = vmatmul.mubr.f32.gmra.mxu0 %v1688
    %v4048 = vpop.f32.mrf.mxu0
    %v4049 = vadd.f32 %v3859, %v4048
    %v4050 = vpop.f32.mrf.mxu0
    %4051 = vmatprep.mubr.f32.mxu0 %v1701
    %4052 = vmatmul.mubr.f32.gmra.mxu0 %v1700
    %v4053 = vpop.f32.mrf.mxu0
    %v4054 = vadd.f32 %v3864, %v4053
    %v4055 = vpop.f32.mrf.mxu0
    %4056 = vmatprep.mubr.f32.mxu0 %v1713
    %4057 = vmatmul.mubr.f32.gmra.mxu0 %v1712
    %v4058 = vpop.f32.mrf.mxu0
    %v4059 = vadd.f32 %v3869, %v4058
    %v4060 = vpop.f32.mrf.mxu0
    %4061 = vmatprep.mubr.f32.mxu0 %v1725
    %4062 = vmatmul.mubr.f32.gmra.mxu0 %v1724
    %v4063 = vpop.f32.mrf.mxu0
    %v4064 = vadd.f32 %v3874, %v4063
    %v4065 = vpop.f32.mrf.mxu0
    %4066 = vmatprep.mubr.f32.mxu0 %v1737
    %4067 = vmatmul.mubr.f32.gmra.mxu0 %v1736
    %v4068 = vpop.f32.mrf.mxu0
    %v4069 = vadd.f32 %v3879, %v4068
    %v4070 = vpop.f32.mrf.mxu0
    %4071 = vmatprep.mubr.f32.mxu0 %v1749
    %4072 = vmatmul.mubr.f32.gmra.mxu0 %v1748
    %v4073 = vpop.f32.mrf.mxu0
    %v4074 = vadd.f32 %v3884, %v4073
    %v4075 = vpop.f32.mrf.mxu0
    %4076 = vmatprep.mubr.f32.mxu0 %v1761
    %4077 = vmatmul.mubr.f32.gmra.mxu0 %v1760
    %v4078 = vpop.f32.mrf.mxu0
    %v4079 = vadd.f32 %v3889, %v4078
    %v4080 = vpop.f32.mrf.mxu0
    %4081 = vmatprep.mubr.f32.mxu0 %v1773
    %4082 = vmatmul.mubr.f32.gmra.mxu0 %v1772
    %v4083 = vpop.f32.mrf.mxu0
    %v4084 = vadd.f32 %v3894, %v4083
    %v4085 = vpop.f32.mrf.mxu0
    %4086 = vmatprep.mubr.f32.mxu0 %v1785
    %4087 = vmatmul.mubr.f32.gmra.mxu0 %v1784
    %v4088 = vpop.f32.mrf.mxu0
    %v4089 = vadd.f32 %v3899, %v4088
    %v4090 = vpop.f32.mrf.mxu0
    %4091 = vmatprep.mubr.f32.mxu0 %v1797
    %4092 = vmatmul.mubr.f32.gmra.mxu0 %v1796
    %v4093 = vpop.f32.mrf.mxu0
    %v4094 = vadd.f32 %v3904, %v4093
    %v4095 = vpop.f32.mrf.mxu0
    %4096 = vmatprep.mubr.f32.mxu0 %v1809
    %4097 = vmatmul.mubr.f32.gmra.mxu0 %v1808
    %v4098 = vpop.f32.mrf.mxu0
    %v4099 = vadd.f32 %v3909, %v4098
    %v4100 = vpop.f32.mrf.mxu0
    %4101 = vmatprep.mubr.f32.mxu0 %v1821
    %4102 = vmatmul.mubr.f32.gmra.mxu0 %v1820
    %v4103 = vpop.f32.mrf.mxu0
    %v4104 = vadd.f32 %v3914, %v4103
    %v4105 = vpop.f32.mrf.mxu0
    %4106 = vmatprep.mubr.f32.mxu0 %v1833
    %4107 = vmatmul.mubr.f32.gmra.mxu0 %v1832
    %v4108 = vpop.f32.mrf.mxu0
    %v4109 = vadd.f32 %v3919, %v4108
    %v4110 = vpop.f32.mrf.mxu0
    %4111 = vmatprep.mubr.f32.mxu0 %v1845
    %4112 = vmatmul.mubr.f32.gmra.mxu0 %v1844
    %v4113 = vpop.f32.mrf.mxu0
    %v4114 = vadd.f32 %v3924, %v4113
    %v4115 = vpop.f32.mrf.mxu0
    %4116 = vdwg.mxu0
    %4117 = vmatprep.subr.mxu0 %v2423
    %4118 = vmatpush1.xpose.msra.mxu0 %v2422
    %4119 = vmatprep.subr.mxu0 %v2411
    %4120 = vmatpush1.xpose.msra.mxu0 %v2410
    %4121 = vmatprep.subr.mxu0 %v2399
    %4122 = vmatpush1.xpose.msra.mxu0 %v2398
    %4123 = vmatprep.subr.mxu0 %v2387
    %4124 = vmatpush1.xpose.msra.mxu0 %v2386
    %4125 = vmatprep.subr.mxu0 %v2375
    %4126 = vmatpush1.xpose.msra.mxu0 %v2374
    %4127 = vmatprep.subr.mxu0 %v2363
    %4128 = vmatpush1.xpose.msra.mxu0 %v2362
    %4129 = vmatprep.subr.mxu0 %v2351
    %4130 = vmatpush1.xpose.msra.mxu0 %v2350
    %4131 = vmatprep.subr.mxu0 %v2339
    %4132 = vmatpush1.xpose.msra.mxu0 %v2338
    %4133 = vmatprep.subr.mxu0 %v2327
    %4134 = vmatpush1.xpose.msra.mxu0 %v2326
    %4135 = vmatprep.subr.mxu0 %v2315
    %4136 = vmatpush1.xpose.msra.mxu0 %v2314
    %4137 = vmatprep.subr.mxu0 %v2303
    %4138 = vmatpush1.xpose.msra.mxu0 %v2302
    %4139 = vmatprep.subr.mxu0 %v2291
    %4140 = vmatpush1.xpose.msra.mxu0 %v2290
    %4141 = vmatprep.subr.mxu0 %v2279
    %4142 = vmatpush1.xpose.msra.mxu0 %v2278
    %4143 = vmatprep.subr.mxu0 %v2267
    %4144 = vmatpush1.xpose.msra.mxu0 %v2266
    %4145 = vmatprep.subr.mxu0 %v2255
    %4146 = vmatpush1.xpose.msra.mxu0 %v2254
    %4147 = vmatprep.subr.mxu0 %v2243
    %4148 = vmatpush1.xpose.msra.mxu0 %v2242
    %4149 = vmatprep.subr.mxu0 0.0
    %4150 = vmatpush2.xpose.msra.mxu0 0.0
    %4151 = vmatprep.subr.mxu0 0.0
    %4152 = vmatpush2.xpose.msra.mxu0 0.0
    %4153 = vmatprep.subr.mxu0 0.0
    %4154 = vmatpush2.xpose.msra.mxu0 0.0
    %4155 = vmatprep.subr.mxu0 0.0
    %4156 = vmatpush2.xpose.msra.mxu0 0.0
    %4157 = vmatprep.subr.mxu0 0.0
    %4158 = vmatpush2.xpose.msra.mxu0 0.0
    %4159 = vmatprep.subr.mxu0 0.0
    %4160 = vmatpush2.xpose.msra.mxu0 0.0
    %4161 = vmatprep.subr.mxu0 0.0
    %4162 = vmatpush2.xpose.msra.mxu0 0.0
    %4163 = vmatprep.subr.mxu0 0.0
    %4164 = vmatpush2.xpose.msra.mxu0 0.0
    %4165 = vmatprep.subr.mxu0 0.0
    %4166 = vmatpush2.xpose.msra.mxu0 0.0
    %4167 = vmatprep.subr.mxu0 0.0
    %4168 = vmatpush2.xpose.msra.mxu0 0.0
    %4169 = vmatprep.subr.mxu0 0.0
    %4170 = vmatpush2.xpose.msra.mxu0 0.0
    %4171 = vmatprep.subr.mxu0 0.0
    %4172 = vmatpush2.xpose.msra.mxu0 0.0
    %4173 = vmatprep.subr.mxu0 0.0
    %4174 = vmatpush2.xpose.msra.mxu0 0.0
    %4175 = vmatprep.subr.mxu0 0.0
    %4176 = vmatpush2.xpose.msra.mxu0 0.0
    %4177 = vmatprep.subr.mxu0 0.0
    %4178 = vmatpush2.xpose.msra.mxu0 0.0
    %4179 = vmatprep.subr.mxu0 0.0
    %4180 = vmatpush2.xpose.msra.mxu0 0.0
    %4181 = vmatprep.mubr.f32.mxu0 %v1559
    %4182 = vmatmul.mubr.f32.gmra.mxu0 %v1558
    %v4183 = vpop.f32.mrf.mxu0
    %v4184 = vadd.f32 %v3994, %v4183
    %v4185 = vpop.f32.mrf.mxu0
    %4186 = vmatprep.mubr.f32.mxu0 %v1571
    %4187 = vmatmul.mubr.f32.gmra.mxu0 %v1570
    %v4188 = vpop.f32.mrf.mxu0
    %v4189 = vadd.f32 %v3999, %v4188
    %v4190 = vpop.f32.mrf.mxu0
    %4191 = vmatprep.mubr.f32.mxu0 %v1583
    %4192 = vmatmul.mubr.f32.gmra.mxu0 %v1582
    %v4193 = vpop.f32.mrf.mxu0
    %v4194 = vadd.f32 %v4004, %v4193
    %v4195 = vpop.f32.mrf.mxu0
    %4196 = vmatprep.mubr.f32.mxu0 %v1595
    %4197 = vmatmul.mubr.f32.gmra.mxu0 %v1594
    %v4198 = vpop.f32.mrf.mxu0
    %v4199 = vadd.f32 %v4009, %v4198
    %v4200 = vpop.f32.mrf.mxu0
    %4201 = vmatprep.mubr.f32.mxu0 %v1607
    %4202 = vmatmul.mubr.f32.gmra.mxu0 %v1606
    %v4203 = vpop.f32.mrf.mxu0
    %v4204 = vadd.f32 %v4014, %v4203
    %v4205 = vpop.f32.mrf.mxu0
    %4206 = vmatprep.mubr.f32.mxu0 %v1619
    %4207 = vmatmul.mubr.f32.gmra.mxu0 %v1618
    %v4208 = vpop.f32.mrf.mxu0
    %v4209 = vadd.f32 %v4019, %v4208
    %v4210 = vpop.f32.mrf.mxu0
    %4211 = vmatprep.mubr.f32.mxu0 %v1631
    %4212 = vmatmul.mubr.f32.gmra.mxu0 %v1630
    %v4213 = vpop.f32.mrf.mxu0
    %v4214 = vadd.f32 %v4024, %v4213
    %v4215 = vpop.f32.mrf.mxu0
    %4216 = vmatprep.mubr.f32.mxu0 %v1643
    %4217 = vmatmul.mubr.f32.gmra.mxu0 %v1642
    %v4218 = vpop.f32.mrf.mxu0
    %v4219 = vadd.f32 %v4029, %v4218
    %v4220 = vpop.f32.mrf.mxu0
    %4221 = vmatprep.mubr.f32.mxu0 %v1655
    %4222 = vmatmul.mubr.f32.gmra.mxu0 %v1654
    %v4223 = vpop.f32.mrf.mxu0
    %v4224 = vadd.f32 %v4034, %v4223
    %v4225 = vpop.f32.mrf.mxu0
    %4226 = vmatprep.mubr.f32.mxu0 %v1667
    %4227 = vmatmul.mubr.f32.gmra.mxu0 %v1666
    %v4228 = vpop.f32.mrf.mxu0
    %v4229 = vadd.f32 %v4039, %v4228
    %v4230 = vpop.f32.mrf.mxu0
    %4231 = vmatprep.mubr.f32.mxu0 %v1679
    %4232 = vmatmul.mubr.f32.gmra.mxu0 %v1678
    %v4233 = vpop.f32.mrf.mxu0
    %v4234 = vadd.f32 %v4044, %v4233
    %v4235 = vpop.f32.mrf.mxu0
    %4236 = vmatprep.mubr.f32.mxu0 %v1691
    %4237 = vmatmul.mubr.f32.gmra.mxu0 %v1690
    %v4238 = vpop.f32.mrf.mxu0
    %v4239 = vadd.f32 %v4049, %v4238
    %v4240 = vpop.f32.mrf.mxu0
    %4241 = vmatprep.mubr.f32.mxu0 %v1703
    %4242 = vmatmul.mubr.f32.gmra.mxu0 %v1702
    %v4243 = vpop.f32.mrf.mxu0
    %v4244 = vadd.f32 %v4054, %v4243
    %v4245 = vpop.f32.mrf.mxu0
    %4246 = vmatprep.mubr.f32.mxu0 %v1715
    %4247 = vmatmul.mubr.f32.gmra.mxu0 %v1714
    %v4248 = vpop.f32.mrf.mxu0
    %v4249 = vadd.f32 %v4059, %v4248
    %v4250 = vpop.f32.mrf.mxu0
    %4251 = vmatprep.mubr.f32.mxu0 %v1727
    %4252 = vmatmul.mubr.f32.gmra.mxu0 %v1726
    %v4253 = vpop.f32.mrf.mxu0
    %v4254 = vadd.f32 %v4064, %v4253
    %v4255 = vpop.f32.mrf.mxu0
    %4256 = vmatprep.mubr.f32.mxu0 %v1739
    %4257 = vmatmul.mubr.f32.gmra.mxu0 %v1738
    %v4258 = vpop.f32.mrf.mxu0
    %v4259 = vadd.f32 %v4069, %v4258
    %v4260 = vpop.f32.mrf.mxu0
    %4261 = vmatprep.mubr.f32.mxu0 %v1751
    %4262 = vmatmul.mubr.f32.gmra.mxu0 %v1750
    %v4263 = vpop.f32.mrf.mxu0
    %v4264 = vadd.f32 %v4074, %v4263
    %v4265 = vpop.f32.mrf.mxu0
    %4266 = vmatprep.mubr.f32.mxu0 %v1763
    %4267 = vmatmul.mubr.f32.gmra.mxu0 %v1762
    %v4268 = vpop.f32.mrf.mxu0
    %v4269 = vadd.f32 %v4079, %v4268
    %v4270 = vpop.f32.mrf.mxu0
    %4271 = vmatprep.mubr.f32.mxu0 %v1775
    %4272 = vmatmul.mubr.f32.gmra.mxu0 %v1774
    %v4273 = vpop.f32.mrf.mxu0
    %v4274 = vadd.f32 %v4084, %v4273
    %v4275 = vpop.f32.mrf.mxu0
    %4276 = vmatprep.mubr.f32.mxu0 %v1787
    %4277 = vmatmul.mubr.f32.gmra.mxu0 %v1786
    %v4278 = vpop.f32.mrf.mxu0
    %v4279 = vadd.f32 %v4089, %v4278
    %v4280 = vpop.f32.mrf.mxu0
    %4281 = vmatprep.mubr.f32.mxu0 %v1799
    %4282 = vmatmul.mubr.f32.gmra.mxu0 %v1798
    %v4283 = vpop.f32.mrf.mxu0
    %v4284 = vadd.f32 %v4094, %v4283
    %v4285 = vpop.f32.mrf.mxu0
    %4286 = vmatprep.mubr.f32.mxu0 %v1811
    %4287 = vmatmul.mubr.f32.gmra.mxu0 %v1810
    %v4288 = vpop.f32.mrf.mxu0
    %v4289 = vadd.f32 %v4099, %v4288
    %v4290 = vpop.f32.mrf.mxu0
    %4291 = vmatprep.mubr.f32.mxu0 %v1823
    %4292 = vmatmul.mubr.f32.gmra.mxu0 %v1822
    %v4293 = vpop.f32.mrf.mxu0
    %v4294 = vadd.f32 %v4104, %v4293
    %v4295 = vpop.f32.mrf.mxu0
    %4296 = vmatprep.mubr.f32.mxu0 %v1835
    %4297 = vmatmul.mubr.f32.gmra.mxu0 %v1834
    %v4298 = vpop.f32.mrf.mxu0
    %v4299 = vadd.f32 %v4109, %v4298
    %v4300 = vpop.f32.mrf.mxu0
    %4301 = vmatprep.mubr.f32.mxu0 %v1847
    %4302 = vmatmul.mubr.f32.gmra.mxu0 %v1846
    %v4303 = vpop.f32.mrf.mxu0
    %v4304 = vadd.f32 %v4114, %v4303
    %v4305 = vpop.f32.mrf.mxu0
    %4306 = vdwg.mxu0
    %4307 = vmatprep.subr.mxu0 %v2425
    %4308 = vmatpush1.xpose.msra.mxu0 %v2424
    %4309 = vmatprep.subr.mxu0 %v2413
    %4310 = vmatpush1.xpose.msra.mxu0 %v2412
    %4311 = vmatprep.subr.mxu0 %v2401
    %4312 = vmatpush1.xpose.msra.mxu0 %v2400
    %4313 = vmatprep.subr.mxu0 %v2389
    %4314 = vmatpush1.xpose.msra.mxu0 %v2388
    %4315 = vmatprep.subr.mxu0 %v2377
    %4316 = vmatpush1.xpose.msra.mxu0 %v2376
    %4317 = vmatprep.subr.mxu0 %v2365
    %4318 = vmatpush1.xpose.msra.mxu0 %v2364
    %4319 = vmatprep.subr.mxu0 %v2353
    %4320 = vmatpush1.xpose.msra.mxu0 %v2352
    %4321 = vmatprep.subr.mxu0 %v2341
    %4322 = vmatpush1.xpose.msra.mxu0 %v2340
    %4323 = vmatprep.subr.mxu0 %v2329
    %4324 = vmatpush1.xpose.msra.mxu0 %v2328
    %4325 = vmatprep.subr.mxu0 %v2317
    %4326 = vmatpush1.xpose.msra.mxu0 %v2316
    %4327 = vmatprep.subr.mxu0 %v2305
    %4328 = vmatpush1.xpose.msra.mxu0 %v2304
    %4329 = vmatprep.subr.mxu0 %v2293
    %4330 = vmatpush1.xpose.msra.mxu0 %v2292
    %4331 = vmatprep.subr.mxu0 %v2281
    %4332 = vmatpush1.xpose.msra.mxu0 %v2280
    %4333 = vmatprep.subr.mxu0 %v2269
    %4334 = vmatpush1.xpose.msra.mxu0 %v2268
    %4335 = vmatprep.subr.mxu0 %v2257
    %4336 = vmatpush1.xpose.msra.mxu0 %v2256
    %4337 = vmatprep.subr.mxu0 %v2245
    %4338 = vmatpush1.xpose.msra.mxu0 %v2244
    %4339 = vmatprep.subr.mxu0 0.0
    %4340 = vmatpush2.xpose.msra.mxu0 0.0
    %4341 = vmatprep.subr.mxu0 0.0
    %4342 = vmatpush2.xpose.msra.mxu0 0.0
    %4343 = vmatprep.subr.mxu0 0.0
    %4344 = vmatpush2.xpose.msra.mxu0 0.0
    %4345 = vmatprep.subr.mxu0 0.0
    %4346 = vmatpush2.xpose.msra.mxu0 0.0
    %4347 = vmatprep.subr.mxu0 0.0
    %4348 = vmatpush2.xpose.msra.mxu0 0.0
    %4349 = vmatprep.subr.mxu0 0.0
    %4350 = vmatpush2.xpose.msra.mxu0 0.0
    %4351 = vmatprep.subr.mxu0 0.0
    %4352 = vmatpush2.xpose.msra.mxu0 0.0
    %4353 = vmatprep.subr.mxu0 0.0
    %4354 = vmatpush2.xpose.msra.mxu0 0.0
    %4355 = vmatprep.subr.mxu0 0.0
    %4356 = vmatpush2.xpose.msra.mxu0 0.0
    %4357 = vmatprep.subr.mxu0 0.0
    %4358 = vmatpush2.xpose.msra.mxu0 0.0
    %4359 = vmatprep.subr.mxu0 0.0
    %4360 = vmatpush2.xpose.msra.mxu0 0.0
    %4361 = vmatprep.subr.mxu0 0.0
    %4362 = vmatpush2.xpose.msra.mxu0 0.0
    %4363 = vmatprep.subr.mxu0 0.0
    %4364 = vmatpush2.xpose.msra.mxu0 0.0
    %4365 = vmatprep.subr.mxu0 0.0
    %4366 = vmatpush2.xpose.msra.mxu0 0.0
    %4367 = vmatprep.subr.mxu0 0.0
    %4368 = vmatpush2.xpose.msra.mxu0 0.0
    %4369 = vmatprep.subr.mxu0 0.0
    %4370 = vmatpush2.xpose.msra.mxu0 0.0
    %4371 = vmatprep.mubr.f32.mxu0 %v1561
    %4372 = vmatmul.mubr.f32.gmra.mxu0 %v1560
    %v4373 = vpop.f32.mrf.mxu0
    %v4374 = vadd.f32 %v4184, %v4373
    %v4375 = vpop.f32.mrf.mxu0
    %4376 = vmatprep.mubr.f32.mxu0 %v1573
    %4377 = vmatmul.mubr.f32.gmra.mxu0 %v1572
    %v4378 = vpop.f32.mrf.mxu0
    %v4379 = vadd.f32 %v4189, %v4378
    %v4380 = vpop.f32.mrf.mxu0
    %4381 = vmatprep.mubr.f32.mxu0 %v1585
    %4382 = vmatmul.mubr.f32.gmra.mxu0 %v1584
    %v4383 = vpop.f32.mrf.mxu0
    %v4384 = vadd.f32 %v4194, %v4383
    %v4385 = vpop.f32.mrf.mxu0
    %4386 = vmatprep.mubr.f32.mxu0 %v1597
    %4387 = vmatmul.mubr.f32.gmra.mxu0 %v1596
    %v4388 = vpop.f32.mrf.mxu0
    %v4389 = vadd.f32 %v4199, %v4388
    %v4390 = vpop.f32.mrf.mxu0
    %4391 = vmatprep.mubr.f32.mxu0 %v1609
    %4392 = vmatmul.mubr.f32.gmra.mxu0 %v1608
    %v4393 = vpop.f32.mrf.mxu0
    %v4394 = vadd.f32 %v4204, %v4393
    %v4395 = vpop.f32.mrf.mxu0
    %4396 = vmatprep.mubr.f32.mxu0 %v1621
    %4397 = vmatmul.mubr.f32.gmra.mxu0 %v1620
    %v4398 = vpop.f32.mrf.mxu0
    %v4399 = vadd.f32 %v4209, %v4398
    %v4400 = vpop.f32.mrf.mxu0
    %4401 = vmatprep.mubr.f32.mxu0 %v1633
    %4402 = vmatmul.mubr.f32.gmra.mxu0 %v1632
    %v4403 = vpop.f32.mrf.mxu0
    %v4404 = vadd.f32 %v4214, %v4403
    %v4405 = vpop.f32.mrf.mxu0
    %4406 = vmatprep.mubr.f32.mxu0 %v1645
    %4407 = vmatmul.mubr.f32.gmra.mxu0 %v1644
    %v4408 = vpop.f32.mrf.mxu0
    %v4409 = vadd.f32 %v4219, %v4408
    %v4410 = vpop.f32.mrf.mxu0
    %4411 = vmatprep.mubr.f32.mxu0 %v1657
    %4412 = vmatmul.mubr.f32.gmra.mxu0 %v1656
    %v4413 = vpop.f32.mrf.mxu0
    %v4414 = vadd.f32 %v4224, %v4413
    %v4415 = vpop.f32.mrf.mxu0
    %4416 = vmatprep.mubr.f32.mxu0 %v1669
    %4417 = vmatmul.mubr.f32.gmra.mxu0 %v1668
    %v4418 = vpop.f32.mrf.mxu0
    %v4419 = vadd.f32 %v4229, %v4418
    %v4420 = vpop.f32.mrf.mxu0
    %4421 = vmatprep.mubr.f32.mxu0 %v1681
    %4422 = vmatmul.mubr.f32.gmra.mxu0 %v1680
    %v4423 = vpop.f32.mrf.mxu0
    %v4424 = vadd.f32 %v4234, %v4423
    %v4425 = vpop.f32.mrf.mxu0
    %4426 = vmatprep.mubr.f32.mxu0 %v1693
    %4427 = vmatmul.mubr.f32.gmra.mxu0 %v1692
    %v4428 = vpop.f32.mrf.mxu0
    %v4429 = vadd.f32 %v4239, %v4428
    %v4430 = vpop.f32.mrf.mxu0
    %4431 = vmatprep.mubr.f32.mxu0 %v1705
    %4432 = vmatmul.mubr.f32.gmra.mxu0 %v1704
    %v4433 = vpop.f32.mrf.mxu0
    %v4434 = vadd.f32 %v4244, %v4433
    %v4435 = vpop.f32.mrf.mxu0
    %4436 = vmatprep.mubr.f32.mxu0 %v1717
    %4437 = vmatmul.mubr.f32.gmra.mxu0 %v1716
    %v4438 = vpop.f32.mrf.mxu0
    %v4439 = vadd.f32 %v4249, %v4438
    %v4440 = vpop.f32.mrf.mxu0
    %4441 = vmatprep.mubr.f32.mxu0 %v1729
    %4442 = vmatmul.mubr.f32.gmra.mxu0 %v1728
    %v4443 = vpop.f32.mrf.mxu0
    %v4444 = vadd.f32 %v4254, %v4443
    %v4445 = vpop.f32.mrf.mxu0
    %4446 = vmatprep.mubr.f32.mxu0 %v1741
    %4447 = vmatmul.mubr.f32.gmra.mxu0 %v1740
    %v4448 = vpop.f32.mrf.mxu0
    %v4449 = vadd.f32 %v4259, %v4448
    %v4450 = vpop.f32.mrf.mxu0
    %4451 = vmatprep.mubr.f32.mxu0 %v1753
    %4452 = vmatmul.mubr.f32.gmra.mxu0 %v1752
    %v4453 = vpop.f32.mrf.mxu0
    %v4454 = vadd.f32 %v4264, %v4453
    %v4455 = vpop.f32.mrf.mxu0
    %4456 = vmatprep.mubr.f32.mxu0 %v1765
    %4457 = vmatmul.mubr.f32.gmra.mxu0 %v1764
    %v4458 = vpop.f32.mrf.mxu0
    %v4459 = vadd.f32 %v4269, %v4458
    %v4460 = vpop.f32.mrf.mxu0
    %4461 = vmatprep.mubr.f32.mxu0 %v1777
    %4462 = vmatmul.mubr.f32.gmra.mxu0 %v1776
    %v4463 = vpop.f32.mrf.mxu0
    %v4464 = vadd.f32 %v4274, %v4463
    %v4465 = vpop.f32.mrf.mxu0
    %4466 = vmatprep.mubr.f32.mxu0 %v1789
    %4467 = vmatmul.mubr.f32.gmra.mxu0 %v1788
    %v4468 = vpop.f32.mrf.mxu0
    %v4469 = vadd.f32 %v4279, %v4468
    %v4470 = vpop.f32.mrf.mxu0
    %4471 = vmatprep.mubr.f32.mxu0 %v1801
    %4472 = vmatmul.mubr.f32.gmra.mxu0 %v1800
    %v4473 = vpop.f32.mrf.mxu0
    %v4474 = vadd.f32 %v4284, %v4473
    %v4475 = vpop.f32.mrf.mxu0
    %4476 = vmatprep.mubr.f32.mxu0 %v1813
    %4477 = vmatmul.mubr.f32.gmra.mxu0 %v1812
    %v4478 = vpop.f32.mrf.mxu0
    %v4479 = vadd.f32 %v4289, %v4478
    %v4480 = vpop.f32.mrf.mxu0
    %4481 = vmatprep.mubr.f32.mxu0 %v1825
    %4482 = vmatmul.mubr.f32.gmra.mxu0 %v1824
    %v4483 = vpop.f32.mrf.mxu0
    %v4484 = vadd.f32 %v4294, %v4483
    %v4485 = vpop.f32.mrf.mxu0
    %4486 = vmatprep.mubr.f32.mxu0 %v1837
    %4487 = vmatmul.mubr.f32.gmra.mxu0 %v1836
    %v4488 = vpop.f32.mrf.mxu0
    %v4489 = vadd.f32 %v4299, %v4488
    %v4490 = vpop.f32.mrf.mxu0
    %4491 = vmatprep.mubr.f32.mxu0 %v1849
    %4492 = vmatmul.mubr.f32.gmra.mxu0 %v1848
    %v4493 = vpop.f32.mrf.mxu0
    %v4494 = vadd.f32 %v4304, %v4493
    %v4495 = vpop.f32.mrf.mxu0
    %4496 = vdwg.mxu0
    %4497 = vmatprep.subr.mxu0 %v2427
    %4498 = vmatpush1.xpose.msra.mxu0 %v2426
    %4499 = vmatprep.subr.mxu0 %v2415
    %4500 = vmatpush1.xpose.msra.mxu0 %v2414
    %4501 = vmatprep.subr.mxu0 %v2403
    %4502 = vmatpush1.xpose.msra.mxu0 %v2402
    %4503 = vmatprep.subr.mxu0 %v2391
    %4504 = vmatpush1.xpose.msra.mxu0 %v2390
    %4505 = vmatprep.subr.mxu0 %v2379
    %4506 = vmatpush1.xpose.msra.mxu0 %v2378
    %4507 = vmatprep.subr.mxu0 %v2367
    %4508 = vmatpush1.xpose.msra.mxu0 %v2366
    %4509 = vmatprep.subr.mxu0 %v2355
    %4510 = vmatpush1.xpose.msra.mxu0 %v2354
    %4511 = vmatprep.subr.mxu0 %v2343
    %4512 = vmatpush1.xpose.msra.mxu0 %v2342
    %4513 = vmatprep.subr.mxu0 %v2331
    %4514 = vmatpush1.xpose.msra.mxu0 %v2330
    %4515 = vmatprep.subr.mxu0 %v2319
    %4516 = vmatpush1.xpose.msra.mxu0 %v2318
    %4517 = vmatprep.subr.mxu0 %v2307
    %4518 = vmatpush1.xpose.msra.mxu0 %v2306
    %4519 = vmatprep.subr.mxu0 %v2295
    %4520 = vmatpush1.xpose.msra.mxu0 %v2294
    %4521 = vmatprep.subr.mxu0 %v2283
    %4522 = vmatpush1.xpose.msra.mxu0 %v2282
    %4523 = vmatprep.subr.mxu0 %v2271
    %4524 = vmatpush1.xpose.msra.mxu0 %v2270
    %4525 = vmatprep.subr.mxu0 %v2259
    %4526 = vmatpush1.xpose.msra.mxu0 %v2258
    %4527 = vmatprep.subr.mxu0 %v2247
    %4528 = vmatpush1.xpose.msra.mxu0 %v2246
    %4529 = vmatprep.subr.mxu0 0.0
    %4530 = vmatpush2.xpose.msra.mxu0 0.0
    %4531 = vmatprep.subr.mxu0 0.0
    %4532 = vmatpush2.xpose.msra.mxu0 0.0
    %4533 = vmatprep.subr.mxu0 0.0
    %4534 = vmatpush2.xpose.msra.mxu0 0.0
    %4535 = vmatprep.subr.mxu0 0.0
    %4536 = vmatpush2.xpose.msra.mxu0 0.0
    %4537 = vmatprep.subr.mxu0 0.0
    %4538 = vmatpush2.xpose.msra.mxu0 0.0
    %4539 = vmatprep.subr.mxu0 0.0
    %4540 = vmatpush2.xpose.msra.mxu0 0.0
    %4541 = vmatprep.subr.mxu0 0.0
    %4542 = vmatpush2.xpose.msra.mxu0 0.0
    %4543 = vmatprep.subr.mxu0 0.0
    %4544 = vmatpush2.xpose.msra.mxu0 0.0
    %4545 = vmatprep.subr.mxu0 0.0
    %4546 = vmatpush2.xpose.msra.mxu0 0.0
    %4547 = vmatprep.subr.mxu0 0.0
    %4548 = vmatpush2.xpose.msra.mxu0 0.0
    %4549 = vmatprep.subr.mxu0 0.0
    %4550 = vmatpush2.xpose.msra.mxu0 0.0
    %4551 = vmatprep.subr.mxu0 0.0
    %4552 = vmatpush2.xpose.msra.mxu0 0.0
    %4553 = vmatprep.subr.mxu0 0.0
    %4554 = vmatpush2.xpose.msra.mxu0 0.0
    %4555 = vmatprep.subr.mxu0 0.0
    %4556 = vmatpush2.xpose.msra.mxu0 0.0
    %4557 = vmatprep.subr.mxu0 0.0
    %4558 = vmatpush2.xpose.msra.mxu0 0.0
    %4559 = vmatprep.subr.mxu0 0.0
    %4560 = vmatpush2.xpose.msra.mxu0 0.0
    %4561 = vmatprep.mubr.f32.mxu0 %v1563
    %4562 = vmatmul.mubr.f32.gmra.mxu0 %v1562
    %v4563 = vpop.f32.mrf.mxu0
    %v4564 = vadd.f32 %v4374, %v4563
    %v4565 = vpop.f32.mrf.mxu0
    %4566 = vmatprep.mubr.f32.mxu0 %v1575
    %4567 = vmatmul.mubr.f32.gmra.mxu0 %v1574
    %v4568 = vpop.f32.mrf.mxu0
    %v4569 = vadd.f32 %v4379, %v4568
    %v4570 = vpop.f32.mrf.mxu0
    %4571 = vmatprep.mubr.f32.mxu0 %v1587
    %4572 = vmatmul.mubr.f32.gmra.mxu0 %v1586
    %v4573 = vpop.f32.mrf.mxu0
    %v4574 = vadd.f32 %v4384, %v4573
    %v4575 = vpop.f32.mrf.mxu0
    %4576 = vmatprep.mubr.f32.mxu0 %v1599
    %4577 = vmatmul.mubr.f32.gmra.mxu0 %v1598
    %v4578 = vpop.f32.mrf.mxu0
    %v4579 = vadd.f32 %v4389, %v4578
    %v4580 = vpop.f32.mrf.mxu0
    %4581 = vmatprep.mubr.f32.mxu0 %v1611
    %4582 = vmatmul.mubr.f32.gmra.mxu0 %v1610
    %v4583 = vpop.f32.mrf.mxu0
    %v4584 = vadd.f32 %v4394, %v4583
    %v4585 = vpop.f32.mrf.mxu0
    %4586 = vmatprep.mubr.f32.mxu0 %v1623
    %4587 = vmatmul.mubr.f32.gmra.mxu0 %v1622
    %v4588 = vpop.f32.mrf.mxu0
    %v4589 = vadd.f32 %v4399, %v4588
    %v4590 = vpop.f32.mrf.mxu0
    %4591 = vmatprep.mubr.f32.mxu0 %v1635
    %4592 = vmatmul.mubr.f32.gmra.mxu0 %v1634
    %v4593 = vpop.f32.mrf.mxu0
    %v4594 = vadd.f32 %v4404, %v4593
    %v4595 = vpop.f32.mrf.mxu0
    %4596 = vmatprep.mubr.f32.mxu0 %v1647
    %4597 = vmatmul.mubr.f32.gmra.mxu0 %v1646
    %v4598 = vpop.f32.mrf.mxu0
    %v4599 = vadd.f32 %v4409, %v4598
    %v4600 = vpop.f32.mrf.mxu0
    %4601 = vmatprep.mubr.f32.mxu0 %v1659
    %4602 = vmatmul.mubr.f32.gmra.mxu0 %v1658
    %v4603 = vpop.f32.mrf.mxu0
    %v4604 = vadd.f32 %v4414, %v4603
    %v4605 = vpop.f32.mrf.mxu0
    %4606 = vmatprep.mubr.f32.mxu0 %v1671
    %4607 = vmatmul.mubr.f32.gmra.mxu0 %v1670
    %v4608 = vpop.f32.mrf.mxu0
    %v4609 = vadd.f32 %v4419, %v4608
    %v4610 = vpop.f32.mrf.mxu0
    %4611 = vmatprep.mubr.f32.mxu0 %v1683
    %4612 = vmatmul.mubr.f32.gmra.mxu0 %v1682
    %v4613 = vpop.f32.mrf.mxu0
    %v4614 = vadd.f32 %v4424, %v4613
    %v4615 = vpop.f32.mrf.mxu0
    %4616 = vmatprep.mubr.f32.mxu0 %v1695
    %4617 = vmatmul.mubr.f32.gmra.mxu0 %v1694
    %v4618 = vpop.f32.mrf.mxu0
    %v4619 = vadd.f32 %v4429, %v4618
    %v4620 = vpop.f32.mrf.mxu0
    %4621 = vmatprep.mubr.f32.mxu0 %v1707
    %4622 = vmatmul.mubr.f32.gmra.mxu0 %v1706
    %v4623 = vpop.f32.mrf.mxu0
    %v4624 = vadd.f32 %v4434, %v4623
    %v4625 = vpop.f32.mrf.mxu0
    %4626 = vmatprep.mubr.f32.mxu0 %v1719
    %4627 = vmatmul.mubr.f32.gmra.mxu0 %v1718
    %v4628 = vpop.f32.mrf.mxu0
    %v4629 = vadd.f32 %v4439, %v4628
    %v4630 = vpop.f32.mrf.mxu0
    %4631 = vmatprep.mubr.f32.mxu0 %v1731
    %4632 = vmatmul.mubr.f32.gmra.mxu0 %v1730
    %v4633 = vpop.f32.mrf.mxu0
    %v4634 = vadd.f32 %v4444, %v4633
    %v4635 = vpop.f32.mrf.mxu0
    %4636 = vmatprep.mubr.f32.mxu0 %v1743
    %4637 = vmatmul.mubr.f32.gmra.mxu0 %v1742
    %v4638 = vpop.f32.mrf.mxu0
    %v4639 = vadd.f32 %v4449, %v4638
    %v4640 = vpop.f32.mrf.mxu0
    %4641 = vmatprep.mubr.f32.mxu0 %v1755
    %4642 = vmatmul.mubr.f32.gmra.mxu0 %v1754
    %v4643 = vpop.f32.mrf.mxu0
    %v4644 = vadd.f32 %v4454, %v4643
    %v4645 = vpop.f32.mrf.mxu0
    %4646 = vmatprep.mubr.f32.mxu0 %v1767
    %4647 = vmatmul.mubr.f32.gmra.mxu0 %v1766
    %v4648 = vpop.f32.mrf.mxu0
    %v4649 = vadd.f32 %v4459, %v4648
    %v4650 = vpop.f32.mrf.mxu0
    %4651 = vmatprep.mubr.f32.mxu0 %v1779
    %4652 = vmatmul.mubr.f32.gmra.mxu0 %v1778
    %v4653 = vpop.f32.mrf.mxu0
    %v4654 = vadd.f32 %v4464, %v4653
    %v4655 = vpop.f32.mrf.mxu0
    %4656 = vmatprep.mubr.f32.mxu0 %v1791
    %4657 = vmatmul.mubr.f32.gmra.mxu0 %v1790
    %v4658 = vpop.f32.mrf.mxu0
    %v4659 = vadd.f32 %v4469, %v4658
    %v4660 = vpop.f32.mrf.mxu0
    %4661 = vmatprep.mubr.f32.mxu0 %v1803
    %4662 = vmatmul.mubr.f32.gmra.mxu0 %v1802
    %v4663 = vpop.f32.mrf.mxu0
    %v4664 = vadd.f32 %v4474, %v4663
    %v4665 = vpop.f32.mrf.mxu0
    %4666 = vmatprep.mubr.f32.mxu0 %v1815
    %4667 = vmatmul.mubr.f32.gmra.mxu0 %v1814
    %v4668 = vpop.f32.mrf.mxu0
    %v4669 = vadd.f32 %v4479, %v4668
    %v4670 = vpop.f32.mrf.mxu0
    %4671 = vmatprep.mubr.f32.mxu0 %v1827
    %4672 = vmatmul.mubr.f32.gmra.mxu0 %v1826
    %v4673 = vpop.f32.mrf.mxu0
    %v4674 = vadd.f32 %v4484, %v4673
    %v4675 = vpop.f32.mrf.mxu0
    %4676 = vmatprep.mubr.f32.mxu0 %v1839
    %4677 = vmatmul.mubr.f32.gmra.mxu0 %v1838
    %v4678 = vpop.f32.mrf.mxu0
    %v4679 = vadd.f32 %v4489, %v4678
    %v4680 = vpop.f32.mrf.mxu0
    %4681 = vmatprep.mubr.f32.mxu0 %v1851
    %4682 = vmatmul.mubr.f32.gmra.mxu0 %v1850
    %v4683 = vpop.f32.mrf.mxu0
    %v4684 = vadd.f32 %v4494, %v4683
    %v4685 = vpop.f32.mrf.mxu0
    %4686 = vdwg.mxu0
    %4687 = vmatprep.subr.mxu0 %v2429
    %4688 = vmatpush1.xpose.msra.mxu0 %v2428
    %4689 = vmatprep.subr.mxu0 %v2417
    %4690 = vmatpush1.xpose.msra.mxu0 %v2416
    %4691 = vmatprep.subr.mxu0 %v2405
    %4692 = vmatpush1.xpose.msra.mxu0 %v2404
    %4693 = vmatprep.subr.mxu0 %v2393
    %4694 = vmatpush1.xpose.msra.mxu0 %v2392
    %4695 = vmatprep.subr.mxu0 %v2381
    %4696 = vmatpush1.xpose.msra.mxu0 %v2380
    %4697 = vmatprep.subr.mxu0 %v2369
    %4698 = vmatpush1.xpose.msra.mxu0 %v2368
    %4699 = vmatprep.subr.mxu0 %v2357
    %4700 = vmatpush1.xpose.msra.mxu0 %v2356
    %4701 = vmatprep.subr.mxu0 %v2345
    %4702 = vmatpush1.xpose.msra.mxu0 %v2344
    %4703 = vmatprep.subr.mxu0 %v2333
    %4704 = vmatpush1.xpose.msra.mxu0 %v2332
    %4705 = vmatprep.subr.mxu0 %v2321
    %4706 = vmatpush1.xpose.msra.mxu0 %v2320
    %4707 = vmatprep.subr.mxu0 %v2309
    %4708 = vmatpush1.xpose.msra.mxu0 %v2308
    %4709 = vmatprep.subr.mxu0 %v2297
    %4710 = vmatpush1.xpose.msra.mxu0 %v2296
    %4711 = vmatprep.subr.mxu0 %v2285
    %4712 = vmatpush1.xpose.msra.mxu0 %v2284
    %4713 = vmatprep.subr.mxu0 %v2273
    %4714 = vmatpush1.xpose.msra.mxu0 %v2272
    %4715 = vmatprep.subr.mxu0 %v2261
    %4716 = vmatpush1.xpose.msra.mxu0 %v2260
    %4717 = vmatprep.subr.mxu0 %v2249
    %4718 = vmatpush1.xpose.msra.mxu0 %v2248
    %4719 = vmatprep.subr.mxu0 0.0
    %4720 = vmatpush2.xpose.msra.mxu0 0.0
    %4721 = vmatprep.subr.mxu0 0.0
    %4722 = vmatpush2.xpose.msra.mxu0 0.0
    %4723 = vmatprep.subr.mxu0 0.0
    %4724 = vmatpush2.xpose.msra.mxu0 0.0
    %4725 = vmatprep.subr.mxu0 0.0
    %4726 = vmatpush2.xpose.msra.mxu0 0.0
    %4727 = vmatprep.subr.mxu0 0.0
    %4728 = vmatpush2.xpose.msra.mxu0 0.0
    %4729 = vmatprep.subr.mxu0 0.0
    %4730 = vmatpush2.xpose.msra.mxu0 0.0
    %4731 = vmatprep.subr.mxu0 0.0
    %4732 = vmatpush2.xpose.msra.mxu0 0.0
    %4733 = vmatprep.subr.mxu0 0.0
    %4734 = vmatpush2.xpose.msra.mxu0 0.0
    %4735 = vmatprep.subr.mxu0 0.0
    %4736 = vmatpush2.xpose.msra.mxu0 0.0
    %4737 = vmatprep.subr.mxu0 0.0
    %4738 = vmatpush2.xpose.msra.mxu0 0.0
    %4739 = vmatprep.subr.mxu0 0.0
    %4740 = vmatpush2.xpose.msra.mxu0 0.0
    %4741 = vmatprep.subr.mxu0 0.0
    %4742 = vmatpush2.xpose.msra.mxu0 0.0
    %4743 = vmatprep.subr.mxu0 0.0
    %4744 = vmatpush2.xpose.msra.mxu0 0.0
    %4745 = vmatprep.subr.mxu0 0.0
    %4746 = vmatpush2.xpose.msra.mxu0 0.0
    %4747 = vmatprep.subr.mxu0 0.0
    %4748 = vmatpush2.xpose.msra.mxu0 0.0
    %4749 = vmatprep.subr.mxu0 0.0
    %4750 = vmatpush2.xpose.msra.mxu0 0.0
    %4751 = vmatprep.mubr.f32.mxu0 %v1565
    %4752 = vmatmul.mubr.f32.gmra.mxu0 %v1564
    %v4753 = vpop.f32.mrf.mxu0
    %v4754 = vadd.f32 %v4564, %v4753
    %v4755 = vpop.f32.mrf.mxu0
    %4756 = vmatprep.mubr.f32.mxu0 %v1577
    %4757 = vmatmul.mubr.f32.gmra.mxu0 %v1576
    %v4758 = vpop.f32.mrf.mxu0
    %v4759 = vadd.f32 %v4569, %v4758
    %v4760 = vpop.f32.mrf.mxu0
    %4761 = vmatprep.mubr.f32.mxu0 %v1589
    %4762 = vmatmul.mubr.f32.gmra.mxu0 %v1588
    %v4763 = vpop.f32.mrf.mxu0
    %v4764 = vadd.f32 %v4574, %v4763
    %v4765 = vpop.f32.mrf.mxu0
    %4766 = vmatprep.mubr.f32.mxu0 %v1601
    %4767 = vmatmul.mubr.f32.gmra.mxu0 %v1600
    %v4768 = vpop.f32.mrf.mxu0
    %v4769 = vadd.f32 %v4579, %v4768
    %v4770 = vpop.f32.mrf.mxu0
    %4771 = vmatprep.mubr.f32.mxu0 %v1613
    %4772 = vmatmul.mubr.f32.gmra.mxu0 %v1612
    %v4773 = vpop.f32.mrf.mxu0
    %v4774 = vadd.f32 %v4584, %v4773
    %v4775 = vpop.f32.mrf.mxu0
    %4776 = vmatprep.mubr.f32.mxu0 %v1625
    %4777 = vmatmul.mubr.f32.gmra.mxu0 %v1624
    %v4778 = vpop.f32.mrf.mxu0
    %v4779 = vadd.f32 %v4589, %v4778
    %v4780 = vpop.f32.mrf.mxu0
    %4781 = vmatprep.mubr.f32.mxu0 %v1637
    %4782 = vmatmul.mubr.f32.gmra.mxu0 %v1636
    %v4783 = vpop.f32.mrf.mxu0
    %v4784 = vadd.f32 %v4594, %v4783
    %v4785 = vpop.f32.mrf.mxu0
    %4786 = vmatprep.mubr.f32.mxu0 %v1649
    %4787 = vmatmul.mubr.f32.gmra.mxu0 %v1648
    %v4788 = vpop.f32.mrf.mxu0
    %v4789 = vadd.f32 %v4599, %v4788
    %v4790 = vpop.f32.mrf.mxu0
    %4791 = vmatprep.mubr.f32.mxu0 %v1661
    %4792 = vmatmul.mubr.f32.gmra.mxu0 %v1660
    %v4793 = vpop.f32.mrf.mxu0
    %v4794 = vadd.f32 %v4604, %v4793
    %v4795 = vpop.f32.mrf.mxu0
    %4796 = vmatprep.mubr.f32.mxu0 %v1673
    %4797 = vmatmul.mubr.f32.gmra.mxu0 %v1672
    %v4798 = vpop.f32.mrf.mxu0
    %v4799 = vadd.f32 %v4609, %v4798
    %v4800 = vpop.f32.mrf.mxu0
    %4801 = vmatprep.mubr.f32.mxu0 %v1685
    %4802 = vmatmul.mubr.f32.gmra.mxu0 %v1684
    %v4803 = vpop.f32.mrf.mxu0
    %v4804 = vadd.f32 %v4614, %v4803
    %v4805 = vpop.f32.mrf.mxu0
    %4806 = vmatprep.mubr.f32.mxu0 %v1697
    %4807 = vmatmul.mubr.f32.gmra.mxu0 %v1696
    %v4808 = vpop.f32.mrf.mxu0
    %v4809 = vadd.f32 %v4619, %v4808
    %v4810 = vpop.f32.mrf.mxu0
    %4811 = vmatprep.mubr.f32.mxu0 %v1709
    %4812 = vmatmul.mubr.f32.gmra.mxu0 %v1708
    %v4813 = vpop.f32.mrf.mxu0
    %v4814 = vadd.f32 %v4624, %v4813
    %v4815 = vpop.f32.mrf.mxu0
    %4816 = vmatprep.mubr.f32.mxu0 %v1721
    %4817 = vmatmul.mubr.f32.gmra.mxu0 %v1720
    %v4818 = vpop.f32.mrf.mxu0
    %v4819 = vadd.f32 %v4629, %v4818
    %v4820 = vpop.f32.mrf.mxu0
    %4821 = vmatprep.mubr.f32.mxu0 %v1733
    %4822 = vmatmul.mubr.f32.gmra.mxu0 %v1732
    %v4823 = vpop.f32.mrf.mxu0
    %v4824 = vadd.f32 %v4634, %v4823
    %v4825 = vpop.f32.mrf.mxu0
    %4826 = vmatprep.mubr.f32.mxu0 %v1745
    %4827 = vmatmul.mubr.f32.gmra.mxu0 %v1744
    %v4828 = vpop.f32.mrf.mxu0
    %v4829 = vadd.f32 %v4639, %v4828
    %v4830 = vpop.f32.mrf.mxu0
    %4831 = vmatprep.mubr.f32.mxu0 %v1757
    %4832 = vmatmul.mubr.f32.gmra.mxu0 %v1756
    %v4833 = vpop.f32.mrf.mxu0
    %v4834 = vadd.f32 %v4644, %v4833
    %v4835 = vpop.f32.mrf.mxu0
    %4836 = vmatprep.mubr.f32.mxu0 %v1769
    %4837 = vmatmul.mubr.f32.gmra.mxu0 %v1768
    %v4838 = vpop.f32.mrf.mxu0
    %v4839 = vadd.f32 %v4649, %v4838
    %v4840 = vpop.f32.mrf.mxu0
    %4841 = vmatprep.mubr.f32.mxu0 %v1781
    %4842 = vmatmul.mubr.f32.gmra.mxu0 %v1780
    %v4843 = vpop.f32.mrf.mxu0
    %v4844 = vadd.f32 %v4654, %v4843
    %v4845 = vpop.f32.mrf.mxu0
    %4846 = vmatprep.mubr.f32.mxu0 %v1793
    %4847 = vmatmul.mubr.f32.gmra.mxu0 %v1792
    %v4848 = vpop.f32.mrf.mxu0
    %v4849 = vadd.f32 %v4659, %v4848
    %v4850 = vpop.f32.mrf.mxu0
    %4851 = vmatprep.mubr.f32.mxu0 %v1805
    %4852 = vmatmul.mubr.f32.gmra.mxu0 %v1804
    %v4853 = vpop.f32.mrf.mxu0
    %v4854 = vadd.f32 %v4664, %v4853
    %v4855 = vpop.f32.mrf.mxu0
    %4856 = vmatprep.mubr.f32.mxu0 %v1817
    %4857 = vmatmul.mubr.f32.gmra.mxu0 %v1816
    %v4858 = vpop.f32.mrf.mxu0
    %v4859 = vadd.f32 %v4669, %v4858
    %v4860 = vpop.f32.mrf.mxu0
    %4861 = vmatprep.mubr.f32.mxu0 %v1829
    %4862 = vmatmul.mubr.f32.gmra.mxu0 %v1828
    %v4863 = vpop.f32.mrf.mxu0
    %v4864 = vadd.f32 %v4674, %v4863
    %v4865 = vpop.f32.mrf.mxu0
    %4866 = vmatprep.mubr.f32.mxu0 %v1841
    %4867 = vmatmul.mubr.f32.gmra.mxu0 %v1840
    %v4868 = vpop.f32.mrf.mxu0
    %v4869 = vadd.f32 %v4679, %v4868
    %v4870 = vpop.f32.mrf.mxu0
    %4871 = vmatprep.mubr.f32.mxu0 %v1853
    %4872 = vmatmul.mubr.f32.gmra.mxu0 %v1852
    %v4873 = vpop.f32.mrf.mxu0
    %v4874 = vadd.f32 %v4684, %v4873
    %v4875 = vpop.f32.mrf.mxu0
    %4876 = vdwg.mxu0
    %4877 = vst [vmem:[#allocation8] sm:$0xff] %v3589
    %4878 = vst [vmem:[#allocation8 + $0x8] sm:$0xff] %v3591
    %4879 = vst [vmem:[#allocation8 + $0x10] sm:$0xff] %v4754
    %4880 = vst [vmem:[#allocation8 + $0x18] sm:$0xff] %v3595
    %4881 = vst [vmem:[#allocation8 + $0x20] sm:$0xff] %v3597
    %4882 = vst [vmem:[#allocation8 + $0x28] sm:$0xff] %v4759
    %4883 = vst [vmem:[#allocation8 + $0x30] sm:$0xff] %v3601
    %4884 = vst [vmem:[#allocation8 + $0x38] sm:$0xff] %v3603
    %4885 = vst [vmem:[#allocation8 + $0x40] sm:$0xff] %v4764
    %4886 = vst [vmem:[#allocation8 + $0x48] sm:$0xff] %v3607
    %4887 = vst [vmem:[#allocation8 + $0x50] sm:$0xff] %v3609
    %4888 = vst [vmem:[#allocation8 + $0x58] sm:$0xff] %v4769
    %4889 = vst [vmem:[#allocation8 + $0x60] sm:$0xff] %v3613
    %4890 = vst [vmem:[#allocation8 + $0x68] sm:$0xff] %v3615
    %4891 = vst [vmem:[#allocation8 + $0x70] sm:$0xff] %v4774
    %4892 = vst [vmem:[#allocation8 + $0x78] sm:$0xff] %v3619
    %4893 = vst [vmem:[#allocation8 + $0x80] sm:$0xff] %v3621
    %4894 = vst [vmem:[#allocation8 + $0x88] sm:$0xff] %v4779
    %4895 = vst [vmem:[#allocation8 + $0x90] sm:$0xff] %v3625
    %4896 = vst [vmem:[#allocation8 + $0x98] sm:$0xff] %v3627
    %4897 = vst [vmem:[#allocation8 + $0xa0] sm:$0xff] %v4784
    %4898 = vst [vmem:[#allocation8 + $0xa8] sm:$0xff] %v3631
    %4899 = vst [vmem:[#allocation8 + $0xb0] sm:$0xff] %v3633
    %4900 = vst [vmem:[#allocation8 + $0xb8] sm:$0xff] %v4789
    %4901 = vst [vmem:[#allocation8 + $0xc0] sm:$0xff] %v3637
    %4902 = vst [vmem:[#allocation8 + $0xc8] sm:$0xff] %v3639
    %4903 = vst [vmem:[#allocation8 + $0xd0] sm:$0xff] %v4794
    %4904 = vst [vmem:[#allocation8 + $0xd8] sm:$0xff] %v3643
    %4905 = vst [vmem:[#allocation8 + $0xe0] sm:$0xff] %v3645
    %4906 = vst [vmem:[#allocation8 + $0xe8] sm:$0xff] %v4799
    %4907 = vst [vmem:[#allocation8 + $0xf0] sm:$0xff] %v3649
    %4908 = vst [vmem:[#allocation8 + $0xf8] sm:$0xff] %v3651
    %4909 = vst [vmem:[#allocation8 + $0x100] sm:$0xff] %v4804
    %4910 = vst [vmem:[#allocation8 + $0x108] sm:$0xff] %v3655
    %4911 = vst [vmem:[#allocation8 + $0x110] sm:$0xff] %v3657
    %4912 = vst [vmem:[#allocation8 + $0x118] sm:$0xff] %v4809
    %4913 = vst [vmem:[#allocation8 + $0x120] sm:$0xff] %v3661
    %4914 = vst [vmem:[#allocation8 + $0x128] sm:$0xff] %v3663
    %4915 = vst [vmem:[#allocation8 + $0x130] sm:$0xff] %v4814
    %4916 = vst [vmem:[#allocation8 + $0x138] sm:$0xff] %v3667
    %4917 = vst [vmem:[#allocation8 + $0x140] sm:$0xff] %v3669
    %4918 = vst [vmem:[#allocation8 + $0x148] sm:$0xff] %v4819
    %4919 = vst [vmem:[#allocation8 + $0x150] sm:$0xff] %v3673
    %4920 = vst [vmem:[#allocation8 + $0x158] sm:$0xff] %v3675
    %4921 = vst [vmem:[#allocation8 + $0x160] sm:$0xff] %v4824
    %4922 = vst [vmem:[#allocation8 + $0x168] sm:$0xff] %v3679
    %4923 = vst [vmem:[#allocation8 + $0x170] sm:$0xff] %v3681
    %4924 = vst [vmem:[#allocation8 + $0x178] sm:$0xff] %v4829
    %4925 = vst [vmem:[#allocation8 + $0x180] sm:$0xff] %v3685
    %4926 = vst [vmem:[#allocation8 + $0x188] sm:$0xff] %v3687
    %4927 = vst [vmem:[#allocation8 + $0x190] sm:$0xff] %v4834
    %4928 = vst [vmem:[#allocation8 + $0x198] sm:$0xff] %v3691
    %4929 = vst [vmem:[#allocation8 + $0x1a0] sm:$0xff] %v3693
    %4930 = vst [vmem:[#allocation8 + $0x1a8] sm:$0xff] %v4839
    %4931 = vst [vmem:[#allocation8 + $0x1b0] sm:$0xff] %v3697
    %4932 = vst [vmem:[#allocation8 + $0x1b8] sm:$0xff] %v3699
    %4933 = vst [vmem:[#allocation8 + $0x1c0] sm:$0xff] %v4844
    %4934 = vst [vmem:[#allocation8 + $0x1c8] sm:$0xff] %v3703
    %4935 = vst [vmem:[#allocation8 + $0x1d0] sm:$0xff] %v3705
    %4936 = vst [vmem:[#allocation8 + $0x1d8] sm:$0xff] %v4849
    %4937 = vst [vmem:[#allocation8 + $0x1e0] sm:$0xff] %v3709
    %4938 = vst [vmem:[#allocation8 + $0x1e8] sm:$0xff] %v3711
    %4939 = vst [vmem:[#allocation8 + $0x1f0] sm:$0xff] %v4854
    %4940 = vst [vmem:[#allocation8 + $0x1f8] sm:$0xff] %v3715
    %4941 = vst [vmem:[#allocation8 + $0x200] sm:$0xff] %v3717
    %4942 = vst [vmem:[#allocation8 + $0x208] sm:$0xff] %v4859
    %4943 = vst [vmem:[#allocation8 + $0x210] sm:$0xff] %v3721
    %4944 = vst [vmem:[#allocation8 + $0x218] sm:$0xff] %v3723
    %4945 = vst [vmem:[#allocation8 + $0x220] sm:$0xff] %v4864
    %4946 = vst [vmem:[#allocation8 + $0x228] sm:$0xff] %v3727
    %4947 = vst [vmem:[#allocation8 + $0x230] sm:$0xff] %v3729
    %4948 = vst [vmem:[#allocation8 + $0x238] sm:$0xff] %v4869
    %4949 = vst [vmem:[#allocation8 + $0x240] sm:$0xf] %v3733
    %4950 = vst [vmem:[#allocation8 + $0x248] sm:$0xf] %v3735
    %4951 = vst [vmem:[#allocation8 + $0x250] sm:$0xf] %v4874
    // Predicated region
    $region26: #{tpu_custom_call.1} parent=1 // pred_check
      _
    $region27: #{tpu_custom_call.1} parent=1 // pred_check_branch
      %4953 = sbr.rel (0) target = $region29
    $region28: #{tpu_custom_call.1} parent=1 // pred_region
      %s4955 = ssub.s32 9600, 9600
      %4956 = vsyncadd [#allocation4], %s4955
      %s4957 = sshll.u32 [#allocation8], 4
      %s4958 = int_to_ptr.vmem [resolvable:$true] %s4957
      %4963 = dma.vmem_to_hbm [thread:$0]  %s4958, 9600, %s3, [#allocation4], 384, 384, 24
    $region29: #{tpu_custom_call.1} parent=1 // pred_fallthru
      _
    // Predicated region
    $region30: #{tpu_custom_call.1} parent=1 // pred_check
      _
    $region31: #{tpu_custom_call.1} parent=1 // pred_check_branch
      %4965 = sbr.rel (0) target = $region33
    $region32: #{tpu_custom_call.1} parent=1 // pred_region
      %4966 = dma.done [#allocation4], 9600
    $region33: #{tpu_custom_call.1} parent=1 // pred_fallthru
      _
    %4967 = vsyncpa [#allocation3], 1
    %4968 = vsyncpa [#allocation6], 1
    %4969 = vsyncpa [#allocation4], 1

</llo_original>
